<compile_context>
chip_gen: v7x
topology: tpu7x:2x2x1
jax: 0.10.0
libtpu: 0.0.40
codegen_flags: <defaults>
</compile_context>

<pallas_src>
import functools
import math

import jax
import jax.numpy as jnp
from jax.experimental import pallas as pl
from jax.experimental.pallas import tpu as pltpu


def _cross_attn_kernel(tgt_ref, qpos_ref, mem_ref, kpos_ref,
                       wq_ref, wk_ref, wv_ref, wo_ref,
                       bq_ref, bk_ref, bv_ref, bo_ref,
                       g_ref, beta_ref,
                       out_ref, *, nhead, b_size, lq, lk):
    """Single invocation (no grid): fused projections + MHA + residual + LayerNorm.

    Activations arrive pre-flattened to (L*B, D) so every projection is a
    lane-dense (M, D) @ (D, D) matmul.  The only layout ops are the tiny
    head split/merge reshapes around the batched attention einsums.
    """
    f32 = jnp.float32
    dt = tgt_ref.dtype
    D = tgt_ref.shape[-1]
    H = nhead
    hd = D // H
    B = b_size

    tgt = tgt_ref[...]                              # (Lq*B, D), native dtype
    q_in = tgt + qpos_ref[...]                      # with_pos_embed(tgt, query_pos)
    mem = mem_ref[...]                              # (Lk*B, D)
    k_in = mem + kpos_ref[...]                      # with_pos_embed(memory, pos)

    # ---- fused, lane-dense in-projections: (L*B, D) @ (D, D), f32 accumulate ----
    # (scale 1/sqrt(hd) is pre-folded into wq/bq on the host)
    q2 = jnp.dot(q_in, wq_ref[...], preferred_element_type=f32) + bq_ref[...]
    k2 = jnp.dot(k_in, wk_ref[...], preferred_element_type=f32) + bk_ref[...]
    v2 = jnp.dot(mem, wv_ref[...], preferred_element_type=f32) + bv_ref[...]

    # ---- split heads only where attention needs them ----
    def split_heads(x, length):
        x = x.astype(dt).reshape(length, B, H, hd)
        x = jnp.transpose(x, (1, 2, 0, 3))          # (B, H, L, hd)
        return x.reshape(B * H, length, hd)

    qh = split_heads(q2, lq)                        # (B*H, Lq, hd)
    kh = split_heads(k2, lk)                        # (B*H, Lk, hd)
    vh = split_heads(v2, lk)                        # (B*H, Lk, hd)

    # ---- batched attention over B*H with stable softmax (stats in f32) ----
    s = jnp.einsum("bqe,bke->bqk", qh, kh, preferred_element_type=f32)
    s = s - jnp.max(s, axis=-1, keepdims=True)
    p = jnp.exp(s)
    denom = jnp.sum(p, axis=-1, keepdims=True)
    ctx = jnp.einsum("bqk,bke->bqe", p.astype(dt), vh, preferred_element_type=f32)
    ctx = ctx * pl.reciprocal(denom)                # normalize AFTER PV matmul (exact)

    # ---- re-merge heads and fused output projection (single matmul, K = D) ----
    ctx = ctx.reshape(B, H, lq, hd)
    ctx = jnp.transpose(ctx, (2, 0, 1, 3)).reshape(lq * B, D)
    attn = jnp.dot(ctx.astype(dt), wo_ref[...], preferred_element_type=f32) + bo_ref[...]

    # ---- residual (dropout p=0.0) + LayerNorm over D (eps=1e-5, biased var), f32 ----
    x = tgt.astype(f32) + attn
    mean = jnp.mean(x, axis=-1, keepdims=True)
    var = jnp.mean(jnp.square(x - mean), axis=-1, keepdims=True)
    y = (x - mean) * jax.lax.rsqrt(var + 1e-5)
    out_ref[...] = (y * g_ref[...] + beta_ref[...]).astype(out_ref.dtype)


def prepare_params(params, nhead, dtype=jnp.float32):
    """One-time host-side weight packing (hoisted out of the per-call path).

    PyTorch Linear computes x @ W.T + b with W of shape (out, in); store W.T
    and fold the 1/sqrt(head_dim) attention scale into Wq / bq.
    """
    D = params["wq"].shape[0]
    hd = D // nhead
    scale = 1.0 / math.sqrt(hd)
    return {
        "wq_t": (params["wq"].T * scale).astype(dtype),
        "wk_t": params["wk"].T.astype(dtype),
        "wv_t": params["wv"].T.astype(dtype),
        "wo_t": params["wo"].T.astype(dtype),
        "bq": (params["bq"].reshape(1, D) * scale).astype(jnp.float32),
        "bk": params["bk"].reshape(1, D).astype(jnp.float32),
        "bv": params["bv"].reshape(1, D).astype(jnp.float32),
        "bo": params["bo"].reshape(1, D).astype(jnp.float32),
        "ln_g": params["ln_g"].reshape(1, D).astype(jnp.float32),
        "ln_b": params["ln_b"].reshape(1, D).astype(jnp.float32),
    }


@functools.partial(jax.jit, static_argnames=("nhead",))
def cross_attention_layer(tgt, memory, pos, query_pos, packed, *, nhead):
    """tgt/query_pos: (Lq, B, D); memory/pos: (Lk, B, D). Returns (Lq, B, D)."""
    Lq, B, D = tgt.shape
    Lk = memory.shape[0]

    # Free layout plumbing: D stays the lane dim, so these reshapes cost nothing.
    tgt2d = tgt.reshape(Lq * B, D)
    qpos2d = query_pos.reshape(Lq * B, D)
    mem2d = memory.reshape(Lk * B, D)
    kpos2d = pos.reshape(Lk * B, D)

    vmem = pl.BlockSpec(memory_space=pltpu.MemorySpace.VMEM)
    out2d = pl.pallas_call(
        functools.partial(_cross_attn_kernel, nhead=nhead, b_size=B, lq=Lq, lk=Lk),
        out_shape=jax.ShapeDtypeStruct((Lq * B, D), tgt.dtype),
        in_specs=[vmem] * 14,
        out_specs=vmem,
    )(tgt2d, qpos2d, mem2d, kpos2d,
      packed["wq_t"], packed["wk_t"], packed["wv_t"], packed["wo_t"],
      packed["bq"], packed["bk"], packed["bv"], packed["bo"],
      packed["ln_g"], packed["ln_b"])
    return out2d.reshape(Lq, B, D)


def _reference(tgt, memory, pos, query_pos, params, nhead):
    """Pure-JAX reference mirroring nn.MultiheadAttention + residual + LayerNorm."""
    Lq, B, D = tgt.shape
    Lk = memory.shape[0]
    hd = D // nhead
    hi = jax.lax.Precision.HIGHEST
    q_in = tgt + query_pos
    k_in = memory + pos
    q = jnp.einsum("lbd,ed->lbe", q_in, params["wq"], precision=hi) + params["bq"][0]
    k = jnp.einsum("lbd,ed->lbe", k_in, params["wk"], precision=hi) + params["bk"][0]
    v = jnp.einsum("lbd,ed->lbe", memory, params["wv"], precision=hi) + params["bv"][0]

    def split(x, L):
        return x.reshape(L, B, nhead, hd).transpose(1, 2, 0, 3)  # (B, H, L, hd)

    qh, kh, vh = split(q, Lq), split(k, Lk), split(v, Lk)
    s = jnp.einsum("bhqd,bhkd->bhqk", qh, kh, precision=hi) / math.sqrt(hd)
    p = jax.nn.softmax(s, axis=-1)
    ctx = jnp.einsum("bhqk,bhkd->bhqd", p, vh, precision=hi)     # (B, H, Lq, hd)
    ctx = ctx.transpose(2, 0, 1, 3).reshape(Lq, B, D)
    attn_out = jnp.einsum("lbd,ed->lbe", ctx, params["wo"], precision=hi) + params["bo"][0]
    x = tgt + attn_out
    mean = jnp.mean(x, axis=-1, keepdims=True)
    var = jnp.mean((x - mean) ** 2, axis=-1, keepdims=True)
    y = (x - mean) / jnp.sqrt(var + 1e-5)
    return y * params["ln_g"][0] + params["ln_b"][0]


def _xavier_uniform(key, shape, dtype=jnp.float32):
    fan_out, fan_in = shape
    bound = math.sqrt(6.0 / (fan_in + fan_out))
    return jax.random.uniform(key, shape, dtype, -bound, bound)


if __name__ == "__main__":
    d_model, nhead = 32, 4
    Lq, Lk, B = 8, 16, 2

    key = jax.random.PRNGKey(0)
    keys = jax.random.split(key, 12)

    # Parameters (xavier_uniform for 2-D weights, zeros for biases,
    # ones/zeros for LayerNorm — matching the module's init).
    params = {
        "wq": _xavier_uniform(keys[0], (d_model, d_model)),
        "wk": _xavier_uniform(keys[1], (d_model, d_model)),
        "wv": _xavier_uniform(keys[2], (d_model, d_model)),
        "wo": _xavier_uniform(keys[3], (d_model, d_model)),
        "bq": jnp.zeros((1, d_model), jnp.float32),
        "bk": jnp.zeros((1, d_model), jnp.float32),
        "bv": jnp.zeros((1, d_model), jnp.float32),
        "bo": jnp.zeros((1, d_model), jnp.float32),
        "ln_g": jnp.ones((1, d_model), jnp.float32),
        "ln_b": jnp.zeros((1, d_model), jnp.float32),
    }

    # Inputs in PyTorch MultiheadAttention layout (L, B, D)
    tgt = jax.random.normal(keys[4], (Lq, B, d_model), jnp.float32)
    memory = jax.random.normal(keys[5], (Lk, B, d_model), jnp.float32)
    pos = jax.random.normal(keys[6], (Lk, B, d_model), jnp.float32)
    query_pos = jax.random.normal(keys[7], (Lq, B, d_model), jnp.float32)

    # One-time weight packing (kept out of the per-call path).
    packed = prepare_params(params, nhead, dtype=tgt.dtype)

    out = cross_attention_layer(tgt, memory, pos, query_pos, packed, nhead=nhead)
    out = jax.block_until_ready(out)

    ref = _reference(tgt, memory, pos, query_pos, params, nhead)
    assert out.shape == (Lq, B, d_model)
    assert jnp.allclose(out, ref, atol=1e-3, rtol=1e-3), "mismatch vs JAX reference"

    print("KERNEL_OK")
</pallas_src>

<mosaic_0001>
module attributes {stable_mosaic.version = 11 : i64} {
  func.func @_cross_attn_kernel(%arg0: memref<16x32xf32, #tpu.memory_space<vmem>>, %arg1: memref<16x32xf32, #tpu.memory_space<vmem>>, %arg2: memref<32x32xf32, #tpu.memory_space<vmem>>, %arg3: memref<32x32xf32, #tpu.memory_space<vmem>>, %arg4: memref<32x32xf32, #tpu.memory_space<vmem>>, %arg5: memref<32x32xf32, #tpu.memory_space<vmem>>, %arg6: memref<32x32xf32, #tpu.memory_space<vmem>>, %arg7: memref<32x32xf32, #tpu.memory_space<vmem>>, %arg8: memref<1x32xf32, #tpu.memory_space<vmem>>, %arg9: memref<1x32xf32, #tpu.memory_space<vmem>>, %arg10: memref<1x32xf32, #tpu.memory_space<vmem>>, %arg11: memref<1x32xf32, #tpu.memory_space<vmem>>, %arg12: memref<1x32xf32, #tpu.memory_space<vmem>>, %arg13: memref<1x32xf32, #tpu.memory_space<vmem>>, %arg14: memref<16x32xf32, #tpu.memory_space<vmem>>) attributes {dimension_semantics = [], scalar_prefetch = 0 : i64, scratch_operands = 0 : i64, tpu.core_type = #tpu.core_type<tc>} {
    %c0 = arith.constant 0 : index
    %c0_0 = arith.constant 0 : index
    %0 = vector.load %arg0[%c0, %c0_0] : memref<16x32xf32, #tpu.memory_space<vmem>>, vector<16x32xf32>
    %c0_1 = arith.constant 0 : index
    %c0_2 = arith.constant 0 : index
    %1 = vector.load %arg1[%c0_1, %c0_2] : memref<16x32xf32, #tpu.memory_space<vmem>>, vector<16x32xf32>
    %2 = arith.addf %0, %1 : vector<16x32xf32>
    %c0_3 = arith.constant 0 : index
    %c0_4 = arith.constant 0 : index
    %3 = vector.load %arg2[%c0_3, %c0_4] : memref<32x32xf32, #tpu.memory_space<vmem>>, vector<32x32xf32>
    %c0_5 = arith.constant 0 : index
    %c0_6 = arith.constant 0 : index
    %4 = vector.load %arg3[%c0_5, %c0_6] : memref<32x32xf32, #tpu.memory_space<vmem>>, vector<32x32xf32>
    %5 = arith.addf %3, %4 : vector<32x32xf32>
    %c0_7 = arith.constant 0 : index
    %c0_8 = arith.constant 0 : index
    %6 = vector.load %arg4[%c0_7, %c0_8] : memref<32x32xf32, #tpu.memory_space<vmem>>, vector<32x32xf32>
    %cst = arith.constant dense<0.000000e+00> : vector<16x32xf32>
    %7 = tpu.matmul %2, %6, %cst {dimension_numbers = #tpu.dot_dimension_numbers<[1], [0], [0], [1], [0, 0, 1, 1], [], []>} : vector<16x32xf32>, vector<32x32xf32>, vector<16x32xf32> -> vector<16x32xf32>
    %c0_9 = arith.constant 0 : index
    %c0_10 = arith.constant 0 : index
    %8 = vector.load %arg8[%c0_9, %c0_10] : memref<1x32xf32, #tpu.memory_space<vmem>>, vector<1x32xf32>
    %9 = vector.broadcast %8 : vector<1x32xf32> to vector<16x32xf32>
    %10 = arith.addf %7, %9 : vector<16x32xf32>
    %c0_11 = arith.constant 0 : index
    %c0_12 = arith.constant 0 : index
    %11 = vector.load %arg5[%c0_11, %c0_12] : memref<32x32xf32, #tpu.memory_space<vmem>>, vector<32x32xf32>
    %cst_13 = arith.constant dense<0.000000e+00> : vector<32x32xf32>
    %12 = tpu.matmul %5, %11, %cst_13 {dimension_numbers = #tpu.dot_dimension_numbers<[1], [0], [0], [1], [0, 0, 1, 1], [], []>} : vector<32x32xf32>, vector<32x32xf32>, vector<32x32xf32> -> vector<32x32xf32>
    %c0_14 = arith.constant 0 : index
    %c0_15 = arith.constant 0 : index
    %13 = vector.load %arg9[%c0_14, %c0_15] : memref<1x32xf32, #tpu.memory_space<vmem>>, vector<1x32xf32>
    %14 = vector.broadcast %13 : vector<1x32xf32> to vector<32x32xf32>
    %15 = arith.addf %12, %14 : vector<32x32xf32>
    %c0_16 = arith.constant 0 : index
    %c0_17 = arith.constant 0 : index
    %16 = vector.load %arg6[%c0_16, %c0_17] : memref<32x32xf32, #tpu.memory_space<vmem>>, vector<32x32xf32>
    %cst_18 = arith.constant dense<0.000000e+00> : vector<32x32xf32>
    %17 = tpu.matmul %3, %16, %cst_18 {dimension_numbers = #tpu.dot_dimension_numbers<[1], [0], [0], [1], [0, 0, 1, 1], [], []>} : vector<32x32xf32>, vector<32x32xf32>, vector<32x32xf32> -> vector<32x32xf32>
    %c0_19 = arith.constant 0 : index
    %c0_20 = arith.constant 0 : index
    %18 = vector.load %arg10[%c0_19, %c0_20] : memref<1x32xf32, #tpu.memory_space<vmem>>, vector<1x32xf32>
    %19 = vector.broadcast %18 : vector<1x32xf32> to vector<32x32xf32>
    %20 = arith.addf %17, %19 : vector<32x32xf32>
    %21 = vector.shape_cast %10 : vector<16x32xf32> to vector<8x2x4x8xf32>
    %22 = tpu.transpose %21, [1, 2, 0, 3] : vector<8x2x4x8xf32> -> vector<2x4x8x8xf32>
    %23 = vector.shape_cast %22 : vector<2x4x8x8xf32> to vector<8x8x8xf32>
    %24 = vector.shape_cast %15 : vector<32x32xf32> to vector<16x2x4x8xf32>
    %25 = tpu.transpose %24, [1, 2, 0, 3] : vector<16x2x4x8xf32> -> vector<2x4x16x8xf32>
    %26 = vector.shape_cast %25 : vector<2x4x16x8xf32> to vector<8x16x8xf32>
    %27 = vector.shape_cast %20 : vector<32x32xf32> to vector<16x2x4x8xf32>
    %28 = tpu.transpose %27, [1, 2, 0, 3] : vector<16x2x4x8xf32> -> vector<2x4x16x8xf32>
    %29 = vector.shape_cast %28 : vector<2x4x16x8xf32> to vector<8x16x8xf32>
    "tpu.trace_start"() <{level = 10 : i32, message = "bqe,bke->bqk"}> : () -> ()
    %cst_21 = arith.constant dense<0.000000e+00> : vector<8x8x16xf32>
    %30 = tpu.matmul %23, %26, %cst_21 {dimension_numbers = #tpu.dot_dimension_numbers<[2], [2], [1], [1], [0, 0, 0, 1, 1, 1], [0], [0]>} : vector<8x8x8xf32>, vector<8x16x8xf32>, vector<8x8x16xf32> -> vector<8x8x16xf32>
    "tpu.trace_stop"() : () -> ()
    %cst_22 = arith.constant dense<0xFF800000> : vector<8x8xf32>
    %31 = vector.multi_reduction <maximumf>, %30, %cst_22 [2] : vector<8x8x16xf32> to vector<8x8xf32>
    %32 = vector.shape_cast %31 : vector<8x8xf32> to vector<8x8x1xf32>
    %33 = vector.broadcast %32 : vector<8x8x1xf32> to vector<8x8x16xf32>
    %34 = arith.subf %30, %33 : vector<8x8x16xf32>
    %35 = math.exp %34 : vector<8x8x16xf32>
    %cst_23 = arith.constant dense<0.000000e+00> : vector<8x8xf32>
    %36 = vector.multi_reduction <add>, %35, %cst_23 [2] : vector<8x8x16xf32> to vector<8x8xf32>
    %37 = vector.shape_cast %36 : vector<8x8xf32> to vector<8x8x1xf32>
    "tpu.trace_start"() <{level = 10 : i32, message = "bqk,bke->bqe"}> : () -> ()
    %cst_24 = arith.constant dense<0.000000e+00> : vector<8x8x8xf32>
    %38 = tpu.matmul %35, %29, %cst_24 {dimension_numbers = #tpu.dot_dimension_numbers<[2], [1], [1], [2], [0, 0, 0, 1, 1, 2], [0], [0]>} : vector<8x8x16xf32>, vector<8x16x8xf32>, vector<8x8x8xf32> -> vector<8x8x8xf32>
    "tpu.trace_stop"() : () -> ()
    %39 = tpu.reciprocal %37 : vector<8x8x1xf32> -> vector<8x8x1xf32>
    %40 = vector.broadcast %39 : vector<8x8x1xf32> to vector<8x8x8xf32>
    %41 = arith.mulf %38, %40 : vector<8x8x8xf32>
    %42 = vector.shape_cast %41 : vector<8x8x8xf32> to vector<2x4x8x8xf32>
    %43 = tpu.transpose %42, [2, 0, 1, 3] : vector<2x4x8x8xf32> -> vector<8x2x4x8xf32>
    %44 = vector.shape_cast %43 : vector<8x2x4x8xf32> to vector<16x32xf32>
    %c0_25 = arith.constant 0 : index
    %c0_26 = arith.constant 0 : index
    %45 = vector.load %arg7[%c0_25, %c0_26] : memref<32x32xf32, #tpu.memory_space<vmem>>, vector<32x32xf32>
    %cst_27 = arith.constant dense<0.000000e+00> : vector<16x32xf32>
    %46 = tpu.matmul %44, %45, %cst_27 {dimension_numbers = #tpu.dot_dimension_numbers<[1], [0], [0], [1], [0, 0, 1, 1], [], []>} : vector<16x32xf32>, vector<32x32xf32>, vector<16x32xf32> -> vector<16x32xf32>
    %c0_28 = arith.constant 0 : index
    %c0_29 = arith.constant 0 : index
    %47 = vector.load %arg11[%c0_28, %c0_29] : memref<1x32xf32, #tpu.memory_space<vmem>>, vector<1x32xf32>
    %48 = vector.broadcast %47 : vector<1x32xf32> to vector<16x32xf32>
    %49 = arith.addf %46, %48 : vector<16x32xf32>
    %50 = arith.addf %0, %49 : vector<16x32xf32>
    %cst_30 = arith.constant dense<0.000000e+00> : vector<16xf32>
    %51 = vector.multi_reduction <add>, %50, %cst_30 [1] : vector<16x32xf32> to vector<16xf32>
    %52 = vector.shape_cast %51 : vector<16xf32> to vector<16x1xf32>
    %cst_31 = arith.constant 3.200000e+01 : f32
    %53 = vector.broadcast %cst_31 : f32 to vector<16x1xf32>
    %54 = arith.divf %52, %53 : vector<16x1xf32>
    %55 = vector.broadcast %54 : vector<16x1xf32> to vector<16x32xf32>
    %56 = arith.subf %50, %55 : vector<16x32xf32>
    %57 = arith.mulf %56, %56 : vector<16x32xf32>
    %cst_32 = arith.constant dense<0.000000e+00> : vector<16xf32>
    %58 = vector.multi_reduction <add>, %57, %cst_32 [1] : vector<16x32xf32> to vector<16xf32>
    %59 = vector.shape_cast %58 : vector<16xf32> to vector<16x1xf32>
    %cst_33 = arith.constant 3.200000e+01 : f32
    %60 = vector.broadcast %cst_33 : f32 to vector<16x1xf32>
    %61 = arith.divf %59, %60 : vector<16x1xf32>
    %62 = vector.broadcast %54 : vector<16x1xf32> to vector<16x32xf32>
    %63 = arith.subf %50, %62 : vector<16x32xf32>
    %cst_34 = arith.constant 9.99999974E-6 : f32
    %64 = vector.broadcast %cst_34 : f32 to vector<16x1xf32>
    %65 = arith.addf %61, %64 : vector<16x1xf32>
    %66 = math.rsqrt %65 : vector<16x1xf32>
    %67 = vector.broadcast %66 : vector<16x1xf32> to vector<16x32xf32>
    %68 = arith.mulf %63, %67 : vector<16x32xf32>
    %c0_35 = arith.constant 0 : index
    %c0_36 = arith.constant 0 : index
    %69 = vector.load %arg12[%c0_35, %c0_36] : memref<1x32xf32, #tpu.memory_space<vmem>>, vector<1x32xf32>
    %70 = vector.broadcast %69 : vector<1x32xf32> to vector<16x32xf32>
    %71 = arith.mulf %68, %70 : vector<16x32xf32>
    %c0_37 = arith.constant 0 : index
    %c0_38 = arith.constant 0 : index
    %72 = vector.load %arg13[%c0_37, %c0_38] : memref<1x32xf32, #tpu.memory_space<vmem>>, vector<1x32xf32>
    %73 = vector.broadcast %72 : vector<1x32xf32> to vector<16x32xf32>
    %74 = arith.addf %71, %73 : vector<16x32xf32>
    %c0_39 = arith.constant 0 : index
    %c0_40 = arith.constant 0 : index
    %75 = vector.load %arg14[%c0_39, %c0_40] : memref<16x32xf32, #tpu.memory_space<vmem>>, vector<16x32xf32>
    tpu.vector_store %arg14[%c0_39, %c0_40], %74 {strides = array<i32>} : memref<16x32xf32, #tpu.memory_space<vmem>>, vector<16x32xf32>,
    return
  }
}

</mosaic_0001>

<llo_original>
// kernel: cross_attention_layer.1
$region0: #{cross_attention_layer.1}
  #allocation0 [shape = 'u32[]', space=smem, size = 0x4, offset = 0x4, fixed_abs, tag = 'smem constant byte address 0x4 - core index']
  #allocation1 [shape = 'u32[144,128]{1,0:T(1,128)}', space=vmem, size = 0x12000, scoped, tag = 'internal scratch']
  %s0 = inlined_call_operand.hbm [shape: f32[16,32], index: 0, kind: input, shape index: {}]
  %s1 = inlined_call_operand.hbm [shape: f32[16,32], index: 1, kind: input, shape index: {}]
  %s2 = inlined_call_operand.hbm [shape: f32[32,32], index: 2, kind: input, shape index: {}]
  %s3 = inlined_call_operand.hbm [shape: f32[32,32], index: 3, kind: input, shape index: {}]
  %s4 = inlined_call_operand.vmem [shape: f32[32,32], index: 4, kind: input, shape index: {}]
  %s5 = inlined_call_operand.hbm [shape: f32[32,32], index: 5, kind: input, shape index: {}]
  %s6 = inlined_call_operand.vmem [shape: f32[32,32], index: 6, kind: input, shape index: {}]
  %s7 = inlined_call_operand.hbm [shape: f32[32,32], index: 7, kind: input, shape index: {}]
  %s8 = inlined_call_operand.hbm [shape: f32[1,32], index: 8, kind: input, shape index: {}]
  %s9 = inlined_call_operand.hbm [shape: f32[1,32], index: 9, kind: input, shape index: {}]
  %s10 = inlined_call_operand.hbm [shape: f32[1,32], index: 10, kind: input, shape index: {}]
  %s11 = inlined_call_operand.hbm [shape: f32[1,32], index: 11, kind: input, shape index: {}]
  %s12 = inlined_call_operand.hbm [shape: f32[1,32], index: 12, kind: input, shape index: {}]
  %s13 = inlined_call_operand.hbm [shape: f32[1,32], index: 13, kind: input, shape index: {}]
  %s14 = inlined_call_operand.hbm [shape: f32[16,32], index: 14, kind: output, shape index: {}]
  %s15 = sld [smem:[#allocation0]]
  $region114: #{cross_attention_layer.1} parent=0
    _
  %s17 = ssub.s32 1, %s15
  %s18 = scalar_select 0, %s17, %s15
  $region1: #{cross_attention_layer.1} parent=0
    #allocation2 [shape = 'u8[8192]{0}', space=vmem, size = 0x2000, scoped, tag = 'input window, operand 0, single buffered']
    #allocation3 [shape = 's32[1]{0}', space=sflag, size = 0x4, scoped, tag = 'scoped memory for cross_attention_layer.1']
    #allocation4 [shape = 's32[1]{0}', space=sflag, size = 0x4, scoped, tag = 'scoped memory for cross_attention_layer.1']
    #allocation5 [shape = 'u8[8192]{0}', space=vmem, size = 0x2000, scoped, tag = 'input window, operand 1, single buffered']
    #allocation6 [shape = 's32[1]{0}', space=sflag, size = 0x4, scoped, tag = 'scoped memory for cross_attention_layer.1']
    #allocation7 [shape = 'u8[16384]{0}', space=vmem, size = 0x4000, scoped, tag = 'input window, operand 2, single buffered']
    #allocation8 [shape = 'u8[16384]{0}', space=vmem, size = 0x4000, scoped, tag = 'input window, operand 3, single buffered']
    #allocation9 [shape = 's32[1]{0}', space=sflag, size = 0x4, scoped, tag = 'scoped memory for cross_attention_layer.1']
    #allocation10 [shape = 'u8[16384]{0}', space=vmem, size = 0x4000, scoped, tag = 'input window, operand 5, single buffered']
    #allocation11 [shape = 'u8[16384]{0}', space=vmem, size = 0x4000, scoped, tag = 'input window, operand 7, single buffered']
    #allocation12 [shape = 's32[1]{0}', space=sflag, size = 0x4, scoped, tag = 'scoped memory for cross_attention_layer.1']
    #allocation13 [shape = 'u8[512]{0}', space=vmem, size = 0x400, scoped, tag = 'input window, operand 8, single buffered']
    #allocation14 [shape = 'u8[512]{0}', space=vmem, size = 0x400, scoped, tag = 'input window, operand 9, single buffered']
    #allocation15 [shape = 's32[1]{0}', space=sflag, size = 0x4, scoped, tag = 'scoped memory for cross_attention_layer.1']
    #allocation16 [shape = 'u8[512]{0}', space=vmem, size = 0x400, scoped, tag = 'input window, operand 10, single buffered']
    #allocation17 [shape = 'u8[512]{0}', space=vmem, size = 0x400, scoped, tag = 'input window, operand 11, single buffered']
    #allocation18 [shape = 's32[1]{0}', space=sflag, size = 0x4, scoped, tag = 'scoped memory for cross_attention_layer.1']
    #allocation19 [shape = 'u8[512]{0}', space=vmem, size = 0x400, scoped, tag = 'input window, operand 12, single buffered']
    #allocation20 [shape = 'u8[512]{0}', space=vmem, size = 0x400, scoped, tag = 'input window, operand 13, single buffered']
    #allocation21 [shape = 's32[1]{0}', space=sflag, size = 0x4, scoped, tag = 'scoped memory for cross_attention_layer.1']
    #allocation22 [shape = 'u8[8192]{0}', space=vmem, size = 0x2000, scoped, tag = 'output window, operand 0, single buffered']
    %19 = vsyncpa [#allocation3], 0
    %20 = vsyncpa [#allocation6], 0
    %21 = vsyncpa [#allocation9], 0
    %22 = vsyncpa [#allocation12], 0
    %23 = vsyncpa [#allocation15], 0
    %24 = vsyncpa [#allocation18], 0
    %25 = vsyncpa [#allocation21], 0
    %26 = vsyncpa [#allocation4], 0
    // Predicated region
    $region2: #{cross_attention_layer.1} parent=1 // pred_check
      _
    $region3: #{cross_attention_layer.1} parent=1 // pred_check_branch
      %28 = sbr.rel (0) target = $region5
    $region4: #{cross_attention_layer.1} parent=1 // pred_region
      %s30 = ssub.s32 256, 256
      %31 = vsyncadd [#allocation3], %s30
      %s32 = sshll.u32 [#allocation2], 4
      %s33 = int_to_ptr.vmem [resolvable:$true] %s32
      %38 = dma.hbm_to_vmem [thread:$0]  %s0, 256, %s33, [#allocation3], 128, 128, 8
    $region5: #{cross_attention_layer.1} parent=1 // pred_fallthru
      _
    // Predicated region
    $region6: #{cross_attention_layer.1} parent=1 // pred_check
      _
    $region7: #{cross_attention_layer.1} parent=1 // pred_check_branch
      %40 = sbr.rel (0) target = $region9
    $region8: #{cross_attention_layer.1} parent=1 // pred_region
      %s42 = ssub.s32 256, 256
      %43 = vsyncadd [#allocation6], %s42
      %s44 = sshll.u32 [#allocation5], 4
      %s45 = int_to_ptr.vmem [resolvable:$true] %s44
      %50 = dma.hbm_to_vmem [thread:$0]  %s1, 256, %s45, [#allocation6], 128, 128, 8
    $region9: #{cross_attention_layer.1} parent=1 // pred_fallthru
      _
    // Predicated region
    $region10: #{cross_attention_layer.1} parent=1 // pred_check
      _
    $region11: #{cross_attention_layer.1} parent=1 // pred_check_branch
      %52 = sbr.rel (0) target = $region13
    $region12: #{cross_attention_layer.1} parent=1 // pred_region
      %s54 = ssub.s32 512, 512
      %55 = vsyncadd [#allocation6], %s54
      %s56 = sshll.u32 [#allocation7], 4
      %s57 = int_to_ptr.vmem [resolvable:$true] %s56
      %62 = dma.hbm_to_vmem [thread:$0]  %s2, 512, %s57, [#allocation6], 128, 128, 8
    $region13: #{cross_attention_layer.1} parent=1 // pred_fallthru
      _
    // Predicated region
    $region14: #{cross_attention_layer.1} parent=1 // pred_check
      _
    $region15: #{cross_attention_layer.1} parent=1 // pred_check_branch
      %64 = sbr.rel (0) target = $region17
    $region16: #{cross_attention_layer.1} parent=1 // pred_region
      %s66 = ssub.s32 512, 512
      %67 = vsyncadd [#allocation9], %s66
      %s68 = sshll.u32 [#allocation8], 4
      %s69 = int_to_ptr.vmem [resolvable:$true] %s68
      %74 = dma.hbm_to_vmem [thread:$0]  %s3, 512, %s69, [#allocation9], 128, 128, 8
    $region17: #{cross_attention_layer.1} parent=1 // pred_fallthru
      _
    // Predicated region
    $region18: #{cross_attention_layer.1} parent=1 // pred_check
      _
    $region19: #{cross_attention_layer.1} parent=1 // pred_check_branch
      %76 = sbr.rel (0) target = $region21
    $region20: #{cross_attention_layer.1} parent=1 // pred_region
      _
    $region21: #{cross_attention_layer.1} parent=1 // pred_fallthru
      _
    // Predicated region
    $region22: #{cross_attention_layer.1} parent=1 // pred_check
      _
    $region23: #{cross_attention_layer.1} parent=1 // pred_check_branch
      %78 = sbr.rel (0) target = $region25
    $region24: #{cross_attention_layer.1} parent=1 // pred_region
      %s80 = ssub.s32 512, 512
      %81 = vsyncadd [#allocation9], %s80
      %s82 = sshll.u32 [#allocation10], 4
      %s83 = int_to_ptr.vmem [resolvable:$true] %s82
      %88 = dma.hbm_to_vmem [thread:$0]  %s5, 512, %s83, [#allocation9], 128, 128, 8
    $region25: #{cross_attention_layer.1} parent=1 // pred_fallthru
      _
    // Predicated region
    $region26: #{cross_attention_layer.1} parent=1 // pred_check
      _
    $region27: #{cross_attention_layer.1} parent=1 // pred_check_branch
      %90 = sbr.rel (0) target = $region29
    $region28: #{cross_attention_layer.1} parent=1 // pred_region
      _
    $region29: #{cross_attention_layer.1} parent=1 // pred_fallthru
      _
    // Predicated region
    $region30: #{cross_attention_layer.1} parent=1 // pred_check
      _
    $region31: #{cross_attention_layer.1} parent=1 // pred_check_branch
      %92 = sbr.rel (0) target = $region33
    $region32: #{cross_attention_layer.1} parent=1 // pred_region
      %s94 = ssub.s32 512, 512
      %95 = vsyncadd [#allocation12], %s94
      %s96 = sshll.u32 [#allocation11], 4
      %s97 = int_to_ptr.vmem [resolvable:$true] %s96
      %102 = dma.hbm_to_vmem [thread:$0]  %s7, 512, %s97, [#allocation12], 128, 128, 8
    $region33: #{cross_attention_layer.1} parent=1 // pred_fallthru
      _
    // Predicated region
    $region34: #{cross_attention_layer.1} parent=1 // pred_check
      _
    $region35: #{cross_attention_layer.1} parent=1 // pred_check_branch
      %104 = sbr.rel (0) target = $region37
    $region36: #{cross_attention_layer.1} parent=1 // pred_region
      %s106 = ssub.s32 16, 16
      %107 = vsyncadd [#allocation12], %s106
      %s109 = sshll.u32 [#allocation13], 4
      %s110 = int_to_ptr.vmem [resolvable:$true] %s109
      %112 = dma.hbm_to_vmem [thread:$0]  %s8, 16, %s110, [#allocation12]
    $region37: #{cross_attention_layer.1} parent=1 // pred_fallthru
      _
    // Predicated region
    $region38: #{cross_attention_layer.1} parent=1 // pred_check
      _
    $region39: #{cross_attention_layer.1} parent=1 // pred_check_branch
      %114 = sbr.rel (0) target = $region41
    $region40: #{cross_attention_layer.1} parent=1 // pred_region
      %s116 = ssub.s32 16, 16
      %117 = vsyncadd [#allocation15], %s116
      %s119 = sshll.u32 [#allocation14], 4
      %s120 = int_to_ptr.vmem [resolvable:$true] %s119
      %122 = dma.hbm_to_vmem [thread:$0]  %s9, 16, %s120, [#allocation15]
    $region41: #{cross_attention_layer.1} parent=1 // pred_fallthru
      _
    // Predicated region
    $region42: #{cross_attention_layer.1} parent=1 // pred_check
      _
    $region43: #{cross_attention_layer.1} parent=1 // pred_check_branch
      %124 = sbr.rel (0) target = $region45
    $region44: #{cross_attention_layer.1} parent=1 // pred_region
      %s126 = ssub.s32 16, 16
      %127 = vsyncadd [#allocation15], %s126
      %s129 = sshll.u32 [#allocation16], 4
      %s130 = int_to_ptr.vmem [resolvable:$true] %s129
      %132 = dma.hbm_to_vmem [thread:$0]  %s10, 16, %s130, [#allocation15]
    $region45: #{cross_attention_layer.1} parent=1 // pred_fallthru
      _
    // Predicated region
    $region46: #{cross_attention_layer.1} parent=1 // pred_check
      _
    $region47: #{cross_attention_layer.1} parent=1 // pred_check_branch
      %134 = sbr.rel (0) target = $region49
    $region48: #{cross_attention_layer.1} parent=1 // pred_region
      %s136 = ssub.s32 16, 16
      %137 = vsyncadd [#allocation18], %s136
      %s139 = sshll.u32 [#allocation17], 4
      %s140 = int_to_ptr.vmem [resolvable:$true] %s139
      %142 = dma.hbm_to_vmem [thread:$0]  %s11, 16, %s140, [#allocation18]
    $region49: #{cross_attention_layer.1} parent=1 // pred_fallthru
      _
    // Predicated region
    $region50: #{cross_attention_layer.1} parent=1 // pred_check
      _
    $region51: #{cross_attention_layer.1} parent=1 // pred_check_branch
      %144 = sbr.rel (0) target = $region53
    $region52: #{cross_attention_layer.1} parent=1 // pred_region
      %s146 = ssub.s32 16, 16
      %147 = vsyncadd [#allocation18], %s146
      %s149 = sshll.u32 [#allocation19], 4
      %s150 = int_to_ptr.vmem [resolvable:$true] %s149
      %152 = dma.hbm_to_vmem [thread:$0]  %s12, 16, %s150, [#allocation18]
    $region53: #{cross_attention_layer.1} parent=1 // pred_fallthru
      _
    // Predicated region
    $region54: #{cross_attention_layer.1} parent=1 // pred_check
      _
    $region55: #{cross_attention_layer.1} parent=1 // pred_check_branch
      %154 = sbr.rel (0) target = $region57
    $region56: #{cross_attention_layer.1} parent=1 // pred_region
      %s156 = ssub.s32 16, 16
      %157 = vsyncadd [#allocation21], %s156
      %s159 = sshll.u32 [#allocation20], 4
      %s160 = int_to_ptr.vmem [resolvable:$true] %s159
      %162 = dma.hbm_to_vmem [thread:$0]  %s13, 16, %s160, [#allocation21]
    $region57: #{cross_attention_layer.1} parent=1 // pred_fallthru
      _
    // Predicated region
    $region58: #{cross_attention_layer.1} parent=1 // pred_check
      _
    $region59: #{cross_attention_layer.1} parent=1 // pred_check_branch
      %164 = sbr.rel (0) target = $region61
    $region60: #{cross_attention_layer.1} parent=1 // pred_region
      %165 = dma.done [#allocation3], 256
    $region61: #{cross_attention_layer.1} parent=1 // pred_fallthru
      _
    // Predicated region
    $region62: #{cross_attention_layer.1} parent=1 // pred_check
      _
    $region63: #{cross_attention_layer.1} parent=1 // pred_check_branch
      %167 = sbr.rel (0) target = $region65
    $region64: #{cross_attention_layer.1} parent=1 // pred_region
      %168 = dma.done [#allocation6], 256
    $region65: #{cross_attention_layer.1} parent=1 // pred_fallthru
      _
    // Predicated region
    $region66: #{cross_attention_layer.1} parent=1 // pred_check
      _
    $region67: #{cross_attention_layer.1} parent=1 // pred_check_branch
      %170 = sbr.rel (0) target = $region69
    $region68: #{cross_attention_layer.1} parent=1 // pred_region
      %171 = dma.done [#allocation6], 512
    $region69: #{cross_attention_layer.1} parent=1 // pred_fallthru
      _
    // Predicated region
    $region70: #{cross_attention_layer.1} parent=1 // pred_check
      _
    $region71: #{cross_attention_layer.1} parent=1 // pred_check_branch
      %173 = sbr.rel (0) target = $region73
    $region72: #{cross_attention_layer.1} parent=1 // pred_region
      %174 = dma.done [#allocation9], 512
    $region73: #{cross_attention_layer.1} parent=1 // pred_fallthru
      _
    // Predicated region
    $region74: #{cross_attention_layer.1} parent=1 // pred_check
      _
    $region75: #{cross_attention_layer.1} parent=1 // pred_check_branch
      %176 = sbr.rel (0) target = $region77
    $region76: #{cross_attention_layer.1} parent=1 // pred_region
      %177 = dma.done [#allocation9], 512
    $region77: #{cross_attention_layer.1} parent=1 // pred_fallthru
      _
    // Predicated region
    $region78: #{cross_attention_layer.1} parent=1 // pred_check
      _
    $region79: #{cross_attention_layer.1} parent=1 // pred_check_branch
      %179 = sbr.rel (0) target = $region81
    $region80: #{cross_attention_layer.1} parent=1 // pred_region
      %180 = dma.done [#allocation12], 512
    $region81: #{cross_attention_layer.1} parent=1 // pred_fallthru
      _
    // Predicated region
    $region82: #{cross_attention_layer.1} parent=1 // pred_check
      _
    $region83: #{cross_attention_layer.1} parent=1 // pred_check_branch
      %182 = sbr.rel (0) target = $region85
    $region84: #{cross_attention_layer.1} parent=1 // pred_region
      %183 = dma.done [#allocation12], 16
    $region85: #{cross_attention_layer.1} parent=1 // pred_fallthru
      _
    // Predicated region
    $region86: #{cross_attention_layer.1} parent=1 // pred_check
      _
    $region87: #{cross_attention_layer.1} parent=1 // pred_check_branch
      %185 = sbr.rel (0) target = $region89
    $region88: #{cross_attention_layer.1} parent=1 // pred_region
      %186 = dma.done [#allocation15], 16
    $region89: #{cross_attention_layer.1} parent=1 // pred_fallthru
      _
    // Predicated region
    $region90: #{cross_attention_layer.1} parent=1 // pred_check
      _
    $region91: #{cross_attention_layer.1} parent=1 // pred_check_branch
      %188 = sbr.rel (0) target = $region93
    $region92: #{cross_attention_layer.1} parent=1 // pred_region
      %189 = dma.done [#allocation15], 16
    $region93: #{cross_attention_layer.1} parent=1 // pred_fallthru
      _
    // Predicated region
    $region94: #{cross_attention_layer.1} parent=1 // pred_check
      _
    $region95: #{cross_attention_layer.1} parent=1 // pred_check_branch
      %191 = sbr.rel (0) target = $region97
    $region96: #{cross_attention_layer.1} parent=1 // pred_region
      %192 = dma.done [#allocation18], 16
    $region97: #{cross_attention_layer.1} parent=1 // pred_fallthru
      _
    // Predicated region
    $region98: #{cross_attention_layer.1} parent=1 // pred_check
      _
    $region99: #{cross_attention_layer.1} parent=1 // pred_check_branch
      %194 = sbr.rel (0) target = $region101
    $region100: #{cross_attention_layer.1} parent=1 // pred_region
      %195 = dma.done [#allocation18], 16
    $region101: #{cross_attention_layer.1} parent=1 // pred_fallthru
      _
    // Predicated region
    $region102: #{cross_attention_layer.1} parent=1 // pred_check
      _
    $region103: #{cross_attention_layer.1} parent=1 // pred_check_branch
      %197 = sbr.rel (0) target = $region105
    $region104: #{cross_attention_layer.1} parent=1 // pred_region
      %198 = dma.done [#allocation21], 16
    $region105: #{cross_attention_layer.1} parent=1 // pred_fallthru
      _
    %v199 = vld [vmem:[#allocation2] sm:$0xff]
    %v200 = vld [vmem:[#allocation2 + $0x8] sm:$0xff]
    %v201 = vld [vmem:[#allocation5] sm:$0xff]
    %v202 = vld [vmem:[#allocation5 + $0x8] sm:$0xff]
    %v203 = vadd.f32 %v199, %v201
    %v204 = vadd.f32 %v200, %v202
    %v205 = vld [vmem:[#allocation7] sm:$0xff]
    %v206 = vld [vmem:[#allocation7 + $0x8] sm:$0xff]
    %v207 = vld [vmem:[#allocation7 + $0x10] sm:$0xff]
    %v208 = vld [vmem:[#allocation7 + $0x18] sm:$0xff]
    %v209 = vld [vmem:[#allocation8] sm:$0xff]
    %v210 = vld [vmem:[#allocation8 + $0x8] sm:$0xff]
    %v211 = vld [vmem:[#allocation8 + $0x10] sm:$0xff]
    %v212 = vld [vmem:[#allocation8 + $0x18] sm:$0xff]
    %v213 = vadd.f32 %v205, %v209
    %v214 = vadd.f32 %v206, %v210
    %v215 = vadd.f32 %v207, %v211
    %v216 = vadd.f32 %v208, %v212
    %v217 = vld [vmem:[%s4] sm:$0xff]
    %v218 = vld [vmem:[%s4 + $0x8] sm:$0xff]
    %v219 = vld [vmem:[%s4 + $0x10] sm:$0xff]
    %v220 = vld [vmem:[%s4 + $0x18] sm:$0xff]
    %v221 = vld [vmem:[#allocation13] sm:$0x1]
    %v223 = vlaneseq
    %v224 = vshrl.u32 %v223, 7
    %v225 = vsub.s32 0, %v224
    %v226 = vrot.slane %v221, %v225
    %vm228 = vcmask 261120
    %v230 = vsel %vm228, %v203, 0
    %v233 = vsel %vm228, %v204, 0
    %235 = vmatprep.subr.mxu0 0.0
    %236 = vmatpush1.msra.mxu0 %v217
    %237 = vmatprep.subr.mxu0 0.0
    %238 = vmatpush1.msra.mxu0 %v218
    %239 = vmatprep.subr.mxu0 0.0
    %240 = vmatpush1.msra.mxu0 %v219
    %241 = vmatprep.subr.mxu0 0.0
    %242 = vmatpush1.msra.mxu0 %v220
    %243 = vmatprep.subr.mxu0 0.0
    %244 = vmatpush1.msra.mxu0 0.0
    %245 = vmatprep.subr.mxu0 0.0
    %246 = vmatpush1.msra.mxu0 0.0
    %247 = vmatprep.subr.mxu0 0.0
    %248 = vmatpush1.msra.mxu0 0.0
    %249 = vmatprep.subr.mxu0 0.0
    %250 = vmatpush1.msra.mxu0 0.0
    %251 = vmatprep.subr.mxu0 0.0
    %252 = vmatpush1.msra.mxu0 0.0
    %253 = vmatprep.subr.mxu0 0.0
    %254 = vmatpush1.msra.mxu0 0.0
    %255 = vmatprep.subr.mxu0 0.0
    %256 = vmatpush1.msra.mxu0 0.0
    %257 = vmatprep.subr.mxu0 0.0
    %258 = vmatpush1.msra.mxu0 0.0
    %259 = vmatprep.subr.mxu0 0.0
    %260 = vmatpush1.msra.mxu0 0.0
    %261 = vmatprep.subr.mxu0 0.0
    %262 = vmatpush1.msra.mxu0 0.0
    %263 = vmatprep.subr.mxu0 0.0
    %264 = vmatpush1.msra.mxu0 0.0
    %265 = vmatprep.subr.mxu0 0.0
    %266 = vmatpush1.msra.mxu0 0.0
    %267 = vmatprep.subr.mxu0 0.0
    %268 = vmatpush1.msra.mxu0 0.0
    %269 = vmatprep.subr.mxu0 0.0
    %270 = vmatpush1.msra.mxu0 0.0
    %271 = vmatprep.subr.mxu0 0.0
    %272 = vmatpush1.msra.mxu0 0.0
    %273 = vmatprep.subr.mxu0 0.0
    %274 = vmatpush1.msra.mxu0 0.0
    %275 = vmatprep.subr.mxu0 0.0
    %276 = vmatpush1.msra.mxu0 0.0
    %277 = vmatprep.subr.mxu0 0.0
    %278 = vmatpush1.msra.mxu0 0.0
    %279 = vmatprep.subr.mxu0 0.0
    %280 = vmatpush1.msra.mxu0 0.0
    %281 = vmatprep.subr.mxu0 0.0
    %282 = vmatpush1.msra.mxu0 0.0
    %283 = vmatprep.subr.mxu0 0.0
    %284 = vmatpush1.msra.mxu0 0.0
    %285 = vmatprep.subr.mxu0 0.0
    %286 = vmatpush1.msra.mxu0 0.0
    %287 = vmatprep.subr.mxu0 0.0
    %288 = vmatpush1.msra.mxu0 0.0
    %289 = vmatprep.subr.mxu0 0.0
    %290 = vmatpush1.msra.mxu0 0.0
    %291 = vmatprep.subr.mxu0 0.0
    %292 = vmatpush1.msra.mxu0 0.0
    %293 = vmatprep.subr.mxu0 0.0
    %294 = vmatpush1.msra.mxu0 0.0
    %295 = vmatprep.subr.mxu0 0.0
    %296 = vmatpush1.msra.mxu0 0.0
    %297 = vmatprep.subr.mxu0 0.0
    %298 = vmatpush1.msra.mxu0 0.0
    %299 = vmatprep.mubr.f32.mxu0 0.0
    %300 = vmatmul.mubr.f32.gmra.mrb[0].mxu0 %v230
    %v301 = vpop.f32.mrb[0].mxu0
    %v302 = vadd.f32 %v226, %v301
    %v303 = vpop.f32.mrb[0].mxu0
    %304 = vmatprep.mubr.f32.mxu0 0.0
    %305 = vmatmul.mubr.f32.gmra.mrb[0].mxu0 %v233
    %v306 = vpop.f32.mrb[0].mxu0
    %v307 = vadd.f32 %v226, %v306
    %v308 = vpop.f32.mrb[0].mxu0
    %309 = vdwg.mxu0
    %v310 = vld [vmem:[#allocation10] sm:$0xff]
    %v311 = vld [vmem:[#allocation10 + $0x8] sm:$0xff]
    %v312 = vld [vmem:[#allocation10 + $0x10] sm:$0xff]
    %v313 = vld [vmem:[#allocation10 + $0x18] sm:$0xff]
    %v314 = vld [vmem:[#allocation14] sm:$0x1]
    %v316 = vlaneseq
    %v317 = vshrl.u32 %v316, 7
    %v318 = vsub.s32 0, %v317
    %v319 = vrot.slane %v314, %v318
    %v322 = vsel %vm228, %v213, 0
    %v325 = vsel %vm228, %v214, 0
    %v328 = vsel %vm228, %v215, 0
    %v331 = vsel %vm228, %v216, 0
    %333 = vmatprep.subr.mxu0 0.0
    %334 = vmatpush1.msra.mxu0 %v310
    %335 = vmatprep.subr.mxu0 0.0
    %336 = vmatpush1.msra.mxu0 %v311
    %337 = vmatprep.subr.mxu0 0.0
    %338 = vmatpush1.msra.mxu0 %v312
    %339 = vmatprep.subr.mxu0 0.0
    %340 = vmatpush1.msra.mxu0 %v313
    %341 = vmatprep.subr.mxu0 0.0
    %342 = vmatpush1.msra.mxu0 0.0
    %343 = vmatprep.subr.mxu0 0.0
    %344 = vmatpush1.msra.mxu0 0.0
    %345 = vmatprep.subr.mxu0 0.0
    %346 = vmatpush1.msra.mxu0 0.0
    %347 = vmatprep.subr.mxu0 0.0
    %348 = vmatpush1.msra.mxu0 0.0
    %349 = vmatprep.subr.mxu0 0.0
    %350 = vmatpush1.msra.mxu0 0.0
    %351 = vmatprep.subr.mxu0 0.0
    %352 = vmatpush1.msra.mxu0 0.0
    %353 = vmatprep.subr.mxu0 0.0
    %354 = vmatpush1.msra.mxu0 0.0
    %355 = vmatprep.subr.mxu0 0.0
    %356 = vmatpush1.msra.mxu0 0.0
    %357 = vmatprep.subr.mxu0 0.0
    %358 = vmatpush1.msra.mxu0 0.0
    %359 = vmatprep.subr.mxu0 0.0
    %360 = vmatpush1.msra.mxu0 0.0
    %361 = vmatprep.subr.mxu0 0.0
    %362 = vmatpush1.msra.mxu0 0.0
    %363 = vmatprep.subr.mxu0 0.0
    %364 = vmatpush1.msra.mxu0 0.0
    %365 = vmatprep.subr.mxu0 0.0
    %366 = vmatpush1.msra.mxu0 0.0
    %367 = vmatprep.subr.mxu0 0.0
    %368 = vmatpush1.msra.mxu0 0.0
    %369 = vmatprep.subr.mxu0 0.0
    %370 = vmatpush1.msra.mxu0 0.0
    %371 = vmatprep.subr.mxu0 0.0
    %372 = vmatpush1.msra.mxu0 0.0
    %373 = vmatprep.subr.mxu0 0.0
    %374 = vmatpush1.msra.mxu0 0.0
    %375 = vmatprep.subr.mxu0 0.0
    %376 = vmatpush1.msra.mxu0 0.0
    %377 = vmatprep.subr.mxu0 0.0
    %378 = vmatpush1.msra.mxu0 0.0
    %379 = vmatprep.subr.mxu0 0.0
    %380 = vmatpush1.msra.mxu0 0.0
    %381 = vmatprep.subr.mxu0 0.0
    %382 = vmatpush1.msra.mxu0 0.0
    %383 = vmatprep.subr.mxu0 0.0
    %384 = vmatpush1.msra.mxu0 0.0
    %385 = vmatprep.subr.mxu0 0.0
    %386 = vmatpush1.msra.mxu0 0.0
    %387 = vmatprep.subr.mxu0 0.0
    %388 = vmatpush1.msra.mxu0 0.0
    %389 = vmatprep.subr.mxu0 0.0
    %390 = vmatpush1.msra.mxu0 0.0
    %391 = vmatprep.subr.mxu0 0.0
    %392 = vmatpush1.msra.mxu0 0.0
    %393 = vmatprep.subr.mxu0 0.0
    %394 = vmatpush1.msra.mxu0 0.0
    %395 = vmatprep.subr.mxu0 0.0
    %396 = vmatpush1.msra.mxu0 0.0
    %397 = vmatprep.mubr.f32.mxu0 0.0
    %398 = vmatmul.mubr.f32.gmra.mrb[0].mxu0 %v322
    %v399 = vpop.f32.mrb[0].mxu0
    %v400 = vadd.f32 %v319, %v399
    %v401 = vpop.f32.mrb[0].mxu0
    %402 = vmatprep.mubr.f32.mxu0 0.0
    %403 = vmatmul.mubr.f32.gmra.mrb[0].mxu0 %v325
    %v404 = vpop.f32.mrb[0].mxu0
    %v405 = vadd.f32 %v319, %v404
    %v406 = vpop.f32.mrb[0].mxu0
    %407 = vmatprep.mubr.f32.mxu0 0.0
    %408 = vmatmul.mubr.f32.gmra.mrb[0].mxu0 %v328
    %v409 = vpop.f32.mrb[0].mxu0
    %v410 = vadd.f32 %v319, %v409
    %v411 = vpop.f32.mrb[0].mxu0
    %412 = vmatprep.mubr.f32.mxu0 0.0
    %413 = vmatmul.mubr.f32.gmra.mrb[0].mxu0 %v331
    %v414 = vpop.f32.mrb[0].mxu0
    %v415 = vadd.f32 %v319, %v414
    %v416 = vpop.f32.mrb[0].mxu0
    %417 = vdwg.mxu0
    %v418 = vld [vmem:[%s6] sm:$0xff]
    %v419 = vld [vmem:[%s6 + $0x8] sm:$0xff]
    %v420 = vld [vmem:[%s6 + $0x10] sm:$0xff]
    %v421 = vld [vmem:[%s6 + $0x18] sm:$0xff]
    %v422 = vld [vmem:[#allocation16] sm:$0x1]
    %v424 = vlaneseq
    %v425 = vshrl.u32 %v424, 7
    %v426 = vsub.s32 0, %v425
    %v427 = vrot.slane %v422, %v426
    %v430 = vsel %vm228, %v205, 0
    %v433 = vsel %vm228, %v206, 0
    %v436 = vsel %vm228, %v207, 0
    %v439 = vsel %vm228, %v208, 0
    %441 = vmatprep.subr.mxu0 0.0
    %442 = vmatpush1.msra.mxu0 %v418
    %443 = vmatprep.subr.mxu0 0.0
    %444 = vmatpush1.msra.mxu0 %v419
    %445 = vmatprep.subr.mxu0 0.0
    %446 = vmatpush1.msra.mxu0 %v420
    %447 = vmatprep.subr.mxu0 0.0
    %448 = vmatpush1.msra.mxu0 %v421
    %449 = vmatprep.subr.mxu0 0.0
    %450 = vmatpush1.msra.mxu0 0.0
    %451 = vmatprep.subr.mxu0 0.0
    %452 = vmatpush1.msra.mxu0 0.0
    %453 = vmatprep.subr.mxu0 0.0
    %454 = vmatpush1.msra.mxu0 0.0
    %455 = vmatprep.subr.mxu0 0.0
    %456 = vmatpush1.msra.mxu0 0.0
    %457 = vmatprep.subr.mxu0 0.0
    %458 = vmatpush1.msra.mxu0 0.0
    %459 = vmatprep.subr.mxu0 0.0
    %460 = vmatpush1.msra.mxu0 0.0
    %461 = vmatprep.subr.mxu0 0.0
    %462 = vmatpush1.msra.mxu0 0.0
    %463 = vmatprep.subr.mxu0 0.0
    %464 = vmatpush1.msra.mxu0 0.0
    %465 = vmatprep.subr.mxu0 0.0
    %466 = vmatpush1.msra.mxu0 0.0
    %467 = vmatprep.subr.mxu0 0.0
    %468 = vmatpush1.msra.mxu0 0.0
    %469 = vmatprep.subr.mxu0 0.0
    %470 = vmatpush1.msra.mxu0 0.0
    %471 = vmatprep.subr.mxu0 0.0
    %472 = vmatpush1.msra.mxu0 0.0
    %473 = vmatprep.subr.mxu0 0.0
    %474 = vmatpush1.msra.mxu0 0.0
    %475 = vmatprep.subr.mxu0 0.0
    %476 = vmatpush1.msra.mxu0 0.0
    %477 = vmatprep.subr.mxu0 0.0
    %478 = vmatpush1.msra.mxu0 0.0
    %479 = vmatprep.subr.mxu0 0.0
    %480 = vmatpush1.msra.mxu0 0.0
    %481 = vmatprep.subr.mxu0 0.0
    %482 = vmatpush1.msra.mxu0 0.0
    %483 = vmatprep.subr.mxu0 0.0
    %484 = vmatpush1.msra.mxu0 0.0
    %485 = vmatprep.subr.mxu0 0.0
    %486 = vmatpush1.msra.mxu0 0.0
    %487 = vmatprep.subr.mxu0 0.0
    %488 = vmatpush1.msra.mxu0 0.0
    %489 = vmatprep.subr.mxu0 0.0
    %490 = vmatpush1.msra.mxu0 0.0
    %491 = vmatprep.subr.mxu0 0.0
    %492 = vmatpush1.msra.mxu0 0.0
    %493 = vmatprep.subr.mxu0 0.0
    %494 = vmatpush1.msra.mxu0 0.0
    %495 = vmatprep.subr.mxu0 0.0
    %496 = vmatpush1.msra.mxu0 0.0
    %497 = vmatprep.subr.mxu0 0.0
    %498 = vmatpush1.msra.mxu0 0.0
    %499 = vmatprep.subr.mxu0 0.0
    %500 = vmatpush1.msra.mxu0 0.0
    %501 = vmatprep.subr.mxu0 0.0
    %502 = vmatpush1.msra.mxu0 0.0
    %503 = vmatprep.subr.mxu0 0.0
    %504 = vmatpush1.msra.mxu0 0.0
    %505 = vmatprep.mubr.f32.mxu0 0.0
    %506 = vmatmul.mubr.f32.gmra.mrb[0].mxu0 %v430
    %v507 = vpop.f32.mrb[0].mxu0
    %v508 = vadd.f32 %v427, %v507
    %v509 = vpop.f32.mrb[0].mxu0
    %510 = vmatprep.mubr.f32.mxu0 0.0
    %511 = vmatmul.mubr.f32.gmra.mrb[0].mxu0 %v433
    %v512 = vpop.f32.mrb[0].mxu0
    %v513 = vadd.f32 %v427, %v512
    %v514 = vpop.f32.mrb[0].mxu0
    %515 = vmatprep.mubr.f32.mxu0 0.0
    %516 = vmatmul.mubr.f32.gmra.mrb[0].mxu0 %v436
    %v517 = vpop.f32.mrb[0].mxu0
    %v518 = vadd.f32 %v427, %v517
    %v519 = vpop.f32.mrb[0].mxu0
    %520 = vmatprep.mubr.f32.mxu0 0.0
    %521 = vmatmul.mubr.f32.gmra.mrb[0].mxu0 %v439
    %v522 = vpop.f32.mrb[0].mxu0
    %v523 = vadd.f32 %v427, %v522
    %v524 = vpop.f32.mrb[0].mxu0
    %525 = vdwg.mxu0
    %528 = vrot.lane.b32.xlu0 %v302, 120
    %v529 = vpop.permute.xlu0 %528
    %530 = vrot.lane.b32.xlu0 %v307, 120
    %v531 = vpop.permute.xlu0 %530
    %534 = vrot.lane.b32.xlu0 %v302, 112
    %v535 = vpop.permute.xlu0 %534
    %536 = vrot.lane.b32.xlu0 %v307, 112
    %v537 = vpop.permute.xlu0 %536
    %540 = vrot.lane.b32.xlu0 %v302, 104
    %v541 = vpop.permute.xlu0 %540
    %542 = vrot.lane.b32.xlu0 %v307, 104
    %v543 = vpop.permute.xlu0 %542
    %v546 = vcombine.low %v302, %v535
    %v547 = vcombine.high %v302, %v535
    %v549 = vunpack.c.l.s4 1983009808
    %v550 = vunpack.c.0.s8 %v549
    %v551 = vlaneseq
    %v552 = vshrl.u32 %v551, 7
    %v553 = vsub.s32 %v550, %v552
    %v554 = vrot.slane %v546, %v553
    %v556 = vunpack.c.l.s4 1983009808
    %v557 = vunpack.c.0.s8 %v556
    %v558 = vlaneseq
    %v559 = vshrl.u32 %v558, 7
    %v560 = vsub.s32 %v557, %v559
    %v561 = vrot.slane %v547, %v560
    %v562 = vcombine.low %v529, %v541
    %v563 = vcombine.high %v529, %v541
    %v565 = vunpack.c.l.s4 1983009808
    %v566 = vunpack.c.0.s8 %v565
    %v567 = vlaneseq
    %v568 = vshrl.u32 %v567, 7
    %v569 = vsub.s32 %v566, %v568
    %v570 = vrot.slane %v562, %v569
    %v572 = vunpack.c.l.s4 1983009808
    %v573 = vunpack.c.0.s8 %v572
    %v574 = vlaneseq
    %v575 = vshrl.u32 %v574, 7
    %v576 = vsub.s32 %v573, %v575
    %v577 = vrot.slane %v563, %v576
    %v578 = vcombine.low %v554, %v570
    %v579 = vcombine.high %v554, %v570
    %v581 = vunpack.c.l.s4 1934713408
    %v582 = vunpack.c.0.s8 %v581
    %v583 = vlaneseq
    %v584 = vshrl.u32 %v583, 7
    %v585 = vsub.s32 %v582, %v584
    %v586 = vrot.slane %v578, %v585
    %v588 = vunpack.c.l.s4 1934713408
    %v589 = vunpack.c.0.s8 %v588
    %v590 = vlaneseq
    %v591 = vshrl.u32 %v590, 7
    %v592 = vsub.s32 %v589, %v591
    %v593 = vrot.slane %v579, %v592
    %v594 = vcombine.low %v561, %v577
    %v595 = vcombine.high %v561, %v577
    %v597 = vunpack.c.l.s4 1934713408
    %v598 = vunpack.c.0.s8 %v597
    %v599 = vlaneseq
    %v600 = vshrl.u32 %v599, 7
    %v601 = vsub.s32 %v598, %v600
    %v602 = vrot.slane %v594, %v601
    %v604 = vunpack.c.l.s4 1934713408
    %v605 = vunpack.c.0.s8 %v604
    %v606 = vlaneseq
    %v607 = vshrl.u32 %v606, 7
    %v608 = vsub.s32 %v605, %v607
    %v609 = vrot.slane %v595, %v608
    %v610 = vcombine.high %v586, 0.0
    %v611 = vcombine.high %v593, 0.0
    %v612 = vcombine.high %v602, 0.0
    %v613 = vcombine.high %v609, 0.0
    %v614 = vcombine.low %v307, %v537
    %v615 = vcombine.high %v307, %v537
    %v617 = vunpack.c.l.s4 1983009808
    %v618 = vunpack.c.0.s8 %v617
    %v619 = vlaneseq
    %v620 = vshrl.u32 %v619, 7
    %v621 = vsub.s32 %v618, %v620
    %v622 = vrot.slane %v614, %v621
    %v624 = vunpack.c.l.s4 1983009808
    %v625 = vunpack.c.0.s8 %v624
    %v626 = vlaneseq
    %v627 = vshrl.u32 %v626, 7
    %v628 = vsub.s32 %v625, %v627
    %v629 = vrot.slane %v615, %v628
    %v630 = vcombine.low %v531, %v543
    %v631 = vcombine.high %v531, %v543
    %v633 = vunpack.c.l.s4 1983009808
    %v634 = vunpack.c.0.s8 %v633
    %v635 = vlaneseq
    %v636 = vshrl.u32 %v635, 7
    %v637 = vsub.s32 %v634, %v636
    %v638 = vrot.slane %v630, %v637
    %v640 = vunpack.c.l.s4 1983009808
    %v641 = vunpack.c.0.s8 %v640
    %v642 = vlaneseq
    %v643 = vshrl.u32 %v642, 7
    %v644 = vsub.s32 %v641, %v643
    %v645 = vrot.slane %v631, %v644
    %v646 = vcombine.low %v622, %v638
    %v647 = vcombine.high %v622, %v638
    %v649 = vunpack.c.l.s4 1934713408
    %v650 = vunpack.c.0.s8 %v649
    %v651 = vlaneseq
    %v652 = vshrl.u32 %v651, 7
    %v653 = vsub.s32 %v650, %v652
    %v654 = vrot.slane %v646, %v653
    %v656 = vunpack.c.l.s4 1934713408
    %v657 = vunpack.c.0.s8 %v656
    %v658 = vlaneseq
    %v659 = vshrl.u32 %v658, 7
    %v660 = vsub.s32 %v657, %v659
    %v661 = vrot.slane %v647, %v660
    %v662 = vcombine.low %v629, %v645
    %v663 = vcombine.high %v629, %v645
    %v665 = vunpack.c.l.s4 1934713408
    %v666 = vunpack.c.0.s8 %v665
    %v667 = vlaneseq
    %v668 = vshrl.u32 %v667, 7
    %v669 = vsub.s32 %v666, %v668
    %v670 = vrot.slane %v662, %v669
    %v672 = vunpack.c.l.s4 1934713408
    %v673 = vunpack.c.0.s8 %v672
    %v674 = vlaneseq
    %v675 = vshrl.u32 %v674, 7
    %v676 = vsub.s32 %v673, %v675
    %v677 = vrot.slane %v663, %v676
    %v678 = vcombine.high %v654, 0.0
    %v679 = vcombine.high %v661, 0.0
    %v680 = vcombine.high %v670, 0.0
    %v681 = vcombine.high %v677, 0.0
    %v682 = vcombine.low %v586, %v602
    %v684 = vunpack.c.l.s4 1983009808
    %v685 = vunpack.c.0.s8 %v684
    %v686 = vlaneseq
    %v687 = vshrl.u32 %v686, 7
    %v688 = vsub.s32 %v685, %v687
    %v689 = vrot.slane %v682, %v688
    %v690 = vcombine.low %v593, %v609
    %v692 = vunpack.c.l.s4 1983009808
    %v693 = vunpack.c.0.s8 %v692
    %v694 = vlaneseq
    %v695 = vshrl.u32 %v694, 7
    %v696 = vsub.s32 %v693, %v695
    %v697 = vrot.slane %v690, %v696
    %v698 = vcombine.low %v654, %v670
    %v700 = vunpack.c.l.s4 1983009808
    %v701 = vunpack.c.0.s8 %v700
    %v702 = vlaneseq
    %v703 = vshrl.u32 %v702, 7
    %v704 = vsub.s32 %v701, %v703
    %v705 = vrot.slane %v698, %v704
    %v706 = vcombine.low %v661, %v677
    %v708 = vunpack.c.l.s4 1983009808
    %v709 = vunpack.c.0.s8 %v708
    %v710 = vlaneseq
    %v711 = vshrl.u32 %v710, 7
    %v712 = vsub.s32 %v709, %v711
    %v713 = vrot.slane %v706, %v712
    %v714 = vcombine.low %v689, %v697
    %v715 = vcombine.high %v689, %v697
    %v717 = vunpack.c.l.s4 1934713408
    %v718 = vunpack.c.0.s8 %v717
    %v719 = vlaneseq
    %v720 = vshrl.u32 %v719, 7
    %v721 = vsub.s32 %v718, %v720
    %v722 = vrot.slane %v714, %v721
    %v724 = vunpack.c.l.s4 1934713408
    %v725 = vunpack.c.0.s8 %v724
    %v726 = vlaneseq
    %v727 = vshrl.u32 %v726, 7
    %v728 = vsub.s32 %v725, %v727
    %v729 = vrot.slane %v715, %v728
    %v730 = vcombine.low %v705, %v713
    %v731 = vcombine.high %v705, %v713
    %v733 = vunpack.c.l.s4 1934713408
    %v734 = vunpack.c.0.s8 %v733
    %v735 = vlaneseq
    %v736 = vshrl.u32 %v735, 7
    %v737 = vsub.s32 %v734, %v736
    %v738 = vrot.slane %v730, %v737
    %v740 = vunpack.c.l.s4 1934713408
    %v741 = vunpack.c.0.s8 %v740
    %v742 = vlaneseq
    %v743 = vshrl.u32 %v742, 7
    %v744 = vsub.s32 %v741, %v743
    %v745 = vrot.slane %v731, %v744
    %v746 = vcombine.low %v722, %v738
    %v747 = vcombine.high %v722, %v738
    %v748 = vcombine.low %v729, %v745
    %v749 = vcombine.high %v729, %v745
    %v750 = vcombine.low %v610, %v612
    %v752 = vunpack.c.l.s4 1983009808
    %v753 = vunpack.c.0.s8 %v752
    %v754 = vlaneseq
    %v755 = vshrl.u32 %v754, 7
    %v756 = vsub.s32 %v753, %v755
    %v757 = vrot.slane %v750, %v756
    %v758 = vcombine.low %v611, %v613
    %v760 = vunpack.c.l.s4 1983009808
    %v761 = vunpack.c.0.s8 %v760
    %v762 = vlaneseq
    %v763 = vshrl.u32 %v762, 7
    %v764 = vsub.s32 %v761, %v763
    %v765 = vrot.slane %v758, %v764
    %v766 = vcombine.low %v678, %v680
    %v768 = vunpack.c.l.s4 1983009808
    %v769 = vunpack.c.0.s8 %v768
    %v770 = vlaneseq
    %v771 = vshrl.u32 %v770, 7
    %v772 = vsub.s32 %v769, %v771
    %v773 = vrot.slane %v766, %v772
    %v774 = vcombine.low %v679, %v681
    %v776 = vunpack.c.l.s4 1983009808
    %v777 = vunpack.c.0.s8 %v776
    %v778 = vlaneseq
    %v779 = vshrl.u32 %v778, 7
    %v780 = vsub.s32 %v777, %v779
    %v781 = vrot.slane %v774, %v780
    %v782 = vcombine.low %v757, %v765
    %v783 = vcombine.high %v757, %v765
    %v785 = vunpack.c.l.s4 1934713408
    %v786 = vunpack.c.0.s8 %v785
    %v787 = vlaneseq
    %v788 = vshrl.u32 %v787, 7
    %v789 = vsub.s32 %v786, %v788
    %v790 = vrot.slane %v782, %v789
    %v792 = vunpack.c.l.s4 1934713408
    %v793 = vunpack.c.0.s8 %v792
    %v794 = vlaneseq
    %v795 = vshrl.u32 %v794, 7
    %v796 = vsub.s32 %v793, %v795
    %v797 = vrot.slane %v783, %v796
    %v798 = vcombine.low %v773, %v781
    %v799 = vcombine.high %v773, %v781
    %v801 = vunpack.c.l.s4 1934713408
    %v802 = vunpack.c.0.s8 %v801
    %v803 = vlaneseq
    %v804 = vshrl.u32 %v803, 7
    %v805 = vsub.s32 %v802, %v804
    %v806 = vrot.slane %v798, %v805
    %v808 = vunpack.c.l.s4 1934713408
    %v809 = vunpack.c.0.s8 %v808
    %v810 = vlaneseq
    %v811 = vshrl.u32 %v810, 7
    %v812 = vsub.s32 %v809, %v811
    %v813 = vrot.slane %v799, %v812
    %v814 = vcombine.low %v790, %v806
    %v815 = vcombine.high %v790, %v806
    %v816 = vcombine.low %v797, %v813
    %v817 = vcombine.high %v797, %v813
    %822 = vrot.lane.b32.xlu0 %v400, 120
    %v823 = vpop.permute.xlu0 %822
    %824 = vrot.lane.b32.xlu0 %v405, 120
    %v825 = vpop.permute.xlu0 %824
    %826 = vrot.lane.b32.xlu0 %v410, 120
    %v827 = vpop.permute.xlu0 %826
    %828 = vrot.lane.b32.xlu0 %v415, 120
    %v829 = vpop.permute.xlu0 %828
    %834 = vrot.lane.b32.xlu0 %v400, 112
    %v835 = vpop.permute.xlu0 %834
    %836 = vrot.lane.b32.xlu0 %v405, 112
    %v837 = vpop.permute.xlu0 %836
    %838 = vrot.lane.b32.xlu0 %v410, 112
    %v839 = vpop.permute.xlu0 %838
    %840 = vrot.lane.b32.xlu0 %v415, 112
    %v841 = vpop.permute.xlu0 %840
    %846 = vrot.lane.b32.xlu0 %v400, 104
    %v847 = vpop.permute.xlu0 %846
    %848 = vrot.lane.b32.xlu0 %v405, 104
    %v849 = vpop.permute.xlu0 %848
    %850 = vrot.lane.b32.xlu0 %v410, 104
    %v851 = vpop.permute.xlu0 %850
    %852 = vrot.lane.b32.xlu0 %v415, 104
    %v853 = vpop.permute.xlu0 %852
    %v858 = vcombine.low %v400, %v835
    %v859 = vcombine.high %v400, %v835
    %v861 = vunpack.c.l.s4 1983009808
    %v862 = vunpack.c.0.s8 %v861
    %v863 = vlaneseq
    %v864 = vshrl.u32 %v863, 7
    %v865 = vsub.s32 %v862, %v864
    %v866 = vrot.slane %v858, %v865
    %v868 = vunpack.c.l.s4 1983009808
    %v869 = vunpack.c.0.s8 %v868
    %v870 = vlaneseq
    %v871 = vshrl.u32 %v870, 7
    %v872 = vsub.s32 %v869, %v871
    %v873 = vrot.slane %v859, %v872
    %v874 = vcombine.low %v823, %v847
    %v875 = vcombine.high %v823, %v847
    %v877 = vunpack.c.l.s4 1983009808
    %v878 = vunpack.c.0.s8 %v877
    %v879 = vlaneseq
    %v880 = vshrl.u32 %v879, 7
    %v881 = vsub.s32 %v878, %v880
    %v882 = vrot.slane %v874, %v881
    %v884 = vunpack.c.l.s4 1983009808
    %v885 = vunpack.c.0.s8 %v884
    %v886 = vlaneseq
    %v887 = vshrl.u32 %v886, 7
    %v888 = vsub.s32 %v885, %v887
    %v889 = vrot.slane %v875, %v888
    %v890 = vcombine.low %v866, %v882
    %v891 = vcombine.high %v866, %v882
    %v893 = vunpack.c.l.s4 1934713408
    %v894 = vunpack.c.0.s8 %v893
    %v895 = vlaneseq
    %v896 = vshrl.u32 %v895, 7
    %v897 = vsub.s32 %v894, %v896
    %v898 = vrot.slane %v890, %v897
    %v900 = vunpack.c.l.s4 1934713408
    %v901 = vunpack.c.0.s8 %v900
    %v902 = vlaneseq
    %v903 = vshrl.u32 %v902, 7
    %v904 = vsub.s32 %v901, %v903
    %v905 = vrot.slane %v891, %v904
    %v906 = vcombine.low %v873, %v889
    %v907 = vcombine.high %v873, %v889
    %v909 = vunpack.c.l.s4 1934713408
    %v910 = vunpack.c.0.s8 %v909
    %v911 = vlaneseq
    %v912 = vshrl.u32 %v911, 7
    %v913 = vsub.s32 %v910, %v912
    %v914 = vrot.slane %v906, %v913
    %v916 = vunpack.c.l.s4 1934713408
    %v917 = vunpack.c.0.s8 %v916
    %v918 = vlaneseq
    %v919 = vshrl.u32 %v918, 7
    %v920 = vsub.s32 %v917, %v919
    %v921 = vrot.slane %v907, %v920
    %v922 = vcombine.high %v898, 0.0
    %v923 = vcombine.high %v905, 0.0
    %v924 = vcombine.high %v914, 0.0
    %v925 = vcombine.high %v921, 0.0
    %v926 = vcombine.low %v405, %v837
    %v927 = vcombine.high %v405, %v837
    %v929 = vunpack.c.l.s4 1983009808
    %v930 = vunpack.c.0.s8 %v929
    %v931 = vlaneseq
    %v932 = vshrl.u32 %v931, 7
    %v933 = vsub.s32 %v930, %v932
    %v934 = vrot.slane %v926, %v933
    %v936 = vunpack.c.l.s4 1983009808
    %v937 = vunpack.c.0.s8 %v936
    %v938 = vlaneseq
    %v939 = vshrl.u32 %v938, 7
    %v940 = vsub.s32 %v937, %v939
    %v941 = vrot.slane %v927, %v940
    %v942 = vcombine.low %v825, %v849
    %v943 = vcombine.high %v825, %v849
    %v945 = vunpack.c.l.s4 1983009808
    %v946 = vunpack.c.0.s8 %v945
    %v947 = vlaneseq
    %v948 = vshrl.u32 %v947, 7
    %v949 = vsub.s32 %v946, %v948
    %v950 = vrot.slane %v942, %v949
    %v952 = vunpack.c.l.s4 1983009808
    %v953 = vunpack.c.0.s8 %v952
    %v954 = vlaneseq
    %v955 = vshrl.u32 %v954, 7
    %v956 = vsub.s32 %v953, %v955
    %v957 = vrot.slane %v943, %v956
    %v958 = vcombine.low %v934, %v950
    %v959 = vcombine.high %v934, %v950
    %v961 = vunpack.c.l.s4 1934713408
    %v962 = vunpack.c.0.s8 %v961
    %v963 = vlaneseq
    %v964 = vshrl.u32 %v963, 7
    %v965 = vsub.s32 %v962, %v964
    %v966 = vrot.slane %v958, %v965
    %v968 = vunpack.c.l.s4 1934713408
    %v969 = vunpack.c.0.s8 %v968
    %v970 = vlaneseq
    %v971 = vshrl.u32 %v970, 7
    %v972 = vsub.s32 %v969, %v971
    %v973 = vrot.slane %v959, %v972
    %v974 = vcombine.low %v941, %v957
    %v975 = vcombine.high %v941, %v957
    %v977 = vunpack.c.l.s4 1934713408
    %v978 = vunpack.c.0.s8 %v977
    %v979 = vlaneseq
    %v980 = vshrl.u32 %v979, 7
    %v981 = vsub.s32 %v978, %v980
    %v982 = vrot.slane %v974, %v981
    %v984 = vunpack.c.l.s4 1934713408
    %v985 = vunpack.c.0.s8 %v984
    %v986 = vlaneseq
    %v987 = vshrl.u32 %v986, 7
    %v988 = vsub.s32 %v985, %v987
    %v989 = vrot.slane %v975, %v988
    %v990 = vcombine.high %v966, 0.0
    %v991 = vcombine.high %v973, 0.0
    %v992 = vcombine.high %v982, 0.0
    %v993 = vcombine.high %v989, 0.0
    %v994 = vcombine.low %v410, %v839
    %v995 = vcombine.high %v410, %v839
    %v997 = vunpack.c.l.s4 1983009808
    %v998 = vunpack.c.0.s8 %v997
    %v999 = vlaneseq
    %v1000 = vshrl.u32 %v999, 7
    %v1001 = vsub.s32 %v998, %v1000
    %v1002 = vrot.slane %v994, %v1001
    %v1004 = vunpack.c.l.s4 1983009808
    %v1005 = vunpack.c.0.s8 %v1004
    %v1006 = vlaneseq
    %v1007 = vshrl.u32 %v1006, 7
    %v1008 = vsub.s32 %v1005, %v1007
    %v1009 = vrot.slane %v995, %v1008
    %v1010 = vcombine.low %v827, %v851
    %v1011 = vcombine.high %v827, %v851
    %v1013 = vunpack.c.l.s4 1983009808
    %v1014 = vunpack.c.0.s8 %v1013
    %v1015 = vlaneseq
    %v1016 = vshrl.u32 %v1015, 7
    %v1017 = vsub.s32 %v1014, %v1016
    %v1018 = vrot.slane %v1010, %v1017
    %v1020 = vunpack.c.l.s4 1983009808
    %v1021 = vunpack.c.0.s8 %v1020
    %v1022 = vlaneseq
    %v1023 = vshrl.u32 %v1022, 7
    %v1024 = vsub.s32 %v1021, %v1023
    %v1025 = vrot.slane %v1011, %v1024
    %v1026 = vcombine.low %v1002, %v1018
    %v1027 = vcombine.high %v1002, %v1018
    %v1029 = vunpack.c.l.s4 1934713408
    %v1030 = vunpack.c.0.s8 %v1029
    %v1031 = vlaneseq
    %v1032 = vshrl.u32 %v1031, 7
    %v1033 = vsub.s32 %v1030, %v1032
    %v1034 = vrot.slane %v1026, %v1033
    %v1036 = vunpack.c.l.s4 1934713408
    %v1037 = vunpack.c.0.s8 %v1036
    %v1038 = vlaneseq
    %v1039 = vshrl.u32 %v1038, 7
    %v1040 = vsub.s32 %v1037, %v1039
    %v1041 = vrot.slane %v1027, %v1040
    %v1042 = vcombine.low %v1009, %v1025
    %v1043 = vcombine.high %v1009, %v1025
    %v1045 = vunpack.c.l.s4 1934713408
    %v1046 = vunpack.c.0.s8 %v1045
    %v1047 = vlaneseq
    %v1048 = vshrl.u32 %v1047, 7
    %v1049 = vsub.s32 %v1046, %v1048
    %v1050 = vrot.slane %v1042, %v1049
    %v1052 = vunpack.c.l.s4 1934713408
    %v1053 = vunpack.c.0.s8 %v1052
    %v1054 = vlaneseq
    %v1055 = vshrl.u32 %v1054, 7
    %v1056 = vsub.s32 %v1053, %v1055
    %v1057 = vrot.slane %v1043, %v1056
    %v1058 = vcombine.high %v1034, 0.0
    %v1059 = vcombine.high %v1041, 0.0
    %v1060 = vcombine.high %v1050, 0.0
    %v1061 = vcombine.high %v1057, 0.0
    %v1062 = vcombine.low %v415, %v841
    %v1063 = vcombine.high %v415, %v841
    %v1065 = vunpack.c.l.s4 1983009808
    %v1066 = vunpack.c.0.s8 %v1065
    %v1067 = vlaneseq
    %v1068 = vshrl.u32 %v1067, 7
    %v1069 = vsub.s32 %v1066, %v1068
    %v1070 = vrot.slane %v1062, %v1069
    %v1072 = vunpack.c.l.s4 1983009808
    %v1073 = vunpack.c.0.s8 %v1072
    %v1074 = vlaneseq
    %v1075 = vshrl.u32 %v1074, 7
    %v1076 = vsub.s32 %v1073, %v1075
    %v1077 = vrot.slane %v1063, %v1076
    %v1078 = vcombine.low %v829, %v853
    %v1079 = vcombine.high %v829, %v853
    %v1081 = vunpack.c.l.s4 1983009808
    %v1082 = vunpack.c.0.s8 %v1081
    %v1083 = vlaneseq
    %v1084 = vshrl.u32 %v1083, 7
    %v1085 = vsub.s32 %v1082, %v1084
    %v1086 = vrot.slane %v1078, %v1085
    %v1088 = vunpack.c.l.s4 1983009808
    %v1089 = vunpack.c.0.s8 %v1088
    %v1090 = vlaneseq
    %v1091 = vshrl.u32 %v1090, 7
    %v1092 = vsub.s32 %v1089, %v1091
    %v1093 = vrot.slane %v1079, %v1092
    %v1094 = vcombine.low %v1070, %v1086
    %v1095 = vcombine.high %v1070, %v1086
    %v1097 = vunpack.c.l.s4 1934713408
    %v1098 = vunpack.c.0.s8 %v1097
    %v1099 = vlaneseq
    %v1100 = vshrl.u32 %v1099, 7
    %v1101 = vsub.s32 %v1098, %v1100
    %v1102 = vrot.slane %v1094, %v1101
    %v1104 = vunpack.c.l.s4 1934713408
    %v1105 = vunpack.c.0.s8 %v1104
    %v1106 = vlaneseq
    %v1107 = vshrl.u32 %v1106, 7
    %v1108 = vsub.s32 %v1105, %v1107
    %v1109 = vrot.slane %v1095, %v1108
    %v1110 = vcombine.low %v1077, %v1093
    %v1111 = vcombine.high %v1077, %v1093
    %v1113 = vunpack.c.l.s4 1934713408
    %v1114 = vunpack.c.0.s8 %v1113
    %v1115 = vlaneseq
    %v1116 = vshrl.u32 %v1115, 7
    %v1117 = vsub.s32 %v1114, %v1116
    %v1118 = vrot.slane %v1110, %v1117
    %v1120 = vunpack.c.l.s4 1934713408
    %v1121 = vunpack.c.0.s8 %v1120
    %v1122 = vlaneseq
    %v1123 = vshrl.u32 %v1122, 7
    %v1124 = vsub.s32 %v1121, %v1123
    %v1125 = vrot.slane %v1111, %v1124
    %v1126 = vcombine.high %v1102, 0.0
    %v1127 = vcombine.high %v1109, 0.0
    %v1128 = vcombine.high %v1118, 0.0
    %v1129 = vcombine.high %v1125, 0.0
    %v1130 = vcombine.low %v898, %v914
    %v1132 = vunpack.c.l.s4 1983009808
    %v1133 = vunpack.c.0.s8 %v1132
    %v1134 = vlaneseq
    %v1135 = vshrl.u32 %v1134, 7
    %v1136 = vsub.s32 %v1133, %v1135
    %v1137 = vrot.slane %v1130, %v1136
    %v1138 = vcombine.low %v905, %v921
    %v1140 = vunpack.c.l.s4 1983009808
    %v1141 = vunpack.c.0.s8 %v1140
    %v1142 = vlaneseq
    %v1143 = vshrl.u32 %v1142, 7
    %v1144 = vsub.s32 %v1141, %v1143
    %v1145 = vrot.slane %v1138, %v1144
    %v1146 = vcombine.low %v966, %v982
    %v1148 = vunpack.c.l.s4 1983009808
    %v1149 = vunpack.c.0.s8 %v1148
    %v1150 = vlaneseq
    %v1151 = vshrl.u32 %v1150, 7
    %v1152 = vsub.s32 %v1149, %v1151
    %v1153 = vrot.slane %v1146, %v1152
    %v1154 = vcombine.low %v973, %v989
    %v1156 = vunpack.c.l.s4 1983009808
    %v1157 = vunpack.c.0.s8 %v1156
    %v1158 = vlaneseq
    %v1159 = vshrl.u32 %v1158, 7
    %v1160 = vsub.s32 %v1157, %v1159
    %v1161 = vrot.slane %v1154, %v1160
    %v1162 = vcombine.low %v1137, %v1145
    %v1163 = vcombine.high %v1137, %v1145
    %v1165 = vunpack.c.l.s4 1934713408
    %v1166 = vunpack.c.0.s8 %v1165
    %v1167 = vlaneseq
    %v1168 = vshrl.u32 %v1167, 7
    %v1169 = vsub.s32 %v1166, %v1168
    %v1170 = vrot.slane %v1162, %v1169
    %v1172 = vunpack.c.l.s4 1934713408
    %v1173 = vunpack.c.0.s8 %v1172
    %v1174 = vlaneseq
    %v1175 = vshrl.u32 %v1174, 7
    %v1176 = vsub.s32 %v1173, %v1175
    %v1177 = vrot.slane %v1163, %v1176
    %v1178 = vcombine.low %v1153, %v1161
    %v1179 = vcombine.high %v1153, %v1161
    %v1181 = vunpack.c.l.s4 1934713408
    %v1182 = vunpack.c.0.s8 %v1181
    %v1183 = vlaneseq
    %v1184 = vshrl.u32 %v1183, 7
    %v1185 = vsub.s32 %v1182, %v1184
    %v1186 = vrot.slane %v1178, %v1185
    %v1188 = vunpack.c.l.s4 1934713408
    %v1189 = vunpack.c.0.s8 %v1188
    %v1190 = vlaneseq
    %v1191 = vshrl.u32 %v1190, 7
    %v1192 = vsub.s32 %v1189, %v1191
    %v1193 = vrot.slane %v1179, %v1192
    %v1194 = vcombine.low %v1170, %v1186
    %v1195 = vcombine.high %v1170, %v1186
    %v1196 = vcombine.low %v1177, %v1193
    %v1197 = vcombine.high %v1177, %v1193
    %v1198 = vcombine.low %v1034, %v1050
    %v1200 = vunpack.c.l.s4 1983009808
    %v1201 = vunpack.c.0.s8 %v1200
    %v1202 = vlaneseq
    %v1203 = vshrl.u32 %v1202, 7
    %v1204 = vsub.s32 %v1201, %v1203
    %v1205 = vrot.slane %v1198, %v1204
    %v1206 = vcombine.low %v1041, %v1057
    %v1208 = vunpack.c.l.s4 1983009808
    %v1209 = vunpack.c.0.s8 %v1208
    %v1210 = vlaneseq
    %v1211 = vshrl.u32 %v1210, 7
    %v1212 = vsub.s32 %v1209, %v1211
    %v1213 = vrot.slane %v1206, %v1212
    %v1214 = vcombine.low %v1102, %v1118
    %v1216 = vunpack.c.l.s4 1983009808
    %v1217 = vunpack.c.0.s8 %v1216
    %v1218 = vlaneseq
    %v1219 = vshrl.u32 %v1218, 7
    %v1220 = vsub.s32 %v1217, %v1219
    %v1221 = vrot.slane %v1214, %v1220
    %v1222 = vcombine.low %v1109, %v1125
    %v1224 = vunpack.c.l.s4 1983009808
    %v1225 = vunpack.c.0.s8 %v1224
    %v1226 = vlaneseq
    %v1227 = vshrl.u32 %v1226, 7
    %v1228 = vsub.s32 %v1225, %v1227
    %v1229 = vrot.slane %v1222, %v1228
    %v1230 = vcombine.low %v1205, %v1213
    %v1231 = vcombine.high %v1205, %v1213
    %v1233 = vunpack.c.l.s4 1934713408
    %v1234 = vunpack.c.0.s8 %v1233
    %v1235 = vlaneseq
    %v1236 = vshrl.u32 %v1235, 7
    %v1237 = vsub.s32 %v1234, %v1236
    %v1238 = vrot.slane %v1230, %v1237
    %v1240 = vunpack.c.l.s4 1934713408
    %v1241 = vunpack.c.0.s8 %v1240
    %v1242 = vlaneseq
    %v1243 = vshrl.u32 %v1242, 7
    %v1244 = vsub.s32 %v1241, %v1243
    %v1245 = vrot.slane %v1231, %v1244
    %v1246 = vcombine.low %v1221, %v1229
    %v1247 = vcombine.high %v1221, %v1229
    %v1249 = vunpack.c.l.s4 1934713408
    %v1250 = vunpack.c.0.s8 %v1249
    %v1251 = vlaneseq
    %v1252 = vshrl.u32 %v1251, 7
    %v1253 = vsub.s32 %v1250, %v1252
    %v1254 = vrot.slane %v1246, %v1253
    %v1256 = vunpack.c.l.s4 1934713408
    %v1257 = vunpack.c.0.s8 %v1256
    %v1258 = vlaneseq
    %v1259 = vshrl.u32 %v1258, 7
    %v1260 = vsub.s32 %v1257, %v1259
    %v1261 = vrot.slane %v1247, %v1260
    %v1262 = vcombine.low %v1238, %v1254
    %v1263 = vcombine.high %v1238, %v1254
    %v1264 = vcombine.low %v1245, %v1261
    %v1265 = vcombine.high %v1245, %v1261
    %v1266 = vcombine.low %v922, %v924
    %v1268 = vunpack.c.l.s4 1983009808
    %v1269 = vunpack.c.0.s8 %v1268
    %v1270 = vlaneseq
    %v1271 = vshrl.u32 %v1270, 7
    %v1272 = vsub.s32 %v1269, %v1271
    %v1273 = vrot.slane %v1266, %v1272
    %v1274 = vcombine.low %v923, %v925
    %v1276 = vunpack.c.l.s4 1983009808
    %v1277 = vunpack.c.0.s8 %v1276
    %v1278 = vlaneseq
    %v1279 = vshrl.u32 %v1278, 7
    %v1280 = vsub.s32 %v1277, %v1279
    %v1281 = vrot.slane %v1274, %v1280
    %v1282 = vcombine.low %v990, %v992
    %v1284 = vunpack.c.l.s4 1983009808
    %v1285 = vunpack.c.0.s8 %v1284
    %v1286 = vlaneseq
    %v1287 = vshrl.u32 %v1286, 7
    %v1288 = vsub.s32 %v1285, %v1287
    %v1289 = vrot.slane %v1282, %v1288
    %v1290 = vcombine.low %v991, %v993
    %v1292 = vunpack.c.l.s4 1983009808
    %v1293 = vunpack.c.0.s8 %v1292
    %v1294 = vlaneseq
    %v1295 = vshrl.u32 %v1294, 7
    %v1296 = vsub.s32 %v1293, %v1295
    %v1297 = vrot.slane %v1290, %v1296
    %v1298 = vcombine.low %v1273, %v1281
    %v1299 = vcombine.high %v1273, %v1281
    %v1301 = vunpack.c.l.s4 1934713408
    %v1302 = vunpack.c.0.s8 %v1301
    %v1303 = vlaneseq
    %v1304 = vshrl.u32 %v1303, 7
    %v1305 = vsub.s32 %v1302, %v1304
    %v1306 = vrot.slane %v1298, %v1305
    %v1308 = vunpack.c.l.s4 1934713408
    %v1309 = vunpack.c.0.s8 %v1308
    %v1310 = vlaneseq
    %v1311 = vshrl.u32 %v1310, 7
    %v1312 = vsub.s32 %v1309, %v1311
    %v1313 = vrot.slane %v1299, %v1312
    %v1314 = vcombine.low %v1289, %v1297
    %v1315 = vcombine.high %v1289, %v1297
    %v1317 = vunpack.c.l.s4 1934713408
    %v1318 = vunpack.c.0.s8 %v1317
    %v1319 = vlaneseq
    %v1320 = vshrl.u32 %v1319, 7
    %v1321 = vsub.s32 %v1318, %v1320
    %v1322 = vrot.slane %v1314, %v1321
    %v1324 = vunpack.c.l.s4 1934713408
    %v1325 = vunpack.c.0.s8 %v1324
    %v1326 = vlaneseq
    %v1327 = vshrl.u32 %v1326, 7
    %v1328 = vsub.s32 %v1325, %v1327
    %v1329 = vrot.slane %v1315, %v1328
    %v1330 = vcombine.low %v1306, %v1322
    %v1331 = vcombine.high %v1306, %v1322
    %v1332 = vcombine.low %v1313, %v1329
    %v1333 = vcombine.high %v1313, %v1329
    %v1334 = vcombine.low %v1058, %v1060
    %v1336 = vunpack.c.l.s4 1983009808
    %v1337 = vunpack.c.0.s8 %v1336
    %v1338 = vlaneseq
    %v1339 = vshrl.u32 %v1338, 7
    %v1340 = vsub.s32 %v1337, %v1339
    %v1341 = vrot.slane %v1334, %v1340
    %v1342 = vcombine.low %v1059, %v1061
    %v1344 = vunpack.c.l.s4 1983009808
    %v1345 = vunpack.c.0.s8 %v1344
    %v1346 = vlaneseq
    %v1347 = vshrl.u32 %v1346, 7
    %v1348 = vsub.s32 %v1345, %v1347
    %v1349 = vrot.slane %v1342, %v1348
    %v1350 = vcombine.low %v1126, %v1128
    %v1352 = vunpack.c.l.s4 1983009808
    %v1353 = vunpack.c.0.s8 %v1352
    %v1354 = vlaneseq
    %v1355 = vshrl.u32 %v1354, 7
    %v1356 = vsub.s32 %v1353, %v1355
    %v1357 = vrot.slane %v1350, %v1356
    %v1358 = vcombine.low %v1127, %v1129
    %v1360 = vunpack.c.l.s4 1983009808
    %v1361 = vunpack.c.0.s8 %v1360
    %v1362 = vlaneseq
    %v1363 = vshrl.u32 %v1362, 7
    %v1364 = vsub.s32 %v1361, %v1363
    %v1365 = vrot.slane %v1358, %v1364
    %v1366 = vcombine.low %v1341, %v1349
    %v1367 = vcombine.high %v1341, %v1349
    %v1369 = vunpack.c.l.s4 1934713408
    %v1370 = vunpack.c.0.s8 %v1369
    %v1371 = vlaneseq
    %v1372 = vshrl.u32 %v1371, 7
    %v1373 = vsub.s32 %v1370, %v1372
    %v1374 = vrot.slane %v1366, %v1373
    %v1376 = vunpack.c.l.s4 1934713408
    %v1377 = vunpack.c.0.s8 %v1376
    %v1378 = vlaneseq
    %v1379 = vshrl.u32 %v1378, 7
    %v1380 = vsub.s32 %v1377, %v1379
    %v1381 = vrot.slane %v1367, %v1380
    %v1382 = vcombine.low %v1357, %v1365
    %v1383 = vcombine.high %v1357, %v1365
    %v1385 = vunpack.c.l.s4 1934713408
    %v1386 = vunpack.c.0.s8 %v1385
    %v1387 = vlaneseq
    %v1388 = vshrl.u32 %v1387, 7
    %v1389 = vsub.s32 %v1386, %v1388
    %v1390 = vrot.slane %v1382, %v1389
    %v1392 = vunpack.c.l.s4 1934713408
    %v1393 = vunpack.c.0.s8 %v1392
    %v1394 = vlaneseq
    %v1395 = vshrl.u32 %v1394, 7
    %v1396 = vsub.s32 %v1393, %v1395
    %v1397 = vrot.slane %v1383, %v1396
    %v1398 = vcombine.low %v1374, %v1390
    %v1399 = vcombine.high %v1374, %v1390
    %v1400 = vcombine.low %v1381, %v1397
    %v1401 = vcombine.high %v1381, %v1397
    %1406 = vrot.lane.b32.xlu0 %v508, 120
    %v1407 = vpop.permute.xlu0 %1406
    %1408 = vrot.lane.b32.xlu0 %v513, 120
    %v1409 = vpop.permute.xlu0 %1408
    %1410 = vrot.lane.b32.xlu0 %v518, 120
    %v1411 = vpop.permute.xlu0 %1410
    %1412 = vrot.lane.b32.xlu0 %v523, 120
    %v1413 = vpop.permute.xlu0 %1412
    %1418 = vrot.lane.b32.xlu0 %v508, 112
    %v1419 = vpop.permute.xlu0 %1418
    %1420 = vrot.lane.b32.xlu0 %v513, 112
    %v1421 = vpop.permute.xlu0 %1420
    %1422 = vrot.lane.b32.xlu0 %v518, 112
    %v1423 = vpop.permute.xlu0 %1422
    %1424 = vrot.lane.b32.xlu0 %v523, 112
    %v1425 = vpop.permute.xlu0 %1424
    %1430 = vrot.lane.b32.xlu0 %v508, 104
    %v1431 = vpop.permute.xlu0 %1430
    %1432 = vrot.lane.b32.xlu0 %v513, 104
    %v1433 = vpop.permute.xlu0 %1432
    %1434 = vrot.lane.b32.xlu0 %v518, 104
    %v1435 = vpop.permute.xlu0 %1434
    %1436 = vrot.lane.b32.xlu0 %v523, 104
    %v1437 = vpop.permute.xlu0 %1436
    %v1442 = vcombine.low %v508, %v1419
    %v1443 = vcombine.high %v508, %v1419
    %v1445 = vunpack.c.l.s4 1983009808
    %v1446 = vunpack.c.0.s8 %v1445
    %v1447 = vlaneseq
    %v1448 = vshrl.u32 %v1447, 7
    %v1449 = vsub.s32 %v1446, %v1448
    %v1450 = vrot.slane %v1442, %v1449
    %v1452 = vunpack.c.l.s4 1983009808
    %v1453 = vunpack.c.0.s8 %v1452
    %v1454 = vlaneseq
    %v1455 = vshrl.u32 %v1454, 7
    %v1456 = vsub.s32 %v1453, %v1455
    %v1457 = vrot.slane %v1443, %v1456
    %v1458 = vcombine.low %v1407, %v1431
    %v1459 = vcombine.high %v1407, %v1431
    %v1461 = vunpack.c.l.s4 1983009808
    %v1462 = vunpack.c.0.s8 %v1461
    %v1463 = vlaneseq
    %v1464 = vshrl.u32 %v1463, 7
    %v1465 = vsub.s32 %v1462, %v1464
    %v1466 = vrot.slane %v1458, %v1465
    %v1468 = vunpack.c.l.s4 1983009808
    %v1469 = vunpack.c.0.s8 %v1468
    %v1470 = vlaneseq
    %v1471 = vshrl.u32 %v1470, 7
    %v1472 = vsub.s32 %v1469, %v1471
    %v1473 = vrot.slane %v1459, %v1472
    %v1474 = vcombine.low %v1450, %v1466
    %v1475 = vcombine.high %v1450, %v1466
    %v1477 = vunpack.c.l.s4 1934713408
    %v1478 = vunpack.c.0.s8 %v1477
    %v1479 = vlaneseq
    %v1480 = vshrl.u32 %v1479, 7
    %v1481 = vsub.s32 %v1478, %v1480
    %v1482 = vrot.slane %v1474, %v1481
    %v1484 = vunpack.c.l.s4 1934713408
    %v1485 = vunpack.c.0.s8 %v1484
    %v1486 = vlaneseq
    %v1487 = vshrl.u32 %v1486, 7
    %v1488 = vsub.s32 %v1485, %v1487
    %v1489 = vrot.slane %v1475, %v1488
    %v1490 = vcombine.low %v1457, %v1473
    %v1491 = vcombine.high %v1457, %v1473
    %v1493 = vunpack.c.l.s4 1934713408
    %v1494 = vunpack.c.0.s8 %v1493
    %v1495 = vlaneseq
    %v1496 = vshrl.u32 %v1495, 7
    %v1497 = vsub.s32 %v1494, %v1496
    %v1498 = vrot.slane %v1490, %v1497
    %v1500 = vunpack.c.l.s4 1934713408
    %v1501 = vunpack.c.0.s8 %v1500
    %v1502 = vlaneseq
    %v1503 = vshrl.u32 %v1502, 7
    %v1504 = vsub.s32 %v1501, %v1503
    %v1505 = vrot.slane %v1491, %v1504
    %v1506 = vcombine.high %v1482, 0.0
    %v1507 = vcombine.high %v1489, 0.0
    %v1508 = vcombine.high %v1498, 0.0
    %v1509 = vcombine.high %v1505, 0.0
    %v1510 = vcombine.low %v513, %v1421
    %v1511 = vcombine.high %v513, %v1421
    %v1513 = vunpack.c.l.s4 1983009808
    %v1514 = vunpack.c.0.s8 %v1513
    %v1515 = vlaneseq
    %v1516 = vshrl.u32 %v1515, 7
    %v1517 = vsub.s32 %v1514, %v1516
    %v1518 = vrot.slane %v1510, %v1517
    %v1520 = vunpack.c.l.s4 1983009808
    %v1521 = vunpack.c.0.s8 %v1520
    %v1522 = vlaneseq
    %v1523 = vshrl.u32 %v1522, 7
    %v1524 = vsub.s32 %v1521, %v1523
    %v1525 = vrot.slane %v1511, %v1524
    %v1526 = vcombine.low %v1409, %v1433
    %v1527 = vcombine.high %v1409, %v1433
    %v1529 = vunpack.c.l.s4 1983009808
    %v1530 = vunpack.c.0.s8 %v1529
    %v1531 = vlaneseq
    %v1532 = vshrl.u32 %v1531, 7
    %v1533 = vsub.s32 %v1530, %v1532
    %v1534 = vrot.slane %v1526, %v1533
    %v1536 = vunpack.c.l.s4 1983009808
    %v1537 = vunpack.c.0.s8 %v1536
    %v1538 = vlaneseq
    %v1539 = vshrl.u32 %v1538, 7
    %v1540 = vsub.s32 %v1537, %v1539
    %v1541 = vrot.slane %v1527, %v1540
    %v1542 = vcombine.low %v1518, %v1534
    %v1543 = vcombine.high %v1518, %v1534
    %v1545 = vunpack.c.l.s4 1934713408
    %v1546 = vunpack.c.0.s8 %v1545
    %v1547 = vlaneseq
    %v1548 = vshrl.u32 %v1547, 7
    %v1549 = vsub.s32 %v1546, %v1548
    %v1550 = vrot.slane %v1542, %v1549
    %v1552 = vunpack.c.l.s4 1934713408
    %v1553 = vunpack.c.0.s8 %v1552
    %v1554 = vlaneseq
    %v1555 = vshrl.u32 %v1554, 7
    %v1556 = vsub.s32 %v1553, %v1555
    %v1557 = vrot.slane %v1543, %v1556
    %v1558 = vcombine.low %v1525, %v1541
    %v1559 = vcombine.high %v1525, %v1541
    %v1561 = vunpack.c.l.s4 1934713408
    %v1562 = vunpack.c.0.s8 %v1561
    %v1563 = vlaneseq
    %v1564 = vshrl.u32 %v1563, 7
    %v1565 = vsub.s32 %v1562, %v1564
    %v1566 = vrot.slane %v1558, %v1565
    %v1568 = vunpack.c.l.s4 1934713408
    %v1569 = vunpack.c.0.s8 %v1568
    %v1570 = vlaneseq
    %v1571 = vshrl.u32 %v1570, 7
    %v1572 = vsub.s32 %v1569, %v1571
    %v1573 = vrot.slane %v1559, %v1572
    %v1574 = vcombine.high %v1550, 0.0
    %v1575 = vcombine.high %v1557, 0.0
    %v1576 = vcombine.high %v1566, 0.0
    %v1577 = vcombine.high %v1573, 0.0
    %v1578 = vcombine.low %v518, %v1423
    %v1579 = vcombine.high %v518, %v1423
    %v1581 = vunpack.c.l.s4 1983009808
    %v1582 = vunpack.c.0.s8 %v1581
    %v1583 = vlaneseq
    %v1584 = vshrl.u32 %v1583, 7
    %v1585 = vsub.s32 %v1582, %v1584
    %v1586 = vrot.slane %v1578, %v1585
    %v1588 = vunpack.c.l.s4 1983009808
    %v1589 = vunpack.c.0.s8 %v1588
    %v1590 = vlaneseq
    %v1591 = vshrl.u32 %v1590, 7
    %v1592 = vsub.s32 %v1589, %v1591
    %v1593 = vrot.slane %v1579, %v1592
    %v1594 = vcombine.low %v1411, %v1435
    %v1595 = vcombine.high %v1411, %v1435
    %v1597 = vunpack.c.l.s4 1983009808
    %v1598 = vunpack.c.0.s8 %v1597
    %v1599 = vlaneseq
    %v1600 = vshrl.u32 %v1599, 7
    %v1601 = vsub.s32 %v1598, %v1600
    %v1602 = vrot.slane %v1594, %v1601
    %v1604 = vunpack.c.l.s4 1983009808
    %v1605 = vunpack.c.0.s8 %v1604
    %v1606 = vlaneseq
    %v1607 = vshrl.u32 %v1606, 7
    %v1608 = vsub.s32 %v1605, %v1607
    %v1609 = vrot.slane %v1595, %v1608
    %v1610 = vcombine.low %v1586, %v1602
    %v1611 = vcombine.high %v1586, %v1602
    %v1613 = vunpack.c.l.s4 1934713408
    %v1614 = vunpack.c.0.s8 %v1613
    %v1615 = vlaneseq
    %v1616 = vshrl.u32 %v1615, 7
    %v1617 = vsub.s32 %v1614, %v1616
    %v1618 = vrot.slane %v1610, %v1617
    %v1620 = vunpack.c.l.s4 1934713408
    %v1621 = vunpack.c.0.s8 %v1620
    %v1622 = vlaneseq
    %v1623 = vshrl.u32 %v1622, 7
    %v1624 = vsub.s32 %v1621, %v1623
    %v1625 = vrot.slane %v1611, %v1624
    %v1626 = vcombine.low %v1593, %v1609
    %v1627 = vcombine.high %v1593, %v1609
    %v1629 = vunpack.c.l.s4 1934713408
    %v1630 = vunpack.c.0.s8 %v1629
    %v1631 = vlaneseq
    %v1632 = vshrl.u32 %v1631, 7
    %v1633 = vsub.s32 %v1630, %v1632
    %v1634 = vrot.slane %v1626, %v1633
    %v1636 = vunpack.c.l.s4 1934713408
    %v1637 = vunpack.c.0.s8 %v1636
    %v1638 = vlaneseq
    %v1639 = vshrl.u32 %v1638, 7
    %v1640 = vsub.s32 %v1637, %v1639
    %v1641 = vrot.slane %v1627, %v1640
    %v1642 = vcombine.high %v1618, 0.0
    %v1643 = vcombine.high %v1625, 0.0
    %v1644 = vcombine.high %v1634, 0.0
    %v1645 = vcombine.high %v1641, 0.0
    %v1646 = vcombine.low %v523, %v1425
    %v1647 = vcombine.high %v523, %v1425
    %v1649 = vunpack.c.l.s4 1983009808
    %v1650 = vunpack.c.0.s8 %v1649
    %v1651 = vlaneseq
    %v1652 = vshrl.u32 %v1651, 7
    %v1653 = vsub.s32 %v1650, %v1652
    %v1654 = vrot.slane %v1646, %v1653
    %v1656 = vunpack.c.l.s4 1983009808
    %v1657 = vunpack.c.0.s8 %v1656
    %v1658 = vlaneseq
    %v1659 = vshrl.u32 %v1658, 7
    %v1660 = vsub.s32 %v1657, %v1659
    %v1661 = vrot.slane %v1647, %v1660
    %v1662 = vcombine.low %v1413, %v1437
    %v1663 = vcombine.high %v1413, %v1437
    %v1665 = vunpack.c.l.s4 1983009808
    %v1666 = vunpack.c.0.s8 %v1665
    %v1667 = vlaneseq
    %v1668 = vshrl.u32 %v1667, 7
    %v1669 = vsub.s32 %v1666, %v1668
    %v1670 = vrot.slane %v1662, %v1669
    %v1672 = vunpack.c.l.s4 1983009808
    %v1673 = vunpack.c.0.s8 %v1672
    %v1674 = vlaneseq
    %v1675 = vshrl.u32 %v1674, 7
    %v1676 = vsub.s32 %v1673, %v1675
    %v1677 = vrot.slane %v1663, %v1676
    %v1678 = vcombine.low %v1654, %v1670
    %v1679 = vcombine.high %v1654, %v1670
    %v1681 = vunpack.c.l.s4 1934713408
    %v1682 = vunpack.c.0.s8 %v1681
    %v1683 = vlaneseq
    %v1684 = vshrl.u32 %v1683, 7
    %v1685 = vsub.s32 %v1682, %v1684
    %v1686 = vrot.slane %v1678, %v1685
    %v1688 = vunpack.c.l.s4 1934713408
    %v1689 = vunpack.c.0.s8 %v1688
    %v1690 = vlaneseq
    %v1691 = vshrl.u32 %v1690, 7
    %v1692 = vsub.s32 %v1689, %v1691
    %v1693 = vrot.slane %v1679, %v1692
    %v1694 = vcombine.low %v1661, %v1677
    %v1695 = vcombine.high %v1661, %v1677
    %v1697 = vunpack.c.l.s4 1934713408
    %v1698 = vunpack.c.0.s8 %v1697
    %v1699 = vlaneseq
    %v1700 = vshrl.u32 %v1699, 7
    %v1701 = vsub.s32 %v1698, %v1700
    %v1702 = vrot.slane %v1694, %v1701
    %v1704 = vunpack.c.l.s4 1934713408
    %v1705 = vunpack.c.0.s8 %v1704
    %v1706 = vlaneseq
    %v1707 = vshrl.u32 %v1706, 7
    %v1708 = vsub.s32 %v1705, %v1707
    %v1709 = vrot.slane %v1695, %v1708
    %v1710 = vcombine.high %v1686, 0.0
    %v1711 = vcombine.high %v1693, 0.0
    %v1712 = vcombine.high %v1702, 0.0
    %v1713 = vcombine.high %v1709, 0.0
    %v1714 = vcombine.low %v1482, %v1498
    %v1716 = vunpack.c.l.s4 1983009808
    %v1717 = vunpack.c.0.s8 %v1716
    %v1718 = vlaneseq
    %v1719 = vshrl.u32 %v1718, 7
    %v1720 = vsub.s32 %v1717, %v1719
    %v1721 = vrot.slane %v1714, %v1720
    %v1722 = vcombine.low %v1489, %v1505
    %v1724 = vunpack.c.l.s4 1983009808
    %v1725 = vunpack.c.0.s8 %v1724
    %v1726 = vlaneseq
    %v1727 = vshrl.u32 %v1726, 7
    %v1728 = vsub.s32 %v1725, %v1727
    %v1729 = vrot.slane %v1722, %v1728
    %v1730 = vcombine.low %v1550, %v1566
    %v1732 = vunpack.c.l.s4 1983009808
    %v1733 = vunpack.c.0.s8 %v1732
    %v1734 = vlaneseq
    %v1735 = vshrl.u32 %v1734, 7
    %v1736 = vsub.s32 %v1733, %v1735
    %v1737 = vrot.slane %v1730, %v1736
    %v1738 = vcombine.low %v1557, %v1573
    %v1740 = vunpack.c.l.s4 1983009808
    %v1741 = vunpack.c.0.s8 %v1740
    %v1742 = vlaneseq
    %v1743 = vshrl.u32 %v1742, 7
    %v1744 = vsub.s32 %v1741, %v1743
    %v1745 = vrot.slane %v1738, %v1744
    %v1746 = vcombine.low %v1721, %v1729
    %v1747 = vcombine.high %v1721, %v1729
    %v1749 = vunpack.c.l.s4 1934713408
    %v1750 = vunpack.c.0.s8 %v1749
    %v1751 = vlaneseq
    %v1752 = vshrl.u32 %v1751, 7
    %v1753 = vsub.s32 %v1750, %v1752
    %v1754 = vrot.slane %v1746, %v1753
    %v1756 = vunpack.c.l.s4 1934713408
    %v1757 = vunpack.c.0.s8 %v1756
    %v1758 = vlaneseq
    %v1759 = vshrl.u32 %v1758, 7
    %v1760 = vsub.s32 %v1757, %v1759
    %v1761 = vrot.slane %v1747, %v1760
    %v1762 = vcombine.low %v1737, %v1745
    %v1763 = vcombine.high %v1737, %v1745
    %v1765 = vunpack.c.l.s4 1934713408
    %v1766 = vunpack.c.0.s8 %v1765
    %v1767 = vlaneseq
    %v1768 = vshrl.u32 %v1767, 7
    %v1769 = vsub.s32 %v1766, %v1768
    %v1770 = vrot.slane %v1762, %v1769
    %v1772 = vunpack.c.l.s4 1934713408
    %v1773 = vunpack.c.0.s8 %v1772
    %v1774 = vlaneseq
    %v1775 = vshrl.u32 %v1774, 7
    %v1776 = vsub.s32 %v1773, %v1775
    %v1777 = vrot.slane %v1763, %v1776
    %v1778 = vcombine.low %v1754, %v1770
    %v1779 = vcombine.high %v1754, %v1770
    %v1780 = vcombine.low %v1761, %v1777
    %v1781 = vcombine.high %v1761, %v1777
    %v1782 = vcombine.low %v1618, %v1634
    %v1784 = vunpack.c.l.s4 1983009808
    %v1785 = vunpack.c.0.s8 %v1784
    %v1786 = vlaneseq
    %v1787 = vshrl.u32 %v1786, 7
    %v1788 = vsub.s32 %v1785, %v1787
    %v1789 = vrot.slane %v1782, %v1788
    %v1790 = vcombine.low %v1625, %v1641
    %v1792 = vunpack.c.l.s4 1983009808
    %v1793 = vunpack.c.0.s8 %v1792
    %v1794 = vlaneseq
    %v1795 = vshrl.u32 %v1794, 7
    %v1796 = vsub.s32 %v1793, %v1795
    %v1797 = vrot.slane %v1790, %v1796
    %v1798 = vcombine.low %v1686, %v1702
    %v1800 = vunpack.c.l.s4 1983009808
    %v1801 = vunpack.c.0.s8 %v1800
    %v1802 = vlaneseq
    %v1803 = vshrl.u32 %v1802, 7
    %v1804 = vsub.s32 %v1801, %v1803
    %v1805 = vrot.slane %v1798, %v1804
    %v1806 = vcombine.low %v1693, %v1709
    %v1808 = vunpack.c.l.s4 1983009808
    %v1809 = vunpack.c.0.s8 %v1808
    %v1810 = vlaneseq
    %v1811 = vshrl.u32 %v1810, 7
    %v1812 = vsub.s32 %v1809, %v1811
    %v1813 = vrot.slane %v1806, %v1812
    %v1814 = vcombine.low %v1789, %v1797
    %v1815 = vcombine.high %v1789, %v1797
    %v1817 = vunpack.c.l.s4 1934713408
    %v1818 = vunpack.c.0.s8 %v1817
    %v1819 = vlaneseq
    %v1820 = vshrl.u32 %v1819, 7
    %v1821 = vsub.s32 %v1818, %v1820
    %v1822 = vrot.slane %v1814, %v1821
    %v1824 = vunpack.c.l.s4 1934713408
    %v1825 = vunpack.c.0.s8 %v1824
    %v1826 = vlaneseq
    %v1827 = vshrl.u32 %v1826, 7
    %v1828 = vsub.s32 %v1825, %v1827
    %v1829 = vrot.slane %v1815, %v1828
    %v1830 = vcombine.low %v1805, %v1813
    %v1831 = vcombine.high %v1805, %v1813
    %v1833 = vunpack.c.l.s4 1934713408
    %v1834 = vunpack.c.0.s8 %v1833
    %v1835 = vlaneseq
    %v1836 = vshrl.u32 %v1835, 7
    %v1837 = vsub.s32 %v1834, %v1836
    %v1838 = vrot.slane %v1830, %v1837
    %v1840 = vunpack.c.l.s4 1934713408
    %v1841 = vunpack.c.0.s8 %v1840
    %v1842 = vlaneseq
    %v1843 = vshrl.u32 %v1842, 7
    %v1844 = vsub.s32 %v1841, %v1843
    %v1845 = vrot.slane %v1831, %v1844
    %v1846 = vcombine.low %v1822, %v1838
    %v1847 = vcombine.high %v1822, %v1838
    %v1848 = vcombine.low %v1829, %v1845
    %v1849 = vcombine.high %v1829, %v1845
    %v1850 = vcombine.low %v1506, %v1508
    %v1852 = vunpack.c.l.s4 1983009808
    %v1853 = vunpack.c.0.s8 %v1852
    %v1854 = vlaneseq
    %v1855 = vshrl.u32 %v1854, 7
    %v1856 = vsub.s32 %v1853, %v1855
    %v1857 = vrot.slane %v1850, %v1856
    %v1858 = vcombine.low %v1507, %v1509
    %v1860 = vunpack.c.l.s4 1983009808
    %v1861 = vunpack.c.0.s8 %v1860
    %v1862 = vlaneseq
    %v1863 = vshrl.u32 %v1862, 7
    %v1864 = vsub.s32 %v1861, %v1863
    %v1865 = vrot.slane %v1858, %v1864
    %v1866 = vcombine.low %v1574, %v1576
    %v1868 = vunpack.c.l.s4 1983009808
    %v1869 = vunpack.c.0.s8 %v1868
    %v1870 = vlaneseq
    %v1871 = vshrl.u32 %v1870, 7
    %v1872 = vsub.s32 %v1869, %v1871
    %v1873 = vrot.slane %v1866, %v1872
    %v1874 = vcombine.low %v1575, %v1577
    %v1876 = vunpack.c.l.s4 1983009808
    %v1877 = vunpack.c.0.s8 %v1876
    %v1878 = vlaneseq
    %v1879 = vshrl.u32 %v1878, 7
    %v1880 = vsub.s32 %v1877, %v1879
    %v1881 = vrot.slane %v1874, %v1880
    %v1882 = vcombine.low %v1857, %v1865
    %v1883 = vcombine.high %v1857, %v1865
    %v1885 = vunpack.c.l.s4 1934713408
    %v1886 = vunpack.c.0.s8 %v1885
    %v1887 = vlaneseq
    %v1888 = vshrl.u32 %v1887, 7
    %v1889 = vsub.s32 %v1886, %v1888
    %v1890 = vrot.slane %v1882, %v1889
    %v1892 = vunpack.c.l.s4 1934713408
    %v1893 = vunpack.c.0.s8 %v1892
    %v1894 = vlaneseq
    %v1895 = vshrl.u32 %v1894, 7
    %v1896 = vsub.s32 %v1893, %v1895
    %v1897 = vrot.slane %v1883, %v1896
    %v1898 = vcombine.low %v1873, %v1881
    %v1899 = vcombine.high %v1873, %v1881
    %v1901 = vunpack.c.l.s4 1934713408
    %v1902 = vunpack.c.0.s8 %v1901
    %v1903 = vlaneseq
    %v1904 = vshrl.u32 %v1903, 7
    %v1905 = vsub.s32 %v1902, %v1904
    %v1906 = vrot.slane %v1898, %v1905
    %v1908 = vunpack.c.l.s4 1934713408
    %v1909 = vunpack.c.0.s8 %v1908
    %v1910 = vlaneseq
    %v1911 = vshrl.u32 %v1910, 7
    %v1912 = vsub.s32 %v1909, %v1911
    %v1913 = vrot.slane %v1899, %v1912
    %v1914 = vcombine.low %v1890, %v1906
    %v1915 = vcombine.high %v1890, %v1906
    %v1916 = vcombine.low %v1897, %v1913
    %v1917 = vcombine.high %v1897, %v1913
    %v1918 = vcombine.low %v1642, %v1644
    %v1920 = vunpack.c.l.s4 1983009808
    %v1921 = vunpack.c.0.s8 %v1920
    %v1922 = vlaneseq
    %v1923 = vshrl.u32 %v1922, 7
    %v1924 = vsub.s32 %v1921, %v1923
    %v1925 = vrot.slane %v1918, %v1924
    %v1926 = vcombine.low %v1643, %v1645
    %v1928 = vunpack.c.l.s4 1983009808
    %v1929 = vunpack.c.0.s8 %v1928
    %v1930 = vlaneseq
    %v1931 = vshrl.u32 %v1930, 7
    %v1932 = vsub.s32 %v1929, %v1931
    %v1933 = vrot.slane %v1926, %v1932
    %v1934 = vcombine.low %v1710, %v1712
    %v1936 = vunpack.c.l.s4 1983009808
    %v1937 = vunpack.c.0.s8 %v1936
    %v1938 = vlaneseq
    %v1939 = vshrl.u32 %v1938, 7
    %v1940 = vsub.s32 %v1937, %v1939
    %v1941 = vrot.slane %v1934, %v1940
    %v1942 = vcombine.low %v1711, %v1713
    %v1944 = vunpack.c.l.s4 1983009808
    %v1945 = vunpack.c.0.s8 %v1944
    %v1946 = vlaneseq
    %v1947 = vshrl.u32 %v1946, 7
    %v1948 = vsub.s32 %v1945, %v1947
    %v1949 = vrot.slane %v1942, %v1948
    %v1950 = vcombine.low %v1925, %v1933
    %v1951 = vcombine.high %v1925, %v1933
    %v1953 = vunpack.c.l.s4 1934713408
    %v1954 = vunpack.c.0.s8 %v1953
    %v1955 = vlaneseq
    %v1956 = vshrl.u32 %v1955, 7
    %v1957 = vsub.s32 %v1954, %v1956
    %v1958 = vrot.slane %v1950, %v1957
    %v1960 = vunpack.c.l.s4 1934713408
    %v1961 = vunpack.c.0.s8 %v1960
    %v1962 = vlaneseq
    %v1963 = vshrl.u32 %v1962, 7
    %v1964 = vsub.s32 %v1961, %v1963
    %v1965 = vrot.slane %v1951, %v1964
    %v1966 = vcombine.low %v1941, %v1949
    %v1967 = vcombine.high %v1941, %v1949
    %v1969 = vunpack.c.l.s4 1934713408
    %v1970 = vunpack.c.0.s8 %v1969
    %v1971 = vlaneseq
    %v1972 = vshrl.u32 %v1971, 7
    %v1973 = vsub.s32 %v1970, %v1972
    %v1974 = vrot.slane %v1966, %v1973
    %v1976 = vunpack.c.l.s4 1934713408
    %v1977 = vunpack.c.0.s8 %v1976
    %v1978 = vlaneseq
    %v1979 = vshrl.u32 %v1978, 7
    %v1980 = vsub.s32 %v1977, %v1979
    %v1981 = vrot.slane %v1967, %v1980
    %v1982 = vcombine.low %v1958, %v1974
    %v1983 = vcombine.high %v1958, %v1974
    %v1984 = vcombine.low %v1965, %v1981
    %v1985 = vcombine.high %v1965, %v1981
    %vm1986 = vcmask 64512
    %v1988 = vsel %vm1986, %v746, 0
    %v1991 = vsel %vm1986, %v1194, 0
    %v1994 = vsel %vm1986, %v1262, 0
    %1996 = vmatprep.subr.mxu0 0.0
    %1997 = vmatpush1.xpose.msra.mxu0 %v1991
    %1998 = vmatprep.subr.mxu0 0.0
    %1999 = vmatpush1.xpose.msra.mxu0 %v1994
    %2000 = vmatprep.subr.mxu0 0.0
    %2001 = vmatpush1.xpose.msra.mxu0 0.0
    %2002 = vmatprep.subr.mxu0 0.0
    %2003 = vmatpush1.xpose.msra.mxu0 0.0
    %2004 = vmatprep.subr.mxu0 0.0
    %2005 = vmatpush1.xpose.msra.mxu0 0.0
    %2006 = vmatprep.subr.mxu0 0.0
    %2007 = vmatpush1.xpose.msra.mxu0 0.0
    %2008 = vmatprep.subr.mxu0 0.0
    %2009 = vmatpush1.xpose.msra.mxu0 0.0
    %2010 = vmatprep.subr.mxu0 0.0
    %2011 = vmatpush1.xpose.msra.mxu0 0.0
    %2012 = vmatprep.subr.mxu0 0.0
    %2013 = vmatpush1.xpose.msra.mxu0 0.0
    %2014 = vmatprep.subr.mxu0 0.0
    %2015 = vmatpush1.xpose.msra.mxu0 0.0
    %2016 = vmatprep.subr.mxu0 0.0
    %2017 = vmatpush1.xpose.msra.mxu0 0.0
    %2018 = vmatprep.subr.mxu0 0.0
    %2019 = vmatpush1.xpose.msra.mxu0 0.0
    %2020 = vmatprep.subr.mxu0 0.0
    %2021 = vmatpush1.xpose.msra.mxu0 0.0
    %2022 = vmatprep.subr.mxu0 0.0
    %2023 = vmatpush1.xpose.msra.mxu0 0.0
    %2024 = vmatprep.subr.mxu0 0.0
    %2025 = vmatpush1.xpose.msra.mxu0 0.0
    %2026 = vmatprep.subr.mxu0 0.0
    %2027 = vmatpush1.xpose.msra.mxu0 0.0
    %2028 = vmatprep.subr.mxu0 0.0
    %2029 = vmatpush1.xpose.msra.mxu0 0.0
    %2030 = vmatprep.subr.mxu0 0.0
    %2031 = vmatpush1.xpose.msra.mxu0 0.0
    %2032 = vmatprep.subr.mxu0 0.0
    %2033 = vmatpush1.xpose.msra.mxu0 0.0
    %2034 = vmatprep.subr.mxu0 0.0
    %2035 = vmatpush1.xpose.msra.mxu0 0.0
    %2036 = vmatprep.subr.mxu0 0.0
    %2037 = vmatpush1.xpose.msra.mxu0 0.0
    %2038 = vmatprep.subr.mxu0 0.0
    %2039 = vmatpush1.xpose.msra.mxu0 0.0
    %2040 = vmatprep.subr.mxu0 0.0
    %2041 = vmatpush1.xpose.msra.mxu0 0.0
    %2042 = vmatprep.subr.mxu0 0.0
    %2043 = vmatpush1.xpose.msra.mxu0 0.0
    %2044 = vmatprep.subr.mxu0 0.0
    %2045 = vmatpush1.xpose.msra.mxu0 0.0
    %2046 = vmatprep.subr.mxu0 0.0
    %2047 = vmatpush1.xpose.msra.mxu0 0.0
    %2048 = vmatprep.subr.mxu0 0.0
    %2049 = vmatpush1.xpose.msra.mxu0 0.0
    %2050 = vmatprep.subr.mxu0 0.0
    %2051 = vmatpush1.xpose.msra.mxu0 0.0
    %2052 = vmatprep.subr.mxu0 0.0
    %2053 = vmatpush1.xpose.msra.mxu0 0.0
    %2054 = vmatprep.subr.mxu0 0.0
    %2055 = vmatpush1.xpose.msra.mxu0 0.0
    %2056 = vmatprep.subr.mxu0 0.0
    %2057 = vmatpush1.xpose.msra.mxu0 0.0
    %2058 = vmatprep.subr.mxu0 0.0
    %2059 = vmatpush1.xpose.msra.mxu0 0.0
    %2060 = vmatprep.mubr.f32.mxu0 0.0
    %2061 = vmatmul.mubr.f32.gmra.mrb[0].mxu0 %v1988
    %v2062 = vpop.f32.mrb[0].mxu0
    %v2063 = vadd.f32 0.0, %v2062
    %v2064 = vpop.f32.mrb[0].mxu0
    %2065 = vdwg.mxu0
    %v2067 = vsel %vm1986, %v747, 0
    %v2070 = vsel %vm1986, %v1195, 0
    %v2073 = vsel %vm1986, %v1263, 0
    %2075 = vmatprep.subr.mxu0 0.0
    %2076 = vmatpush1.xpose.msra.mxu0 %v2070
    %2077 = vmatprep.subr.mxu0 0.0
    %2078 = vmatpush1.xpose.msra.mxu0 %v2073
    %2079 = vmatprep.subr.mxu0 0.0
    %2080 = vmatpush1.xpose.msra.mxu0 0.0
    %2081 = vmatprep.subr.mxu0 0.0
    %2082 = vmatpush1.xpose.msra.mxu0 0.0
    %2083 = vmatprep.subr.mxu0 0.0
    %2084 = vmatpush1.xpose.msra.mxu0 0.0
    %2085 = vmatprep.subr.mxu0 0.0
    %2086 = vmatpush1.xpose.msra.mxu0 0.0
    %2087 = vmatprep.subr.mxu0 0.0
    %2088 = vmatpush1.xpose.msra.mxu0 0.0
    %2089 = vmatprep.subr.mxu0 0.0
    %2090 = vmatpush1.xpose.msra.mxu0 0.0
    %2091 = vmatprep.subr.mxu0 0.0
    %2092 = vmatpush1.xpose.msra.mxu0 0.0
    %2093 = vmatprep.subr.mxu0 0.0
    %2094 = vmatpush1.xpose.msra.mxu0 0.0
    %2095 = vmatprep.subr.mxu0 0.0
    %2096 = vmatpush1.xpose.msra.mxu0 0.0
    %2097 = vmatprep.subr.mxu0 0.0
    %2098 = vmatpush1.xpose.msra.mxu0 0.0
    %2099 = vmatprep.subr.mxu0 0.0
    %2100 = vmatpush1.xpose.msra.mxu0 0.0
    %2101 = vmatprep.subr.mxu0 0.0
    %2102 = vmatpush1.xpose.msra.mxu0 0.0
    %2103 = vmatprep.subr.mxu0 0.0
    %2104 = vmatpush1.xpose.msra.mxu0 0.0
    %2105 = vmatprep.subr.mxu0 0.0
    %2106 = vmatpush1.xpose.msra.mxu0 0.0
    %2107 = vmatprep.subr.mxu0 0.0
    %2108 = vmatpush1.xpose.msra.mxu0 0.0
    %2109 = vmatprep.subr.mxu0 0.0
    %2110 = vmatpush1.xpose.msra.mxu0 0.0
    %2111 = vmatprep.subr.mxu0 0.0
    %2112 = vmatpush1.xpose.msra.mxu0 0.0
    %2113 = vmatprep.subr.mxu0 0.0
    %2114 = vmatpush1.xpose.msra.mxu0 0.0
    %2115 = vmatprep.subr.mxu0 0.0
    %2116 = vmatpush1.xpose.msra.mxu0 0.0
    %2117 = vmatprep.subr.mxu0 0.0
    %2118 = vmatpush1.xpose.msra.mxu0 0.0
    %2119 = vmatprep.subr.mxu0 0.0
    %2120 = vmatpush1.xpose.msra.mxu0 0.0
    %2121 = vmatprep.subr.mxu0 0.0
    %2122 = vmatpush1.xpose.msra.mxu0 0.0
    %2123 = vmatprep.subr.mxu0 0.0
    %2124 = vmatpush1.xpose.msra.mxu0 0.0
    %2125 = vmatprep.subr.mxu0 0.0
    %2126 = vmatpush1.xpose.msra.mxu0 0.0
    %2127 = vmatprep.subr.mxu0 0.0
    %2128 = vmatpush1.xpose.msra.mxu0 0.0
    %2129 = vmatprep.subr.mxu0 0.0
    %2130 = vmatpush1.xpose.msra.mxu0 0.0
    %2131 = vmatprep.subr.mxu0 0.0
    %2132 = vmatpush1.xpose.msra.mxu0 0.0
    %2133 = vmatprep.subr.mxu0 0.0
    %2134 = vmatpush1.xpose.msra.mxu0 0.0
    %2135 = vmatprep.subr.mxu0 0.0
    %2136 = vmatpush1.xpose.msra.mxu0 0.0
    %2137 = vmatprep.subr.mxu0 0.0
    %2138 = vmatpush1.xpose.msra.mxu0 0.0
    %2139 = vmatprep.mubr.f32.mxu0 0.0
    %2140 = vmatmul.mubr.f32.gmra.mrb[0].mxu0 %v2067
    %v2141 = vpop.f32.mrb[0].mxu0
    %v2142 = vadd.f32 0.0, %v2141
    %v2143 = vpop.f32.mrb[0].mxu0
    %2144 = vdwg.mxu0
    %v2146 = vsel %vm1986, %v748, 0
    %v2149 = vsel %vm1986, %v1196, 0
    %v2152 = vsel %vm1986, %v1264, 0
    %2154 = vmatprep.subr.mxu0 0.0
    %2155 = vmatpush1.xpose.msra.mxu0 %v2149
    %2156 = vmatprep.subr.mxu0 0.0
    %2157 = vmatpush1.xpose.msra.mxu0 %v2152
    %2158 = vmatprep.subr.mxu0 0.0
    %2159 = vmatpush1.xpose.msra.mxu0 0.0
    %2160 = vmatprep.subr.mxu0 0.0
    %2161 = vmatpush1.xpose.msra.mxu0 0.0
    %2162 = vmatprep.subr.mxu0 0.0
    %2163 = vmatpush1.xpose.msra.mxu0 0.0
    %2164 = vmatprep.subr.mxu0 0.0
    %2165 = vmatpush1.xpose.msra.mxu0 0.0
    %2166 = vmatprep.subr.mxu0 0.0
    %2167 = vmatpush1.xpose.msra.mxu0 0.0
    %2168 = vmatprep.subr.mxu0 0.0
    %2169 = vmatpush1.xpose.msra.mxu0 0.0
    %2170 = vmatprep.subr.mxu0 0.0
    %2171 = vmatpush1.xpose.msra.mxu0 0.0
    %2172 = vmatprep.subr.mxu0 0.0
    %2173 = vmatpush1.xpose.msra.mxu0 0.0
    %2174 = vmatprep.subr.mxu0 0.0
    %2175 = vmatpush1.xpose.msra.mxu0 0.0
    %2176 = vmatprep.subr.mxu0 0.0
    %2177 = vmatpush1.xpose.msra.mxu0 0.0
    %2178 = vmatprep.subr.mxu0 0.0
    %2179 = vmatpush1.xpose.msra.mxu0 0.0
    %2180 = vmatprep.subr.mxu0 0.0
    %2181 = vmatpush1.xpose.msra.mxu0 0.0
    %2182 = vmatprep.subr.mxu0 0.0
    %2183 = vmatpush1.xpose.msra.mxu0 0.0
    %2184 = vmatprep.subr.mxu0 0.0
    %2185 = vmatpush1.xpose.msra.mxu0 0.0
    %2186 = vmatprep.subr.mxu0 0.0
    %2187 = vmatpush1.xpose.msra.mxu0 0.0
    %2188 = vmatprep.subr.mxu0 0.0
    %2189 = vmatpush1.xpose.msra.mxu0 0.0
    %2190 = vmatprep.subr.mxu0 0.0
    %2191 = vmatpush1.xpose.msra.mxu0 0.0
    %2192 = vmatprep.subr.mxu0 0.0
    %2193 = vmatpush1.xpose.msra.mxu0 0.0
    %2194 = vmatprep.subr.mxu0 0.0
    %2195 = vmatpush1.xpose.msra.mxu0 0.0
    %2196 = vmatprep.subr.mxu0 0.0
    %2197 = vmatpush1.xpose.msra.mxu0 0.0
    %2198 = vmatprep.subr.mxu0 0.0
    %2199 = vmatpush1.xpose.msra.mxu0 0.0
    %2200 = vmatprep.subr.mxu0 0.0
    %2201 = vmatpush1.xpose.msra.mxu0 0.0
    %2202 = vmatprep.subr.mxu0 0.0
    %2203 = vmatpush1.xpose.msra.mxu0 0.0
    %2204 = vmatprep.subr.mxu0 0.0
    %2205 = vmatpush1.xpose.msra.mxu0 0.0
    %2206 = vmatprep.subr.mxu0 0.0
    %2207 = vmatpush1.xpose.msra.mxu0 0.0
    %2208 = vmatprep.subr.mxu0 0.0
    %2209 = vmatpush1.xpose.msra.mxu0 0.0
    %2210 = vmatprep.subr.mxu0 0.0
    %2211 = vmatpush1.xpose.msra.mxu0 0.0
    %2212 = vmatprep.subr.mxu0 0.0
    %2213 = vmatpush1.xpose.msra.mxu0 0.0
    %2214 = vmatprep.subr.mxu0 0.0
    %2215 = vmatpush1.xpose.msra.mxu0 0.0
    %2216 = vmatprep.subr.mxu0 0.0
    %2217 = vmatpush1.xpose.msra.mxu0 0.0
    %2218 = vmatprep.mubr.f32.mxu0 0.0
    %2219 = vmatmul.mubr.f32.gmra.mrb[0].mxu0 %v2146
    %v2220 = vpop.f32.mrb[0].mxu0
    %v2221 = vadd.f32 0.0, %v2220
    %v2222 = vpop.f32.mrb[0].mxu0
    %2223 = vdwg.mxu0
    %v2225 = vsel %vm1986, %v749, 0
    %v2228 = vsel %vm1986, %v1197, 0
    %v2231 = vsel %vm1986, %v1265, 0
    %2233 = vmatprep.subr.mxu0 0.0
    %2234 = vmatpush1.xpose.msra.mxu0 %v2228
    %2235 = vmatprep.subr.mxu0 0.0
    %2236 = vmatpush1.xpose.msra.mxu0 %v2231
    %2237 = vmatprep.subr.mxu0 0.0
    %2238 = vmatpush1.xpose.msra.mxu0 0.0
    %2239 = vmatprep.subr.mxu0 0.0
    %2240 = vmatpush1.xpose.msra.mxu0 0.0
    %2241 = vmatprep.subr.mxu0 0.0
    %2242 = vmatpush1.xpose.msra.mxu0 0.0
    %2243 = vmatprep.subr.mxu0 0.0
    %2244 = vmatpush1.xpose.msra.mxu0 0.0
    %2245 = vmatprep.subr.mxu0 0.0
    %2246 = vmatpush1.xpose.msra.mxu0 0.0
    %2247 = vmatprep.subr.mxu0 0.0
    %2248 = vmatpush1.xpose.msra.mxu0 0.0
    %2249 = vmatprep.subr.mxu0 0.0
    %2250 = vmatpush1.xpose.msra.mxu0 0.0
    %2251 = vmatprep.subr.mxu0 0.0
    %2252 = vmatpush1.xpose.msra.mxu0 0.0
    %2253 = vmatprep.subr.mxu0 0.0
    %2254 = vmatpush1.xpose.msra.mxu0 0.0
    %2255 = vmatprep.subr.mxu0 0.0
    %2256 = vmatpush1.xpose.msra.mxu0 0.0
    %2257 = vmatprep.subr.mxu0 0.0
    %2258 = vmatpush1.xpose.msra.mxu0 0.0
    %2259 = vmatprep.subr.mxu0 0.0
    %2260 = vmatpush1.xpose.msra.mxu0 0.0
    %2261 = vmatprep.subr.mxu0 0.0
    %2262 = vmatpush1.xpose.msra.mxu0 0.0
    %2263 = vmatprep.subr.mxu0 0.0
    %2264 = vmatpush1.xpose.msra.mxu0 0.0
    %2265 = vmatprep.subr.mxu0 0.0
    %2266 = vmatpush1.xpose.msra.mxu0 0.0
    %2267 = vmatprep.subr.mxu0 0.0
    %2268 = vmatpush1.xpose.msra.mxu0 0.0
    %2269 = vmatprep.subr.mxu0 0.0
    %2270 = vmatpush1.xpose.msra.mxu0 0.0
    %2271 = vmatprep.subr.mxu0 0.0
    %2272 = vmatpush1.xpose.msra.mxu0 0.0
    %2273 = vmatprep.subr.mxu0 0.0
    %2274 = vmatpush1.xpose.msra.mxu0 0.0
    %2275 = vmatprep.subr.mxu0 0.0
    %2276 = vmatpush1.xpose.msra.mxu0 0.0
    %2277 = vmatprep.subr.mxu0 0.0
    %2278 = vmatpush1.xpose.msra.mxu0 0.0
    %2279 = vmatprep.subr.mxu0 0.0
    %2280 = vmatpush1.xpose.msra.mxu0 0.0
    %2281 = vmatprep.subr.mxu0 0.0
    %2282 = vmatpush1.xpose.msra.mxu0 0.0
    %2283 = vmatprep.subr.mxu0 0.0
    %2284 = vmatpush1.xpose.msra.mxu0 0.0
    %2285 = vmatprep.subr.mxu0 0.0
    %2286 = vmatpush1.xpose.msra.mxu0 0.0
    %2287 = vmatprep.subr.mxu0 0.0
    %2288 = vmatpush1.xpose.msra.mxu0 0.0
    %2289 = vmatprep.subr.mxu0 0.0
    %2290 = vmatpush1.xpose.msra.mxu0 0.0
    %2291 = vmatprep.subr.mxu0 0.0
    %2292 = vmatpush1.xpose.msra.mxu0 0.0
    %2293 = vmatprep.subr.mxu0 0.0
    %2294 = vmatpush1.xpose.msra.mxu0 0.0
    %2295 = vmatprep.subr.mxu0 0.0
    %2296 = vmatpush1.xpose.msra.mxu0 0.0
    %2297 = vmatprep.mubr.f32.mxu0 0.0
    %2298 = vmatmul.mubr.f32.gmra.mrb[0].mxu0 %v2225
    %v2299 = vpop.f32.mrb[0].mxu0
    %v2300 = vadd.f32 0.0, %v2299
    %v2301 = vpop.f32.mrb[0].mxu0
    %2302 = vdwg.mxu0
    %v2304 = vsel %vm1986, %v814, 0
    %v2307 = vsel %vm1986, %v1330, 0
    %v2310 = vsel %vm1986, %v1398, 0
    %2312 = vmatprep.subr.mxu0 0.0
    %2313 = vmatpush1.xpose.msra.mxu0 %v2307
    %2314 = vmatprep.subr.mxu0 0.0
    %2315 = vmatpush1.xpose.msra.mxu0 %v2310
    %2316 = vmatprep.subr.mxu0 0.0
    %2317 = vmatpush1.xpose.msra.mxu0 0.0
    %2318 = vmatprep.subr.mxu0 0.0
    %2319 = vmatpush1.xpose.msra.mxu0 0.0
    %2320 = vmatprep.subr.mxu0 0.0
    %2321 = vmatpush1.xpose.msra.mxu0 0.0
    %2322 = vmatprep.subr.mxu0 0.0
    %2323 = vmatpush1.xpose.msra.mxu0 0.0
    %2324 = vmatprep.subr.mxu0 0.0
    %2325 = vmatpush1.xpose.msra.mxu0 0.0
    %2326 = vmatprep.subr.mxu0 0.0
    %2327 = vmatpush1.xpose.msra.mxu0 0.0
    %2328 = vmatprep.subr.mxu0 0.0
    %2329 = vmatpush1.xpose.msra.mxu0 0.0
    %2330 = vmatprep.subr.mxu0 0.0
    %2331 = vmatpush1.xpose.msra.mxu0 0.0
    %2332 = vmatprep.subr.mxu0 0.0
    %2333 = vmatpush1.xpose.msra.mxu0 0.0
    %2334 = vmatprep.subr.mxu0 0.0
    %2335 = vmatpush1.xpose.msra.mxu0 0.0
    %2336 = vmatprep.subr.mxu0 0.0
    %2337 = vmatpush1.xpose.msra.mxu0 0.0
    %2338 = vmatprep.subr.mxu0 0.0
    %2339 = vmatpush1.xpose.msra.mxu0 0.0
    %2340 = vmatprep.subr.mxu0 0.0
    %2341 = vmatpush1.xpose.msra.mxu0 0.0
    %2342 = vmatprep.subr.mxu0 0.0
    %2343 = vmatpush1.xpose.msra.mxu0 0.0
    %2344 = vmatprep.subr.mxu0 0.0
    %2345 = vmatpush1.xpose.msra.mxu0 0.0
    %2346 = vmatprep.subr.mxu0 0.0
    %2347 = vmatpush1.xpose.msra.mxu0 0.0
    %2348 = vmatprep.subr.mxu0 0.0
    %2349 = vmatpush1.xpose.msra.mxu0 0.0
    %2350 = vmatprep.subr.mxu0 0.0
    %2351 = vmatpush1.xpose.msra.mxu0 0.0
    %2352 = vmatprep.subr.mxu0 0.0
    %2353 = vmatpush1.xpose.msra.mxu0 0.0
    %2354 = vmatprep.subr.mxu0 0.0
    %2355 = vmatpush1.xpose.msra.mxu0 0.0
    %2356 = vmatprep.subr.mxu0 0.0
    %2357 = vmatpush1.xpose.msra.mxu0 0.0
    %2358 = vmatprep.subr.mxu0 0.0
    %2359 = vmatpush1.xpose.msra.mxu0 0.0
    %2360 = vmatprep.subr.mxu0 0.0
    %2361 = vmatpush1.xpose.msra.mxu0 0.0
    %2362 = vmatprep.subr.mxu0 0.0
    %2363 = vmatpush1.xpose.msra.mxu0 0.0
    %2364 = vmatprep.subr.mxu0 0.0
    %2365 = vmatpush1.xpose.msra.mxu0 0.0
    %2366 = vmatprep.subr.mxu0 0.0
    %2367 = vmatpush1.xpose.msra.mxu0 0.0
    %2368 = vmatprep.subr.mxu0 0.0
    %2369 = vmatpush1.xpose.msra.mxu0 0.0
    %2370 = vmatprep.subr.mxu0 0.0
    %2371 = vmatpush1.xpose.msra.mxu0 0.0
    %2372 = vmatprep.subr.mxu0 0.0
    %2373 = vmatpush1.xpose.msra.mxu0 0.0
    %2374 = vmatprep.subr.mxu0 0.0
    %2375 = vmatpush1.xpose.msra.mxu0 0.0
    %2376 = vmatprep.mubr.f32.mxu0 0.0
    %2377 = vmatmul.mubr.f32.gmra.mrb[0].mxu0 %v2304
    %v2378 = vpop.f32.mrb[0].mxu0
    %v2379 = vadd.f32 0.0, %v2378
    %v2380 = vpop.f32.mrb[0].mxu0
    %2381 = vdwg.mxu0
    %v2383 = vsel %vm1986, %v815, 0
    %v2386 = vsel %vm1986, %v1331, 0
    %v2389 = vsel %vm1986, %v1399, 0
    %2391 = vmatprep.subr.mxu0 0.0
    %2392 = vmatpush1.xpose.msra.mxu0 %v2386
    %2393 = vmatprep.subr.mxu0 0.0
    %2394 = vmatpush1.xpose.msra.mxu0 %v2389
    %2395 = vmatprep.subr.mxu0 0.0
    %2396 = vmatpush1.xpose.msra.mxu0 0.0
    %2397 = vmatprep.subr.mxu0 0.0
    %2398 = vmatpush1.xpose.msra.mxu0 0.0
    %2399 = vmatprep.subr.mxu0 0.0
    %2400 = vmatpush1.xpose.msra.mxu0 0.0
    %2401 = vmatprep.subr.mxu0 0.0
    %2402 = vmatpush1.xpose.msra.mxu0 0.0
    %2403 = vmatprep.subr.mxu0 0.0
    %2404 = vmatpush1.xpose.msra.mxu0 0.0
    %2405 = vmatprep.subr.mxu0 0.0
    %2406 = vmatpush1.xpose.msra.mxu0 0.0
    %2407 = vmatprep.subr.mxu0 0.0
    %2408 = vmatpush1.xpose.msra.mxu0 0.0
    %2409 = vmatprep.subr.mxu0 0.0
    %2410 = vmatpush1.xpose.msra.mxu0 0.0
    %2411 = vmatprep.subr.mxu0 0.0
    %2412 = vmatpush1.xpose.msra.mxu0 0.0
    %2413 = vmatprep.subr.mxu0 0.0
    %2414 = vmatpush1.xpose.msra.mxu0 0.0
    %2415 = vmatprep.subr.mxu0 0.0
    %2416 = vmatpush1.xpose.msra.mxu0 0.0
    %2417 = vmatprep.subr.mxu0 0.0
    %2418 = vmatpush1.xpose.msra.mxu0 0.0
    %2419 = vmatprep.subr.mxu0 0.0
    %2420 = vmatpush1.xpose.msra.mxu0 0.0
    %2421 = vmatprep.subr.mxu0 0.0
    %2422 = vmatpush1.xpose.msra.mxu0 0.0
    %2423 = vmatprep.subr.mxu0 0.0
    %2424 = vmatpush1.xpose.msra.mxu0 0.0
    %2425 = vmatprep.subr.mxu0 0.0
    %2426 = vmatpush1.xpose.msra.mxu0 0.0
    %2427 = vmatprep.subr.mxu0 0.0
    %2428 = vmatpush1.xpose.msra.mxu0 0.0
    %2429 = vmatprep.subr.mxu0 0.0
    %2430 = vmatpush1.xpose.msra.mxu0 0.0
    %2431 = vmatprep.subr.mxu0 0.0
    %2432 = vmatpush1.xpose.msra.mxu0 0.0
    %2433 = vmatprep.subr.mxu0 0.0
    %2434 = vmatpush1.xpose.msra.mxu0 0.0
    %2435 = vmatprep.subr.mxu0 0.0
    %2436 = vmatpush1.xpose.msra.mxu0 0.0
    %2437 = vmatprep.subr.mxu0 0.0
    %2438 = vmatpush1.xpose.msra.mxu0 0.0
    %2439 = vmatprep.subr.mxu0 0.0
    %2440 = vmatpush1.xpose.msra.mxu0 0.0
    %2441 = vmatprep.subr.mxu0 0.0
    %2442 = vmatpush1.xpose.msra.mxu0 0.0
    %2443 = vmatprep.subr.mxu0 0.0
    %2444 = vmatpush1.xpose.msra.mxu0 0.0
    %2445 = vmatprep.subr.mxu0 0.0
    %2446 = vmatpush1.xpose.msra.mxu0 0.0
    %2447 = vmatprep.subr.mxu0 0.0
    %2448 = vmatpush1.xpose.msra.mxu0 0.0
    %2449 = vmatprep.subr.mxu0 0.0
    %2450 = vmatpush1.xpose.msra.mxu0 0.0
    %2451 = vmatprep.subr.mxu0 0.0
    %2452 = vmatpush1.xpose.msra.mxu0 0.0
    %2453 = vmatprep.subr.mxu0 0.0
    %2454 = vmatpush1.xpose.msra.mxu0 0.0
    %2455 = vmatprep.mubr.f32.mxu0 0.0
    %2456 = vmatmul.mubr.f32.gmra.mrb[0].mxu0 %v2383
    %v2457 = vpop.f32.mrb[0].mxu0
    %v2458 = vadd.f32 0.0, %v2457
    %v2459 = vpop.f32.mrb[0].mxu0
    %2460 = vdwg.mxu0
    %v2462 = vsel %vm1986, %v816, 0
    %v2465 = vsel %vm1986, %v1332, 0
    %v2468 = vsel %vm1986, %v1400, 0
    %2470 = vmatprep.subr.mxu0 0.0
    %2471 = vmatpush1.xpose.msra.mxu0 %v2465
    %2472 = vmatprep.subr.mxu0 0.0
    %2473 = vmatpush1.xpose.msra.mxu0 %v2468
    %2474 = vmatprep.subr.mxu0 0.0
    %2475 = vmatpush1.xpose.msra.mxu0 0.0
    %2476 = vmatprep.subr.mxu0 0.0
    %2477 = vmatpush1.xpose.msra.mxu0 0.0
    %2478 = vmatprep.subr.mxu0 0.0
    %2479 = vmatpush1.xpose.msra.mxu0 0.0
    %2480 = vmatprep.subr.mxu0 0.0
    %2481 = vmatpush1.xpose.msra.mxu0 0.0
    %2482 = vmatprep.subr.mxu0 0.0
    %2483 = vmatpush1.xpose.msra.mxu0 0.0
    %2484 = vmatprep.subr.mxu0 0.0
    %2485 = vmatpush1.xpose.msra.mxu0 0.0
    %2486 = vmatprep.subr.mxu0 0.0
    %2487 = vmatpush1.xpose.msra.mxu0 0.0
    %2488 = vmatprep.subr.mxu0 0.0
    %2489 = vmatpush1.xpose.msra.mxu0 0.0
    %2490 = vmatprep.subr.mxu0 0.0
    %2491 = vmatpush1.xpose.msra.mxu0 0.0
    %2492 = vmatprep.subr.mxu0 0.0
    %2493 = vmatpush1.xpose.msra.mxu0 0.0
    %2494 = vmatprep.subr.mxu0 0.0
    %2495 = vmatpush1.xpose.msra.mxu0 0.0
    %2496 = vmatprep.subr.mxu0 0.0
    %2497 = vmatpush1.xpose.msra.mxu0 0.0
    %2498 = vmatprep.subr.mxu0 0.0
    %2499 = vmatpush1.xpose.msra.mxu0 0.0
    %2500 = vmatprep.subr.mxu0 0.0
    %2501 = vmatpush1.xpose.msra.mxu0 0.0
    %2502 = vmatprep.subr.mxu0 0.0
    %2503 = vmatpush1.xpose.msra.mxu0 0.0
    %2504 = vmatprep.subr.mxu0 0.0
    %2505 = vmatpush1.xpose.msra.mxu0 0.0
    %2506 = vmatprep.subr.mxu0 0.0
    %2507 = vmatpush1.xpose.msra.mxu0 0.0
    %2508 = vmatprep.subr.mxu0 0.0
    %2509 = vmatpush1.xpose.msra.mxu0 0.0
    %2510 = vmatprep.subr.mxu0 0.0
    %2511 = vmatpush1.xpose.msra.mxu0 0.0
    %2512 = vmatprep.subr.mxu0 0.0
    %2513 = vmatpush1.xpose.msra.mxu0 0.0
    %2514 = vmatprep.subr.mxu0 0.0
    %2515 = vmatpush1.xpose.msra.mxu0 0.0
    %2516 = vmatprep.subr.mxu0 0.0
    %2517 = vmatpush1.xpose.msra.mxu0 0.0
    %2518 = vmatprep.subr.mxu0 0.0
    %2519 = vmatpush1.xpose.msra.mxu0 0.0
    %2520 = vmatprep.subr.mxu0 0.0
    %2521 = vmatpush1.xpose.msra.mxu0 0.0
    %2522 = vmatprep.subr.mxu0 0.0
    %2523 = vmatpush1.xpose.msra.mxu0 0.0
    %2524 = vmatprep.subr.mxu0 0.0
    %2525 = vmatpush1.xpose.msra.mxu0 0.0
    %2526 = vmatprep.subr.mxu0 0.0
    %2527 = vmatpush1.xpose.msra.mxu0 0.0
    %2528 = vmatprep.subr.mxu0 0.0
    %2529 = vmatpush1.xpose.msra.mxu0 0.0
    %2530 = vmatprep.subr.mxu0 0.0
    %2531 = vmatpush1.xpose.msra.mxu0 0.0
    %2532 = vmatprep.subr.mxu0 0.0
    %2533 = vmatpush1.xpose.msra.mxu0 0.0
    %2534 = vmatprep.mubr.f32.mxu0 0.0
    %2535 = vmatmul.mubr.f32.gmra.mrb[0].mxu0 %v2462
    %v2536 = vpop.f32.mrb[0].mxu0
    %v2537 = vadd.f32 0.0, %v2536
    %v2538 = vpop.f32.mrb[0].mxu0
    %2539 = vdwg.mxu0
    %v2541 = vsel %vm1986, %v817, 0
    %v2544 = vsel %vm1986, %v1333, 0
    %v2547 = vsel %vm1986, %v1401, 0
    %2549 = vmatprep.subr.mxu0 0.0
    %2550 = vmatpush1.xpose.msra.mxu0 %v2544
    %2551 = vmatprep.subr.mxu0 0.0
    %2552 = vmatpush1.xpose.msra.mxu0 %v2547
    %2553 = vmatprep.subr.mxu0 0.0
    %2554 = vmatpush1.xpose.msra.mxu0 0.0
    %2555 = vmatprep.subr.mxu0 0.0
    %2556 = vmatpush1.xpose.msra.mxu0 0.0
    %2557 = vmatprep.subr.mxu0 0.0
    %2558 = vmatpush1.xpose.msra.mxu0 0.0
    %2559 = vmatprep.subr.mxu0 0.0
    %2560 = vmatpush1.xpose.msra.mxu0 0.0
    %2561 = vmatprep.subr.mxu0 0.0
    %2562 = vmatpush1.xpose.msra.mxu0 0.0
    %2563 = vmatprep.subr.mxu0 0.0
    %2564 = vmatpush1.xpose.msra.mxu0 0.0
    %2565 = vmatprep.subr.mxu0 0.0
    %2566 = vmatpush1.xpose.msra.mxu0 0.0
    %2567 = vmatprep.subr.mxu0 0.0
    %2568 = vmatpush1.xpose.msra.mxu0 0.0
    %2569 = vmatprep.subr.mxu0 0.0
    %2570 = vmatpush1.xpose.msra.mxu0 0.0
    %2571 = vmatprep.subr.mxu0 0.0
    %2572 = vmatpush1.xpose.msra.mxu0 0.0
    %2573 = vmatprep.subr.mxu0 0.0
    %2574 = vmatpush1.xpose.msra.mxu0 0.0
    %2575 = vmatprep.subr.mxu0 0.0
    %2576 = vmatpush1.xpose.msra.mxu0 0.0
    %2577 = vmatprep.subr.mxu0 0.0
    %2578 = vmatpush1.xpose.msra.mxu0 0.0
    %2579 = vmatprep.subr.mxu0 0.0
    %2580 = vmatpush1.xpose.msra.mxu0 0.0
    %2581 = vmatprep.subr.mxu0 0.0
    %2582 = vmatpush1.xpose.msra.mxu0 0.0
    %2583 = vmatprep.subr.mxu0 0.0
    %2584 = vmatpush1.xpose.msra.mxu0 0.0
    %2585 = vmatprep.subr.mxu0 0.0
    %2586 = vmatpush1.xpose.msra.mxu0 0.0
    %2587 = vmatprep.subr.mxu0 0.0
    %2588 = vmatpush1.xpose.msra.mxu0 0.0
    %2589 = vmatprep.subr.mxu0 0.0
    %2590 = vmatpush1.xpose.msra.mxu0 0.0
    %2591 = vmatprep.subr.mxu0 0.0
    %2592 = vmatpush1.xpose.msra.mxu0 0.0
    %2593 = vmatprep.subr.mxu0 0.0
    %2594 = vmatpush1.xpose.msra.mxu0 0.0
    %2595 = vmatprep.subr.mxu0 0.0
    %2596 = vmatpush1.xpose.msra.mxu0 0.0
    %2597 = vmatprep.subr.mxu0 0.0
    %2598 = vmatpush1.xpose.msra.mxu0 0.0
    %2599 = vmatprep.subr.mxu0 0.0
    %2600 = vmatpush1.xpose.msra.mxu0 0.0
    %2601 = vmatprep.subr.mxu0 0.0
    %2602 = vmatpush1.xpose.msra.mxu0 0.0
    %2603 = vmatprep.subr.mxu0 0.0
    %2604 = vmatpush1.xpose.msra.mxu0 0.0
    %2605 = vmatprep.subr.mxu0 0.0
    %2606 = vmatpush1.xpose.msra.mxu0 0.0
    %2607 = vmatprep.subr.mxu0 0.0
    %2608 = vmatpush1.xpose.msra.mxu0 0.0
    %2609 = vmatprep.subr.mxu0 0.0
    %2610 = vmatpush1.xpose.msra.mxu0 0.0
    %2611 = vmatprep.subr.mxu0 0.0
    %2612 = vmatpush1.xpose.msra.mxu0 0.0
    %2613 = vmatprep.mubr.f32.mxu0 0.0
    %2614 = vmatmul.mubr.f32.gmra.mrb[0].mxu0 %v2541
    %v2615 = vpop.f32.mrb[0].mxu0
    %v2616 = vadd.f32 0.0, %v2615
    %v2617 = vpop.f32.mrb[0].mxu0
    %2618 = vdwg.mxu0
    %vm2619 = vcmask 130048
    %v2620 = vsel %vm2619, %v2063, -inf
    %2621 = vmax.xlane.f32.xlu0 %v2620
    %v2622 = vpop.xlane.xlu0 %2621
    %v2623 = vsel %vm2619, %v2142, -inf
    %2624 = vmax.xlane.f32.xlu0 %v2623
    %v2625 = vpop.xlane.xlu0 %2624
    %v2626 = vsel %vm2619, %v2221, -inf
    %2627 = vmax.xlane.f32.xlu0 %v2626
    %v2628 = vpop.xlane.xlu0 %2627
    %v2629 = vsel %vm2619, %v2300, -inf
    %2630 = vmax.xlane.f32.xlu0 %v2629
    %v2631 = vpop.xlane.xlu0 %2630
    %v2632 = vsel %vm2619, %v2379, -inf
    %2633 = vmax.xlane.f32.xlu0 %v2632
    %v2634 = vpop.xlane.xlu0 %2633
    %v2635 = vsel %vm2619, %v2458, -inf
    %2636 = vmax.xlane.f32.xlu0 %v2635
    %v2637 = vpop.xlane.xlu0 %2636
    %v2638 = vsel %vm2619, %v2537, -inf
    %2639 = vmax.xlane.f32.xlu0 %v2638
    %v2640 = vpop.xlane.xlu0 %2639
    %v2641 = vsel %vm2619, %v2616, -inf
    %2642 = vmax.xlane.f32.xlu0 %v2641
    %v2643 = vpop.xlane.xlu0 %2642
    %v2644 = vsub.f32 %v2063, %v2622
    %v2645 = vsub.f32 %v2142, %v2625
    %v2646 = vsub.f32 %v2221, %v2628
    %v2647 = vsub.f32 %v2300, %v2631
    %v2648 = vsub.f32 %v2379, %v2634
    %v2649 = vsub.f32 %v2458, %v2637
    %v2650 = vsub.f32 %v2537, %v2640
    %v2651 = vsub.f32 %v2616, %v2643
    %v2652 = vmul.f32 %v2644, 1.442695
    %v2653 = vpow.pop %v2652
    %v2654 = vmul.f32 %v2645, 1.442695
    %v2655 = vpow.pop %v2654
    %v2656 = vmul.f32 %v2646, 1.442695
    %v2657 = vpow.pop %v2656
    %v2658 = vmul.f32 %v2647, 1.442695
    %v2659 = vpow.pop %v2658
    %v2660 = vmul.f32 %v2648, 1.442695
    %v2661 = vpow.pop %v2660
    %v2662 = vmul.f32 %v2649, 1.442695
    %v2663 = vpow.pop %v2662
    %v2664 = vmul.f32 %v2650, 1.442695
    %v2665 = vpow.pop %v2664
    %v2666 = vmul.f32 %v2651, 1.442695
    %v2667 = vpow.pop %v2666
    %v2668 = vsel %vm2619, %v2653, 0.0
    %2669 = vadd.xlane.f32.xlu0 %v2668
    %v2670 = vpop.xlane.xlu0 %2669
    %v2671 = vsel %vm2619, %v2655, 0.0
    %2672 = vadd.xlane.f32.xlu0 %v2671
    %v2673 = vpop.xlane.xlu0 %2672
    %v2674 = vsel %vm2619, %v2657, 0.0
    %2675 = vadd.xlane.f32.xlu0 %v2674
    %v2676 = vpop.xlane.xlu0 %2675
    %v2677 = vsel %vm2619, %v2659, 0.0
    %2678 = vadd.xlane.f32.xlu0 %v2677
    %v2679 = vpop.xlane.xlu0 %2678
    %v2680 = vsel %vm2619, %v2661, 0.0
    %2681 = vadd.xlane.f32.xlu0 %v2680
    %v2682 = vpop.xlane.xlu0 %2681
    %v2683 = vsel %vm2619, %v2663, 0.0
    %2684 = vadd.xlane.f32.xlu0 %v2683
    %v2685 = vpop.xlane.xlu0 %2684
    %v2686 = vsel %vm2619, %v2665, 0.0
    %2687 = vadd.xlane.f32.xlu0 %v2686
    %v2688 = vpop.xlane.xlu0 %2687
    %v2689 = vsel %vm2619, %v2667, 0.0
    %2690 = vadd.xlane.f32.xlu0 %v2689
    %v2691 = vpop.xlane.xlu0 %2690
    %v2693 = vsel %vm2619, %v2653, 0
    %2695 = vmatprep.subr.mxu0 0.0
    %2696 = vmatpush1.msra.mxu0 %v1778
    %2697 = vmatprep.subr.mxu0 0.0
    %2698 = vmatpush1.msra.mxu0 %v1846
    %2699 = vmatprep.subr.mxu0 0.0
    %2700 = vmatpush1.msra.mxu0 0.0
    %2701 = vmatprep.subr.mxu0 0.0
    %2702 = vmatpush1.msra.mxu0 0.0
    %2703 = vmatprep.subr.mxu0 0.0
    %2704 = vmatpush1.msra.mxu0 0.0
    %2705 = vmatprep.subr.mxu0 0.0
    %2706 = vmatpush1.msra.mxu0 0.0
    %2707 = vmatprep.subr.mxu0 0.0
    %2708 = vmatpush1.msra.mxu0 0.0
    %2709 = vmatprep.subr.mxu0 0.0
    %2710 = vmatpush1.msra.mxu0 0.0
    %2711 = vmatprep.subr.mxu0 0.0
    %2712 = vmatpush1.msra.mxu0 0.0
    %2713 = vmatprep.subr.mxu0 0.0
    %2714 = vmatpush1.msra.mxu0 0.0
    %2715 = vmatprep.subr.mxu0 0.0
    %2716 = vmatpush1.msra.mxu0 0.0
    %2717 = vmatprep.subr.mxu0 0.0
    %2718 = vmatpush1.msra.mxu0 0.0
    %2719 = vmatprep.subr.mxu0 0.0
    %2720 = vmatpush1.msra.mxu0 0.0
    %2721 = vmatprep.subr.mxu0 0.0
    %2722 = vmatpush1.msra.mxu0 0.0
    %2723 = vmatprep.subr.mxu0 0.0
    %2724 = vmatpush1.msra.mxu0 0.0
    %2725 = vmatprep.subr.mxu0 0.0
    %2726 = vmatpush1.msra.mxu0 0.0
    %2727 = vmatprep.subr.mxu0 0.0
    %2728 = vmatpush1.msra.mxu0 0.0
    %2729 = vmatprep.subr.mxu0 0.0
    %2730 = vmatpush1.msra.mxu0 0.0
    %2731 = vmatprep.subr.mxu0 0.0
    %2732 = vmatpush1.msra.mxu0 0.0
    %2733 = vmatprep.subr.mxu0 0.0
    %2734 = vmatpush1.msra.mxu0 0.0
    %2735 = vmatprep.subr.mxu0 0.0
    %2736 = vmatpush1.msra.mxu0 0.0
    %2737 = vmatprep.subr.mxu0 0.0
    %2738 = vmatpush1.msra.mxu0 0.0
    %2739 = vmatprep.subr.mxu0 0.0
    %2740 = vmatpush1.msra.mxu0 0.0
    %2741 = vmatprep.subr.mxu0 0.0
    %2742 = vmatpush1.msra.mxu0 0.0
    %2743 = vmatprep.subr.mxu0 0.0
    %2744 = vmatpush1.msra.mxu0 0.0
    %2745 = vmatprep.subr.mxu0 0.0
    %2746 = vmatpush1.msra.mxu0 0.0
    %2747 = vmatprep.subr.mxu0 0.0
    %2748 = vmatpush1.msra.mxu0 0.0
    %2749 = vmatprep.subr.mxu0 0.0
    %2750 = vmatpush1.msra.mxu0 0.0
    %2751 = vmatprep.subr.mxu0 0.0
    %2752 = vmatpush1.msra.mxu0 0.0
    %2753 = vmatprep.subr.mxu0 0.0
    %2754 = vmatpush1.msra.mxu0 0.0
    %2755 = vmatprep.subr.mxu0 0.0
    %2756 = vmatpush1.msra.mxu0 0.0
    %2757 = vmatprep.subr.mxu0 0.0
    %2758 = vmatpush1.msra.mxu0 0.0
    %2759 = vmatprep.mubr.f32.mxu0 0.0
    %2760 = vmatmul.mubr.f32.gmra.mrb[0].mxu0 %v2693
    %v2761 = vpop.f32.mrb[0].mxu0
    %v2762 = vadd.f32 0.0, %v2761
    %v2763 = vpop.f32.mrb[0].mxu0
    %2764 = vdwg.mxu0
    %v2766 = vsel %vm2619, %v2655, 0
    %2768 = vmatprep.subr.mxu0 0.0
    %2769 = vmatpush1.msra.mxu0 %v1779
    %2770 = vmatprep.subr.mxu0 0.0
    %2771 = vmatpush1.msra.mxu0 %v1847
    %2772 = vmatprep.subr.mxu0 0.0
    %2773 = vmatpush1.msra.mxu0 0.0
    %2774 = vmatprep.subr.mxu0 0.0
    %2775 = vmatpush1.msra.mxu0 0.0
    %2776 = vmatprep.subr.mxu0 0.0
    %2777 = vmatpush1.msra.mxu0 0.0
    %2778 = vmatprep.subr.mxu0 0.0
    %2779 = vmatpush1.msra.mxu0 0.0
    %2780 = vmatprep.subr.mxu0 0.0
    %2781 = vmatpush1.msra.mxu0 0.0
    %2782 = vmatprep.subr.mxu0 0.0
    %2783 = vmatpush1.msra.mxu0 0.0
    %2784 = vmatprep.subr.mxu0 0.0
    %2785 = vmatpush1.msra.mxu0 0.0
    %2786 = vmatprep.subr.mxu0 0.0
    %2787 = vmatpush1.msra.mxu0 0.0
    %2788 = vmatprep.subr.mxu0 0.0
    %2789 = vmatpush1.msra.mxu0 0.0
    %2790 = vmatprep.subr.mxu0 0.0
    %2791 = vmatpush1.msra.mxu0 0.0
    %2792 = vmatprep.subr.mxu0 0.0
    %2793 = vmatpush1.msra.mxu0 0.0
    %2794 = vmatprep.subr.mxu0 0.0
    %2795 = vmatpush1.msra.mxu0 0.0
    %2796 = vmatprep.subr.mxu0 0.0
    %2797 = vmatpush1.msra.mxu0 0.0
    %2798 = vmatprep.subr.mxu0 0.0
    %2799 = vmatpush1.msra.mxu0 0.0
    %2800 = vmatprep.subr.mxu0 0.0
    %2801 = vmatpush1.msra.mxu0 0.0
    %2802 = vmatprep.subr.mxu0 0.0
    %2803 = vmatpush1.msra.mxu0 0.0
    %2804 = vmatprep.subr.mxu0 0.0
    %2805 = vmatpush1.msra.mxu0 0.0
    %2806 = vmatprep.subr.mxu0 0.0
    %2807 = vmatpush1.msra.mxu0 0.0
    %2808 = vmatprep.subr.mxu0 0.0
    %2809 = vmatpush1.msra.mxu0 0.0
    %2810 = vmatprep.subr.mxu0 0.0
    %2811 = vmatpush1.msra.mxu0 0.0
    %2812 = vmatprep.subr.mxu0 0.0
    %2813 = vmatpush1.msra.mxu0 0.0
    %2814 = vmatprep.subr.mxu0 0.0
    %2815 = vmatpush1.msra.mxu0 0.0
    %2816 = vmatprep.subr.mxu0 0.0
    %2817 = vmatpush1.msra.mxu0 0.0
    %2818 = vmatprep.subr.mxu0 0.0
    %2819 = vmatpush1.msra.mxu0 0.0
    %2820 = vmatprep.subr.mxu0 0.0
    %2821 = vmatpush1.msra.mxu0 0.0
    %2822 = vmatprep.subr.mxu0 0.0
    %2823 = vmatpush1.msra.mxu0 0.0
    %2824 = vmatprep.subr.mxu0 0.0
    %2825 = vmatpush1.msra.mxu0 0.0
    %2826 = vmatprep.subr.mxu0 0.0
    %2827 = vmatpush1.msra.mxu0 0.0
    %2828 = vmatprep.subr.mxu0 0.0
    %2829 = vmatpush1.msra.mxu0 0.0
    %2830 = vmatprep.subr.mxu0 0.0
    %2831 = vmatpush1.msra.mxu0 0.0
    %2832 = vmatprep.mubr.f32.mxu0 0.0
    %2833 = vmatmul.mubr.f32.gmra.mrb[0].mxu0 %v2766
    %v2834 = vpop.f32.mrb[0].mxu0
    %v2835 = vadd.f32 0.0, %v2834
    %v2836 = vpop.f32.mrb[0].mxu0
    %2837 = vdwg.mxu0
    %v2839 = vsel %vm2619, %v2657, 0
    %2841 = vmatprep.subr.mxu0 0.0
    %2842 = vmatpush1.msra.mxu0 %v1780
    %2843 = vmatprep.subr.mxu0 0.0
    %2844 = vmatpush1.msra.mxu0 %v1848
    %2845 = vmatprep.subr.mxu0 0.0
    %2846 = vmatpush1.msra.mxu0 0.0
    %2847 = vmatprep.subr.mxu0 0.0
    %2848 = vmatpush1.msra.mxu0 0.0
    %2849 = vmatprep.subr.mxu0 0.0
    %2850 = vmatpush1.msra.mxu0 0.0
    %2851 = vmatprep.subr.mxu0 0.0
    %2852 = vmatpush1.msra.mxu0 0.0
    %2853 = vmatprep.subr.mxu0 0.0
    %2854 = vmatpush1.msra.mxu0 0.0
    %2855 = vmatprep.subr.mxu0 0.0
    %2856 = vmatpush1.msra.mxu0 0.0
    %2857 = vmatprep.subr.mxu0 0.0
    %2858 = vmatpush1.msra.mxu0 0.0
    %2859 = vmatprep.subr.mxu0 0.0
    %2860 = vmatpush1.msra.mxu0 0.0
    %2861 = vmatprep.subr.mxu0 0.0
    %2862 = vmatpush1.msra.mxu0 0.0
    %2863 = vmatprep.subr.mxu0 0.0
    %2864 = vmatpush1.msra.mxu0 0.0
    %2865 = vmatprep.subr.mxu0 0.0
    %2866 = vmatpush1.msra.mxu0 0.0
    %2867 = vmatprep.subr.mxu0 0.0
    %2868 = vmatpush1.msra.mxu0 0.0
    %2869 = vmatprep.subr.mxu0 0.0
    %2870 = vmatpush1.msra.mxu0 0.0
    %2871 = vmatprep.subr.mxu0 0.0
    %2872 = vmatpush1.msra.mxu0 0.0
    %2873 = vmatprep.subr.mxu0 0.0
    %2874 = vmatpush1.msra.mxu0 0.0
    %2875 = vmatprep.subr.mxu0 0.0
    %2876 = vmatpush1.msra.mxu0 0.0
    %2877 = vmatprep.subr.mxu0 0.0
    %2878 = vmatpush1.msra.mxu0 0.0
    %2879 = vmatprep.subr.mxu0 0.0
    %2880 = vmatpush1.msra.mxu0 0.0
    %2881 = vmatprep.subr.mxu0 0.0
    %2882 = vmatpush1.msra.mxu0 0.0
    %2883 = vmatprep.subr.mxu0 0.0
    %2884 = vmatpush1.msra.mxu0 0.0
    %2885 = vmatprep.subr.mxu0 0.0
    %2886 = vmatpush1.msra.mxu0 0.0
    %2887 = vmatprep.subr.mxu0 0.0
    %2888 = vmatpush1.msra.mxu0 0.0
    %2889 = vmatprep.subr.mxu0 0.0
    %2890 = vmatpush1.msra.mxu0 0.0
    %2891 = vmatprep.subr.mxu0 0.0
    %2892 = vmatpush1.msra.mxu0 0.0
    %2893 = vmatprep.subr.mxu0 0.0
    %2894 = vmatpush1.msra.mxu0 0.0
    %2895 = vmatprep.subr.mxu0 0.0
    %2896 = vmatpush1.msra.mxu0 0.0
    %2897 = vmatprep.subr.mxu0 0.0
    %2898 = vmatpush1.msra.mxu0 0.0
    %2899 = vmatprep.subr.mxu0 0.0
    %2900 = vmatpush1.msra.mxu0 0.0
    %2901 = vmatprep.subr.mxu0 0.0
    %2902 = vmatpush1.msra.mxu0 0.0
    %2903 = vmatprep.subr.mxu0 0.0
    %2904 = vmatpush1.msra.mxu0 0.0
    %2905 = vmatprep.mubr.f32.mxu0 0.0
    %2906 = vmatmul.mubr.f32.gmra.mrb[0].mxu0 %v2839
    %v2907 = vpop.f32.mrb[0].mxu0
    %v2908 = vadd.f32 0.0, %v2907
    %v2909 = vpop.f32.mrb[0].mxu0
    %2910 = vdwg.mxu0
    %v2912 = vsel %vm2619, %v2659, 0
    %2914 = vmatprep.subr.mxu0 0.0
    %2915 = vmatpush1.msra.mxu0 %v1781
    %2916 = vmatprep.subr.mxu0 0.0
    %2917 = vmatpush1.msra.mxu0 %v1849
    %2918 = vmatprep.subr.mxu0 0.0
    %2919 = vmatpush1.msra.mxu0 0.0
    %2920 = vmatprep.subr.mxu0 0.0
    %2921 = vmatpush1.msra.mxu0 0.0
    %2922 = vmatprep.subr.mxu0 0.0
    %2923 = vmatpush1.msra.mxu0 0.0
    %2924 = vmatprep.subr.mxu0 0.0
    %2925 = vmatpush1.msra.mxu0 0.0
    %2926 = vmatprep.subr.mxu0 0.0
    %2927 = vmatpush1.msra.mxu0 0.0
    %2928 = vmatprep.subr.mxu0 0.0
    %2929 = vmatpush1.msra.mxu0 0.0
    %2930 = vmatprep.subr.mxu0 0.0
    %2931 = vmatpush1.msra.mxu0 0.0
    %2932 = vmatprep.subr.mxu0 0.0
    %2933 = vmatpush1.msra.mxu0 0.0
    %2934 = vmatprep.subr.mxu0 0.0
    %2935 = vmatpush1.msra.mxu0 0.0
    %2936 = vmatprep.subr.mxu0 0.0
    %2937 = vmatpush1.msra.mxu0 0.0
    %2938 = vmatprep.subr.mxu0 0.0
    %2939 = vmatpush1.msra.mxu0 0.0
    %2940 = vmatprep.subr.mxu0 0.0
    %2941 = vmatpush1.msra.mxu0 0.0
    %2942 = vmatprep.subr.mxu0 0.0
    %2943 = vmatpush1.msra.mxu0 0.0
    %2944 = vmatprep.subr.mxu0 0.0
    %2945 = vmatpush1.msra.mxu0 0.0
    %2946 = vmatprep.subr.mxu0 0.0
    %2947 = vmatpush1.msra.mxu0 0.0
    %2948 = vmatprep.subr.mxu0 0.0
    %2949 = vmatpush1.msra.mxu0 0.0
    %2950 = vmatprep.subr.mxu0 0.0
    %2951 = vmatpush1.msra.mxu0 0.0
    %2952 = vmatprep.subr.mxu0 0.0
    %2953 = vmatpush1.msra.mxu0 0.0
    %2954 = vmatprep.subr.mxu0 0.0
    %2955 = vmatpush1.msra.mxu0 0.0
    %2956 = vmatprep.subr.mxu0 0.0
    %2957 = vmatpush1.msra.mxu0 0.0
    %2958 = vmatprep.subr.mxu0 0.0
    %2959 = vmatpush1.msra.mxu0 0.0
    %2960 = vmatprep.subr.mxu0 0.0
    %2961 = vmatpush1.msra.mxu0 0.0
    %2962 = vmatprep.subr.mxu0 0.0
    %2963 = vmatpush1.msra.mxu0 0.0
    %2964 = vmatprep.subr.mxu0 0.0
    %2965 = vmatpush1.msra.mxu0 0.0
    %2966 = vmatprep.subr.mxu0 0.0
    %2967 = vmatpush1.msra.mxu0 0.0
    %2968 = vmatprep.subr.mxu0 0.0
    %2969 = vmatpush1.msra.mxu0 0.0
    %2970 = vmatprep.subr.mxu0 0.0
    %2971 = vmatpush1.msra.mxu0 0.0
    %2972 = vmatprep.subr.mxu0 0.0
    %2973 = vmatpush1.msra.mxu0 0.0
    %2974 = vmatprep.subr.mxu0 0.0
    %2975 = vmatpush1.msra.mxu0 0.0
    %2976 = vmatprep.subr.mxu0 0.0
    %2977 = vmatpush1.msra.mxu0 0.0
    %2978 = vmatprep.mubr.f32.mxu0 0.0
    %2979 = vmatmul.mubr.f32.gmra.mrb[0].mxu0 %v2912
    %v2980 = vpop.f32.mrb[0].mxu0
    %v2981 = vadd.f32 0.0, %v2980
    %v2982 = vpop.f32.mrb[0].mxu0
    %2983 = vdwg.mxu0
    %v2985 = vsel %vm2619, %v2661, 0
    %2987 = vmatprep.subr.mxu0 0.0
    %2988 = vmatpush1.msra.mxu0 %v1914
    %2989 = vmatprep.subr.mxu0 0.0
    %2990 = vmatpush1.msra.mxu0 %v1982
    %2991 = vmatprep.subr.mxu0 0.0
    %2992 = vmatpush1.msra.mxu0 0.0
    %2993 = vmatprep.subr.mxu0 0.0
    %2994 = vmatpush1.msra.mxu0 0.0
    %2995 = vmatprep.subr.mxu0 0.0
    %2996 = vmatpush1.msra.mxu0 0.0
    %2997 = vmatprep.subr.mxu0 0.0
    %2998 = vmatpush1.msra.mxu0 0.0
    %2999 = vmatprep.subr.mxu0 0.0
    %3000 = vmatpush1.msra.mxu0 0.0
    %3001 = vmatprep.subr.mxu0 0.0
    %3002 = vmatpush1.msra.mxu0 0.0
    %3003 = vmatprep.subr.mxu0 0.0
    %3004 = vmatpush1.msra.mxu0 0.0
    %3005 = vmatprep.subr.mxu0 0.0
    %3006 = vmatpush1.msra.mxu0 0.0
    %3007 = vmatprep.subr.mxu0 0.0
    %3008 = vmatpush1.msra.mxu0 0.0
    %3009 = vmatprep.subr.mxu0 0.0
    %3010 = vmatpush1.msra.mxu0 0.0
    %3011 = vmatprep.subr.mxu0 0.0
    %3012 = vmatpush1.msra.mxu0 0.0
    %3013 = vmatprep.subr.mxu0 0.0
    %3014 = vmatpush1.msra.mxu0 0.0
    %3015 = vmatprep.subr.mxu0 0.0
    %3016 = vmatpush1.msra.mxu0 0.0
    %3017 = vmatprep.subr.mxu0 0.0
    %3018 = vmatpush1.msra.mxu0 0.0
    %3019 = vmatprep.subr.mxu0 0.0
    %3020 = vmatpush1.msra.mxu0 0.0
    %3021 = vmatprep.subr.mxu0 0.0
    %3022 = vmatpush1.msra.mxu0 0.0
    %3023 = vmatprep.subr.mxu0 0.0
    %3024 = vmatpush1.msra.mxu0 0.0
    %3025 = vmatprep.subr.mxu0 0.0
    %3026 = vmatpush1.msra.mxu0 0.0
    %3027 = vmatprep.subr.mxu0 0.0
    %3028 = vmatpush1.msra.mxu0 0.0
    %3029 = vmatprep.subr.mxu0 0.0
    %3030 = vmatpush1.msra.mxu0 0.0
    %3031 = vmatprep.subr.mxu0 0.0
    %3032 = vmatpush1.msra.mxu0 0.0
    %3033 = vmatprep.subr.mxu0 0.0
    %3034 = vmatpush1.msra.mxu0 0.0
    %3035 = vmatprep.subr.mxu0 0.0
    %3036 = vmatpush1.msra.mxu0 0.0
    %3037 = vmatprep.subr.mxu0 0.0
    %3038 = vmatpush1.msra.mxu0 0.0
    %3039 = vmatprep.subr.mxu0 0.0
    %3040 = vmatpush1.msra.mxu0 0.0
    %3041 = vmatprep.subr.mxu0 0.0
    %3042 = vmatpush1.msra.mxu0 0.0
    %3043 = vmatprep.subr.mxu0 0.0
    %3044 = vmatpush1.msra.mxu0 0.0
    %3045 = vmatprep.subr.mxu0 0.0
    %3046 = vmatpush1.msra.mxu0 0.0
    %3047 = vmatprep.subr.mxu0 0.0
    %3048 = vmatpush1.msra.mxu0 0.0
    %3049 = vmatprep.subr.mxu0 0.0
    %3050 = vmatpush1.msra.mxu0 0.0
    %3051 = vmatprep.mubr.f32.mxu0 0.0
    %3052 = vmatmul.mubr.f32.gmra.mrb[0].mxu0 %v2985
    %v3053 = vpop.f32.mrb[0].mxu0
    %v3054 = vadd.f32 0.0, %v3053
    %v3055 = vpop.f32.mrb[0].mxu0
    %3056 = vdwg.mxu0
    %v3058 = vsel %vm2619, %v2663, 0
    %3060 = vmatprep.subr.mxu0 0.0
    %3061 = vmatpush1.msra.mxu0 %v1915
    %3062 = vmatprep.subr.mxu0 0.0
    %3063 = vmatpush1.msra.mxu0 %v1983
    %3064 = vmatprep.subr.mxu0 0.0
    %3065 = vmatpush1.msra.mxu0 0.0
    %3066 = vmatprep.subr.mxu0 0.0
    %3067 = vmatpush1.msra.mxu0 0.0
    %3068 = vmatprep.subr.mxu0 0.0
    %3069 = vmatpush1.msra.mxu0 0.0
    %3070 = vmatprep.subr.mxu0 0.0
    %3071 = vmatpush1.msra.mxu0 0.0
    %3072 = vmatprep.subr.mxu0 0.0
    %3073 = vmatpush1.msra.mxu0 0.0
    %3074 = vmatprep.subr.mxu0 0.0
    %3075 = vmatpush1.msra.mxu0 0.0
    %3076 = vmatprep.subr.mxu0 0.0
    %3077 = vmatpush1.msra.mxu0 0.0
    %3078 = vmatprep.subr.mxu0 0.0
    %3079 = vmatpush1.msra.mxu0 0.0
    %3080 = vmatprep.subr.mxu0 0.0
    %3081 = vmatpush1.msra.mxu0 0.0
    %3082 = vmatprep.subr.mxu0 0.0
    %3083 = vmatpush1.msra.mxu0 0.0
    %3084 = vmatprep.subr.mxu0 0.0
    %3085 = vmatpush1.msra.mxu0 0.0
    %3086 = vmatprep.subr.mxu0 0.0
    %3087 = vmatpush1.msra.mxu0 0.0
    %3088 = vmatprep.subr.mxu0 0.0
    %3089 = vmatpush1.msra.mxu0 0.0
    %3090 = vmatprep.subr.mxu0 0.0
    %3091 = vmatpush1.msra.mxu0 0.0
    %3092 = vmatprep.subr.mxu0 0.0
    %3093 = vmatpush1.msra.mxu0 0.0
    %3094 = vmatprep.subr.mxu0 0.0
    %3095 = vmatpush1.msra.mxu0 0.0
    %3096 = vmatprep.subr.mxu0 0.0
    %3097 = vmatpush1.msra.mxu0 0.0
    %3098 = vmatprep.subr.mxu0 0.0
    %3099 = vmatpush1.msra.mxu0 0.0
    %3100 = vmatprep.subr.mxu0 0.0
    %3101 = vmatpush1.msra.mxu0 0.0
    %3102 = vmatprep.subr.mxu0 0.0
    %3103 = vmatpush1.msra.mxu0 0.0
    %3104 = vmatprep.subr.mxu0 0.0
    %3105 = vmatpush1.msra.mxu0 0.0
    %3106 = vmatprep.subr.mxu0 0.0
    %3107 = vmatpush1.msra.mxu0 0.0
    %3108 = vmatprep.subr.mxu0 0.0
    %3109 = vmatpush1.msra.mxu0 0.0
    %3110 = vmatprep.subr.mxu0 0.0
    %3111 = vmatpush1.msra.mxu0 0.0
    %3112 = vmatprep.subr.mxu0 0.0
    %3113 = vmatpush1.msra.mxu0 0.0
    %3114 = vmatprep.subr.mxu0 0.0
    %3115 = vmatpush1.msra.mxu0 0.0
    %3116 = vmatprep.subr.mxu0 0.0
    %3117 = vmatpush1.msra.mxu0 0.0
    %3118 = vmatprep.subr.mxu0 0.0
    %3119 = vmatpush1.msra.mxu0 0.0
    %3120 = vmatprep.subr.mxu0 0.0
    %3121 = vmatpush1.msra.mxu0 0.0
    %3122 = vmatprep.subr.mxu0 0.0
    %3123 = vmatpush1.msra.mxu0 0.0
    %3124 = vmatprep.mubr.f32.mxu0 0.0
    %3125 = vmatmul.mubr.f32.gmra.mrb[0].mxu0 %v3058
    %v3126 = vpop.f32.mrb[0].mxu0
    %v3127 = vadd.f32 0.0, %v3126
    %v3128 = vpop.f32.mrb[0].mxu0
    %3129 = vdwg.mxu0
    %v3131 = vsel %vm2619, %v2665, 0
    %3133 = vmatprep.subr.mxu0 0.0
    %3134 = vmatpush1.msra.mxu0 %v1916
    %3135 = vmatprep.subr.mxu0 0.0
    %3136 = vmatpush1.msra.mxu0 %v1984
    %3137 = vmatprep.subr.mxu0 0.0
    %3138 = vmatpush1.msra.mxu0 0.0
    %3139 = vmatprep.subr.mxu0 0.0
    %3140 = vmatpush1.msra.mxu0 0.0
    %3141 = vmatprep.subr.mxu0 0.0
    %3142 = vmatpush1.msra.mxu0 0.0
    %3143 = vmatprep.subr.mxu0 0.0
    %3144 = vmatpush1.msra.mxu0 0.0
    %3145 = vmatprep.subr.mxu0 0.0
    %3146 = vmatpush1.msra.mxu0 0.0
    %3147 = vmatprep.subr.mxu0 0.0
    %3148 = vmatpush1.msra.mxu0 0.0
    %3149 = vmatprep.subr.mxu0 0.0
    %3150 = vmatpush1.msra.mxu0 0.0
    %3151 = vmatprep.subr.mxu0 0.0
    %3152 = vmatpush1.msra.mxu0 0.0
    %3153 = vmatprep.subr.mxu0 0.0
    %3154 = vmatpush1.msra.mxu0 0.0
    %3155 = vmatprep.subr.mxu0 0.0
    %3156 = vmatpush1.msra.mxu0 0.0
    %3157 = vmatprep.subr.mxu0 0.0
    %3158 = vmatpush1.msra.mxu0 0.0
    %3159 = vmatprep.subr.mxu0 0.0
    %3160 = vmatpush1.msra.mxu0 0.0
    %3161 = vmatprep.subr.mxu0 0.0
    %3162 = vmatpush1.msra.mxu0 0.0
    %3163 = vmatprep.subr.mxu0 0.0
    %3164 = vmatpush1.msra.mxu0 0.0
    %3165 = vmatprep.subr.mxu0 0.0
    %3166 = vmatpush1.msra.mxu0 0.0
    %3167 = vmatprep.subr.mxu0 0.0
    %3168 = vmatpush1.msra.mxu0 0.0
    %3169 = vmatprep.subr.mxu0 0.0
    %3170 = vmatpush1.msra.mxu0 0.0
    %3171 = vmatprep.subr.mxu0 0.0
    %3172 = vmatpush1.msra.mxu0 0.0
    %3173 = vmatprep.subr.mxu0 0.0
    %3174 = vmatpush1.msra.mxu0 0.0
    %3175 = vmatprep.subr.mxu0 0.0
    %3176 = vmatpush1.msra.mxu0 0.0
    %3177 = vmatprep.subr.mxu0 0.0
    %3178 = vmatpush1.msra.mxu0 0.0
    %3179 = vmatprep.subr.mxu0 0.0
    %3180 = vmatpush1.msra.mxu0 0.0
    %3181 = vmatprep.subr.mxu0 0.0
    %3182 = vmatpush1.msra.mxu0 0.0
    %3183 = vmatprep.subr.mxu0 0.0
    %3184 = vmatpush1.msra.mxu0 0.0
    %3185 = vmatprep.subr.mxu0 0.0
    %3186 = vmatpush1.msra.mxu0 0.0
    %3187 = vmatprep.subr.mxu0 0.0
    %3188 = vmatpush1.msra.mxu0 0.0
    %3189 = vmatprep.subr.mxu0 0.0
    %3190 = vmatpush1.msra.mxu0 0.0
    %3191 = vmatprep.subr.mxu0 0.0
    %3192 = vmatpush1.msra.mxu0 0.0
    %3193 = vmatprep.subr.mxu0 0.0
    %3194 = vmatpush1.msra.mxu0 0.0
    %3195 = vmatprep.subr.mxu0 0.0
    %3196 = vmatpush1.msra.mxu0 0.0
    %3197 = vmatprep.mubr.f32.mxu0 0.0
    %3198 = vmatmul.mubr.f32.gmra.mrb[0].mxu0 %v3131
    %v3199 = vpop.f32.mrb[0].mxu0
    %v3200 = vadd.f32 0.0, %v3199
    %v3201 = vpop.f32.mrb[0].mxu0
    %3202 = vdwg.mxu0
    %v3204 = vsel %vm2619, %v2667, 0
    %3206 = vmatprep.subr.mxu0 0.0
    %3207 = vmatpush1.msra.mxu0 %v1917
    %3208 = vmatprep.subr.mxu0 0.0
    %3209 = vmatpush1.msra.mxu0 %v1985
    %3210 = vmatprep.subr.mxu0 0.0
    %3211 = vmatpush1.msra.mxu0 0.0
    %3212 = vmatprep.subr.mxu0 0.0
    %3213 = vmatpush1.msra.mxu0 0.0
    %3214 = vmatprep.subr.mxu0 0.0
    %3215 = vmatpush1.msra.mxu0 0.0
    %3216 = vmatprep.subr.mxu0 0.0
    %3217 = vmatpush1.msra.mxu0 0.0
    %3218 = vmatprep.subr.mxu0 0.0
    %3219 = vmatpush1.msra.mxu0 0.0
    %3220 = vmatprep.subr.mxu0 0.0
    %3221 = vmatpush1.msra.mxu0 0.0
    %3222 = vmatprep.subr.mxu0 0.0
    %3223 = vmatpush1.msra.mxu0 0.0
    %3224 = vmatprep.subr.mxu0 0.0
    %3225 = vmatpush1.msra.mxu0 0.0
    %3226 = vmatprep.subr.mxu0 0.0
    %3227 = vmatpush1.msra.mxu0 0.0
    %3228 = vmatprep.subr.mxu0 0.0
    %3229 = vmatpush1.msra.mxu0 0.0
    %3230 = vmatprep.subr.mxu0 0.0
    %3231 = vmatpush1.msra.mxu0 0.0
    %3232 = vmatprep.subr.mxu0 0.0
    %3233 = vmatpush1.msra.mxu0 0.0
    %3234 = vmatprep.subr.mxu0 0.0
    %3235 = vmatpush1.msra.mxu0 0.0
    %3236 = vmatprep.subr.mxu0 0.0
    %3237 = vmatpush1.msra.mxu0 0.0
    %3238 = vmatprep.subr.mxu0 0.0
    %3239 = vmatpush1.msra.mxu0 0.0
    %3240 = vmatprep.subr.mxu0 0.0
    %3241 = vmatpush1.msra.mxu0 0.0
    %3242 = vmatprep.subr.mxu0 0.0
    %3243 = vmatpush1.msra.mxu0 0.0
    %3244 = vmatprep.subr.mxu0 0.0
    %3245 = vmatpush1.msra.mxu0 0.0
    %3246 = vmatprep.subr.mxu0 0.0
    %3247 = vmatpush1.msra.mxu0 0.0
    %3248 = vmatprep.subr.mxu0 0.0
    %3249 = vmatpush1.msra.mxu0 0.0
    %3250 = vmatprep.subr.mxu0 0.0
    %3251 = vmatpush1.msra.mxu0 0.0
    %3252 = vmatprep.subr.mxu0 0.0
    %3253 = vmatpush1.msra.mxu0 0.0
    %3254 = vmatprep.subr.mxu0 0.0
    %3255 = vmatpush1.msra.mxu0 0.0
    %3256 = vmatprep.subr.mxu0 0.0
    %3257 = vmatpush1.msra.mxu0 0.0
    %3258 = vmatprep.subr.mxu0 0.0
    %3259 = vmatpush1.msra.mxu0 0.0
    %3260 = vmatprep.subr.mxu0 0.0
    %3261 = vmatpush1.msra.mxu0 0.0
    %3262 = vmatprep.subr.mxu0 0.0
    %3263 = vmatpush1.msra.mxu0 0.0
    %3264 = vmatprep.subr.mxu0 0.0
    %3265 = vmatpush1.msra.mxu0 0.0
    %3266 = vmatprep.subr.mxu0 0.0
    %3267 = vmatpush1.msra.mxu0 0.0
    %3268 = vmatprep.subr.mxu0 0.0
    %3269 = vmatpush1.msra.mxu0 0.0
    %3270 = vmatprep.mubr.f32.mxu0 0.0
    %3271 = vmatmul.mubr.f32.gmra.mrb[0].mxu0 %v3204
    %v3272 = vpop.f32.mrb[0].mxu0
    %v3273 = vadd.f32 0.0, %v3272
    %v3274 = vpop.f32.mrb[0].mxu0
    %3275 = vdwg.mxu0
    %v3276 = vrcp.pop %v2670
    %v3277 = vrcp.pop %v2673
    %v3278 = vrcp.pop %v2676
    %v3279 = vrcp.pop %v2679
    %v3280 = vrcp.pop %v2682
    %v3281 = vrcp.pop %v2685
    %v3282 = vrcp.pop %v2688
    %v3283 = vrcp.pop %v2691
    %v3284 = vmul.f32 %v2762, %v3276
    %v3285 = vmul.f32 %v2835, %v3277
    %v3286 = vmul.f32 %v2908, %v3278
    %v3287 = vmul.f32 %v2981, %v3279
    %v3288 = vmul.f32 %v3054, %v3280
    %v3289 = vmul.f32 %v3127, %v3281
    %v3290 = vmul.f32 %v3200, %v3282
    %v3291 = vmul.f32 %v3273, %v3283
    %v3292 = vcombine.low %v3284, %v3286
    %v3293 = vcombine.high %v3284, %v3286
    %v3295 = vunpack.c.l.s4 1983009808
    %v3296 = vunpack.c.0.s8 %v3295
    %v3297 = vlaneseq
    %v3298 = vshrl.u32 %v3297, 7
    %v3299 = vsub.s32 %v3296, %v3298
    %v3300 = vrot.slane %v3292, %v3299
    %v3302 = vunpack.c.l.s4 1983009808
    %v3303 = vunpack.c.0.s8 %v3302
    %v3304 = vlaneseq
    %v3305 = vshrl.u32 %v3304, 7
    %v3306 = vsub.s32 %v3303, %v3305
    %v3307 = vrot.slane %v3293, %v3306
    %v3308 = vcombine.low %v3285, %v3287
    %v3309 = vcombine.high %v3285, %v3287
    %v3311 = vunpack.c.l.s4 1983009808
    %v3312 = vunpack.c.0.s8 %v3311
    %v3313 = vlaneseq
    %v3314 = vshrl.u32 %v3313, 7
    %v3315 = vsub.s32 %v3312, %v3314
    %v3316 = vrot.slane %v3308, %v3315
    %v3318 = vunpack.c.l.s4 1983009808
    %v3319 = vunpack.c.0.s8 %v3318
    %v3320 = vlaneseq
    %v3321 = vshrl.u32 %v3320, 7
    %v3322 = vsub.s32 %v3319, %v3321
    %v3323 = vrot.slane %v3309, %v3322
    %v3324 = vcombine.low %v3300, %v3316
    %v3325 = vcombine.high %v3300, %v3316
    %v3327 = vunpack.c.l.s4 1934713408
    %v3328 = vunpack.c.0.s8 %v3327
    %v3329 = vlaneseq
    %v3330 = vshrl.u32 %v3329, 7
    %v3331 = vsub.s32 %v3328, %v3330
    %v3332 = vrot.slane %v3324, %v3331
    %v3334 = vunpack.c.l.s4 1934713408
    %v3335 = vunpack.c.0.s8 %v3334
    %v3336 = vlaneseq
    %v3337 = vshrl.u32 %v3336, 7
    %v3338 = vsub.s32 %v3335, %v3337
    %v3339 = vrot.slane %v3325, %v3338
    %v3340 = vcombine.low %v3307, %v3323
    %v3341 = vcombine.high %v3307, %v3323
    %v3343 = vunpack.c.l.s4 1934713408
    %v3344 = vunpack.c.0.s8 %v3343
    %v3345 = vlaneseq
    %v3346 = vshrl.u32 %v3345, 7
    %v3347 = vsub.s32 %v3344, %v3346
    %v3348 = vrot.slane %v3340, %v3347
    %v3350 = vunpack.c.l.s4 1934713408
    %v3351 = vunpack.c.0.s8 %v3350
    %v3352 = vlaneseq
    %v3353 = vshrl.u32 %v3352, 7
    %v3354 = vsub.s32 %v3351, %v3353
    %v3355 = vrot.slane %v3341, %v3354
    %v3356 = vcombine.high %v3332, 0.0
    %v3357 = vcombine.high %v3339, 0.0
    %v3358 = vcombine.high %v3348, 0.0
    %v3359 = vcombine.high %v3355, 0.0
    %v3360 = vcombine.low %v3288, %v3290
    %v3361 = vcombine.high %v3288, %v3290
    %v3363 = vunpack.c.l.s4 1983009808
    %v3364 = vunpack.c.0.s8 %v3363
    %v3365 = vlaneseq
    %v3366 = vshrl.u32 %v3365, 7
    %v3367 = vsub.s32 %v3364, %v3366
    %v3368 = vrot.slane %v3360, %v3367
    %v3370 = vunpack.c.l.s4 1983009808
    %v3371 = vunpack.c.0.s8 %v3370
    %v3372 = vlaneseq
    %v3373 = vshrl.u32 %v3372, 7
    %v3374 = vsub.s32 %v3371, %v3373
    %v3375 = vrot.slane %v3361, %v3374
    %v3376 = vcombine.low %v3289, %v3291
    %v3377 = vcombine.high %v3289, %v3291
    %v3379 = vunpack.c.l.s4 1983009808
    %v3380 = vunpack.c.0.s8 %v3379
    %v3381 = vlaneseq
    %v3382 = vshrl.u32 %v3381, 7
    %v3383 = vsub.s32 %v3380, %v3382
    %v3384 = vrot.slane %v3376, %v3383
    %v3386 = vunpack.c.l.s4 1983009808
    %v3387 = vunpack.c.0.s8 %v3386
    %v3388 = vlaneseq
    %v3389 = vshrl.u32 %v3388, 7
    %v3390 = vsub.s32 %v3387, %v3389
    %v3391 = vrot.slane %v3377, %v3390
    %v3392 = vcombine.low %v3368, %v3384
    %v3393 = vcombine.high %v3368, %v3384
    %v3395 = vunpack.c.l.s4 1934713408
    %v3396 = vunpack.c.0.s8 %v3395
    %v3397 = vlaneseq
    %v3398 = vshrl.u32 %v3397, 7
    %v3399 = vsub.s32 %v3396, %v3398
    %v3400 = vrot.slane %v3392, %v3399
    %v3402 = vunpack.c.l.s4 1934713408
    %v3403 = vunpack.c.0.s8 %v3402
    %v3404 = vlaneseq
    %v3405 = vshrl.u32 %v3404, 7
    %v3406 = vsub.s32 %v3403, %v3405
    %v3407 = vrot.slane %v3393, %v3406
    %v3408 = vcombine.low %v3375, %v3391
    %v3409 = vcombine.high %v3375, %v3391
    %v3411 = vunpack.c.l.s4 1934713408
    %v3412 = vunpack.c.0.s8 %v3411
    %v3413 = vlaneseq
    %v3414 = vshrl.u32 %v3413, 7
    %v3415 = vsub.s32 %v3412, %v3414
    %v3416 = vrot.slane %v3408, %v3415
    %v3418 = vunpack.c.l.s4 1934713408
    %v3419 = vunpack.c.0.s8 %v3418
    %v3420 = vlaneseq
    %v3421 = vshrl.u32 %v3420, 7
    %v3422 = vsub.s32 %v3419, %v3421
    %v3423 = vrot.slane %v3409, %v3422
    %v3424 = vcombine.high %v3400, 0.0
    %v3425 = vcombine.high %v3407, 0.0
    %v3426 = vcombine.high %v3416, 0.0
    %v3427 = vcombine.high %v3423, 0.0
    %v3428 = vcombine.low %v3332, %v3356
    %v3430 = vunpack.c.l.s4 1983009808
    %v3431 = vunpack.c.0.s8 %v3430
    %v3432 = vlaneseq
    %v3433 = vshrl.u32 %v3432, 7
    %v3434 = vsub.s32 %v3431, %v3433
    %v3435 = vrot.slane %v3428, %v3434
    %v3436 = vcombine.low %v3400, %v3424
    %v3438 = vunpack.c.l.s4 1983009808
    %v3439 = vunpack.c.0.s8 %v3438
    %v3440 = vlaneseq
    %v3441 = vshrl.u32 %v3440, 7
    %v3442 = vsub.s32 %v3439, %v3441
    %v3443 = vrot.slane %v3436, %v3442
    %v3444 = vcombine.low %v3339, %v3357
    %v3446 = vunpack.c.l.s4 1983009808
    %v3447 = vunpack.c.0.s8 %v3446
    %v3448 = vlaneseq
    %v3449 = vshrl.u32 %v3448, 7
    %v3450 = vsub.s32 %v3447, %v3449
    %v3451 = vrot.slane %v3444, %v3450
    %v3452 = vcombine.low %v3407, %v3425
    %v3454 = vunpack.c.l.s4 1983009808
    %v3455 = vunpack.c.0.s8 %v3454
    %v3456 = vlaneseq
    %v3457 = vshrl.u32 %v3456, 7
    %v3458 = vsub.s32 %v3455, %v3457
    %v3459 = vrot.slane %v3452, %v3458
    %v3460 = vcombine.low %v3435, %v3443
    %v3461 = vcombine.high %v3435, %v3443
    %v3463 = vunpack.c.l.s4 1934713408
    %v3464 = vunpack.c.0.s8 %v3463
    %v3465 = vlaneseq
    %v3466 = vshrl.u32 %v3465, 7
    %v3467 = vsub.s32 %v3464, %v3466
    %v3468 = vrot.slane %v3460, %v3467
    %v3470 = vunpack.c.l.s4 1934713408
    %v3471 = vunpack.c.0.s8 %v3470
    %v3472 = vlaneseq
    %v3473 = vshrl.u32 %v3472, 7
    %v3474 = vsub.s32 %v3471, %v3473
    %v3475 = vrot.slane %v3461, %v3474
    %v3476 = vcombine.low %v3451, %v3459
    %v3477 = vcombine.high %v3451, %v3459
    %v3479 = vunpack.c.l.s4 1934713408
    %v3480 = vunpack.c.0.s8 %v3479
    %v3481 = vlaneseq
    %v3482 = vshrl.u32 %v3481, 7
    %v3483 = vsub.s32 %v3480, %v3482
    %v3484 = vrot.slane %v3476, %v3483
    %v3486 = vunpack.c.l.s4 1934713408
    %v3487 = vunpack.c.0.s8 %v3486
    %v3488 = vlaneseq
    %v3489 = vshrl.u32 %v3488, 7
    %v3490 = vsub.s32 %v3487, %v3489
    %v3491 = vrot.slane %v3477, %v3490
    %v3492 = vcombine.low %v3468, %v3484
    %v3493 = vcombine.high %v3468, %v3484
    %v3494 = vcombine.low %v3475, %v3491
    %v3495 = vcombine.high %v3475, %v3491
    %v3496 = vcombine.low %v3348, %v3358
    %v3498 = vunpack.c.l.s4 1983009808
    %v3499 = vunpack.c.0.s8 %v3498
    %v3500 = vlaneseq
    %v3501 = vshrl.u32 %v3500, 7
    %v3502 = vsub.s32 %v3499, %v3501
    %v3503 = vrot.slane %v3496, %v3502
    %v3504 = vcombine.low %v3416, %v3426
    %v3506 = vunpack.c.l.s4 1983009808
    %v3507 = vunpack.c.0.s8 %v3506
    %v3508 = vlaneseq
    %v3509 = vshrl.u32 %v3508, 7
    %v3510 = vsub.s32 %v3507, %v3509
    %v3511 = vrot.slane %v3504, %v3510
    %v3512 = vcombine.low %v3355, %v3359
    %v3514 = vunpack.c.l.s4 1983009808
    %v3515 = vunpack.c.0.s8 %v3514
    %v3516 = vlaneseq
    %v3517 = vshrl.u32 %v3516, 7
    %v3518 = vsub.s32 %v3515, %v3517
    %v3519 = vrot.slane %v3512, %v3518
    %v3520 = vcombine.low %v3423, %v3427
    %v3522 = vunpack.c.l.s4 1983009808
    %v3523 = vunpack.c.0.s8 %v3522
    %v3524 = vlaneseq
    %v3525 = vshrl.u32 %v3524, 7
    %v3526 = vsub.s32 %v3523, %v3525
    %v3527 = vrot.slane %v3520, %v3526
    %v3528 = vcombine.low %v3503, %v3511
    %v3529 = vcombine.high %v3503, %v3511
    %v3531 = vunpack.c.l.s4 1934713408
    %v3532 = vunpack.c.0.s8 %v3531
    %v3533 = vlaneseq
    %v3534 = vshrl.u32 %v3533, 7
    %v3535 = vsub.s32 %v3532, %v3534
    %v3536 = vrot.slane %v3528, %v3535
    %v3538 = vunpack.c.l.s4 1934713408
    %v3539 = vunpack.c.0.s8 %v3538
    %v3540 = vlaneseq
    %v3541 = vshrl.u32 %v3540, 7
    %v3542 = vsub.s32 %v3539, %v3541
    %v3543 = vrot.slane %v3529, %v3542
    %v3544 = vcombine.low %v3519, %v3527
    %v3545 = vcombine.high %v3519, %v3527
    %v3547 = vunpack.c.l.s4 1934713408
    %v3548 = vunpack.c.0.s8 %v3547
    %v3549 = vlaneseq
    %v3550 = vshrl.u32 %v3549, 7
    %v3551 = vsub.s32 %v3548, %v3550
    %v3552 = vrot.slane %v3544, %v3551
    %v3554 = vunpack.c.l.s4 1934713408
    %v3555 = vunpack.c.0.s8 %v3554
    %v3556 = vlaneseq
    %v3557 = vshrl.u32 %v3556, 7
    %v3558 = vsub.s32 %v3555, %v3557
    %v3559 = vrot.slane %v3545, %v3558
    %v3560 = vcombine.low %v3536, %v3552
    %v3561 = vcombine.high %v3536, %v3552
    %v3562 = vcombine.low %v3543, %v3559
    %v3563 = vcombine.high %v3543, %v3559
    %3566 = vrot.lane.b32.xlu0 %v3493, 8
    %v3567 = vpop.permute.xlu0 %3566
    %3568 = vrot.lane.b32.xlu0 %v3561, 8
    %v3569 = vpop.permute.xlu0 %3568
    %3574 = vrot.lane.b32.xlu0 %v3494, 16
    %v3575 = vpop.permute.xlu0 %3574
    %3576 = vrot.lane.b32.xlu0 %v3562, 16
    %v3577 = vpop.permute.xlu0 %3576
    %3582 = vrot.lane.b32.xlu0 %v3495, 24
    %v3583 = vpop.permute.xlu0 %3582
    %3584 = vrot.lane.b32.xlu0 %v3563, 24
    %v3585 = vpop.permute.xlu0 %3584
    %v3588 = vsel %vm1986, %v3492, %v3567
    %v3589 = vsel %vm1986, %v3560, %v3569
    %v3590 = vsel %vm2619, %v3588, %v3575
    %v3591 = vsel %vm2619, %v3589, %v3577
    %vm3592 = vcmask 195584
    %v3593 = vsel %vm3592, %v3590, %v3583
    %v3594 = vsel %vm3592, %v3591, %v3585
    %v3595 = vld [vmem:[#allocation11] sm:$0xff]
    %v3596 = vld [vmem:[#allocation11 + $0x8] sm:$0xff]
    %v3597 = vld [vmem:[#allocation11 + $0x10] sm:$0xff]
    %v3598 = vld [vmem:[#allocation11 + $0x18] sm:$0xff]
    %v3599 = vld [vmem:[#allocation17] sm:$0x1]
    %v3601 = vlaneseq
    %v3602 = vshrl.u32 %v3601, 7
    %v3603 = vsub.s32 0, %v3602
    %v3604 = vrot.slane %v3599, %v3603
    %v3607 = vsel %vm228, %v3593, 0
    %v3610 = vsel %vm228, %v3594, 0
    %3612 = vmatprep.subr.mxu0 0.0
    %3613 = vmatpush1.msra.mxu0 %v3595
    %3614 = vmatprep.subr.mxu0 0.0
    %3615 = vmatpush1.msra.mxu0 %v3596
    %3616 = vmatprep.subr.mxu0 0.0
    %3617 = vmatpush1.msra.mxu0 %v3597
    %3618 = vmatprep.subr.mxu0 0.0
    %3619 = vmatpush1.msra.mxu0 %v3598
    %3620 = vmatprep.subr.mxu0 0.0
    %3621 = vmatpush1.msra.mxu0 0.0
    %3622 = vmatprep.subr.mxu0 0.0
    %3623 = vmatpush1.msra.mxu0 0.0
    %3624 = vmatprep.subr.mxu0 0.0
    %3625 = vmatpush1.msra.mxu0 0.0
    %3626 = vmatprep.subr.mxu0 0.0
    %3627 = vmatpush1.msra.mxu0 0.0
    %3628 = vmatprep.subr.mxu0 0.0
    %3629 = vmatpush1.msra.mxu0 0.0
    %3630 = vmatprep.subr.mxu0 0.0
    %3631 = vmatpush1.msra.mxu0 0.0
    %3632 = vmatprep.subr.mxu0 0.0
    %3633 = vmatpush1.msra.mxu0 0.0
    %3634 = vmatprep.subr.mxu0 0.0
    %3635 = vmatpush1.msra.mxu0 0.0
    %3636 = vmatprep.subr.mxu0 0.0
    %3637 = vmatpush1.msra.mxu0 0.0
    %3638 = vmatprep.subr.mxu0 0.0
    %3639 = vmatpush1.msra.mxu0 0.0
    %3640 = vmatprep.subr.mxu0 0.0
    %3641 = vmatpush1.msra.mxu0 0.0
    %3642 = vmatprep.subr.mxu0 0.0
    %3643 = vmatpush1.msra.mxu0 0.0
    %3644 = vmatprep.subr.mxu0 0.0
    %3645 = vmatpush1.msra.mxu0 0.0
    %3646 = vmatprep.subr.mxu0 0.0
    %3647 = vmatpush1.msra.mxu0 0.0
    %3648 = vmatprep.subr.mxu0 0.0
    %3649 = vmatpush1.msra.mxu0 0.0
    %3650 = vmatprep.subr.mxu0 0.0
    %3651 = vmatpush1.msra.mxu0 0.0
    %3652 = vmatprep.subr.mxu0 0.0
    %3653 = vmatpush1.msra.mxu0 0.0
    %3654 = vmatprep.subr.mxu0 0.0
    %3655 = vmatpush1.msra.mxu0 0.0
    %3656 = vmatprep.subr.mxu0 0.0
    %3657 = vmatpush1.msra.mxu0 0.0
    %3658 = vmatprep.subr.mxu0 0.0
    %3659 = vmatpush1.msra.mxu0 0.0
    %3660 = vmatprep.subr.mxu0 0.0
    %3661 = vmatpush1.msra.mxu0 0.0
    %3662 = vmatprep.subr.mxu0 0.0
    %3663 = vmatpush1.msra.mxu0 0.0
    %3664 = vmatprep.subr.mxu0 0.0
    %3665 = vmatpush1.msra.mxu0 0.0
    %3666 = vmatprep.subr.mxu0 0.0
    %3667 = vmatpush1.msra.mxu0 0.0
    %3668 = vmatprep.subr.mxu0 0.0
    %3669 = vmatpush1.msra.mxu0 0.0
    %3670 = vmatprep.subr.mxu0 0.0
    %3671 = vmatpush1.msra.mxu0 0.0
    %3672 = vmatprep.subr.mxu0 0.0
    %3673 = vmatpush1.msra.mxu0 0.0
    %3674 = vmatprep.subr.mxu0 0.0
    %3675 = vmatpush1.msra.mxu0 0.0
    %3676 = vmatprep.mubr.f32.mxu0 0.0
    %3677 = vmatmul.mubr.f32.gmra.mrb[0].mxu0 %v3607
    %v3678 = vpop.f32.mrb[0].mxu0
    %v3679 = vadd.f32 %v3604, %v3678
    %v3680 = vpop.f32.mrb[0].mxu0
    %3681 = vmatprep.mubr.f32.mxu0 0.0
    %3682 = vmatmul.mubr.f32.gmra.mrb[0].mxu0 %v3610
    %v3683 = vpop.f32.mrb[0].mxu0
    %v3684 = vadd.f32 %v3604, %v3683
    %v3685 = vpop.f32.mrb[0].mxu0
    %3686 = vdwg.mxu0
    %v3687 = vadd.f32 %v199, %v3679
    %v3688 = vadd.f32 %v200, %v3684
    %v3689 = vsel %vm228, %v3687, 0.0
    %3690 = vadd.xlane.f32.xlu0 %v3689
    %v3691 = vpop.xlane.xlu0 %3690
    %v3692 = vsel %vm228, %v3688, 0.0
    %3693 = vadd.xlane.f32.xlu0 %v3692
    %v3694 = vpop.xlane.xlu0 %3693
    %v3695 = vrcp.pop 32.0
    %v3696 = vmul.f32 %v3691, %v3695
    %v3697 = vmul.f32 %v3694, %v3695
    %v3698 = vsub.f32 %v3687, %v3696
    %v3699 = vsub.f32 %v3688, %v3697
    %v3700 = vmul.f32 %v3698, %v3698
    %v3701 = vmul.f32 %v3699, %v3699
    %v3702 = vsel %vm228, %v3700, 0.0
    %3703 = vadd.xlane.f32.xlu0 %v3702
    %v3704 = vpop.xlane.xlu0 %3703
    %v3705 = vsel %vm228, %v3701, 0.0
    %3706 = vadd.xlane.f32.xlu0 %v3705
    %v3707 = vpop.xlane.xlu0 %3706
    %v3708 = vmul.f32 %v3704, %v3695
    %v3709 = vmul.f32 %v3707, %v3695
    %v3710 = vadd.f32 %v3708, 1e-05
    %v3711 = vadd.f32 %v3709, 1e-05
    %v3712 = vrsqrt.pop %v3710
    %v3713 = vrsqrt.pop %v3711
    %v3714 = vmul.f32 %v3698, %v3712
    %v3715 = vmul.f32 %v3699, %v3713
    %v3716 = vld [vmem:[#allocation19] sm:$0x1]
    %v3718 = vlaneseq
    %v3719 = vshrl.u32 %v3718, 7
    %v3720 = vsub.s32 0, %v3719
    %v3721 = vrot.slane %v3716, %v3720
    %v3723 = vmul.f32 %v3714, %v3721
    %v3724 = vmul.f32 %v3715, %v3721
    %v3725 = vld [vmem:[#allocation20] sm:$0x1]
    %v3727 = vlaneseq
    %v3728 = vshrl.u32 %v3727, 7
    %v3729 = vsub.s32 0, %v3728
    %v3730 = vrot.slane %v3725, %v3729
    %v3732 = vadd.f32 %v3723, %v3730
    %v3733 = vadd.f32 %v3724, %v3730
    %3734 = vst.msk [vmem:[#allocation22] sm:$0xff] %vm228, %v3732
    %3735 = vst.msk [vmem:[#allocation22 + $0x8] sm:$0xff] %vm228, %v3733
    // Predicated region
    $region106: #{cross_attention_layer.1} parent=1 // pred_check
      _
    $region107: #{cross_attention_layer.1} parent=1 // pred_check_branch
      %3737 = sbr.rel (0) target = $region109
    $region108: #{cross_attention_layer.1} parent=1 // pred_region
      %s3739 = ssub.s32 256, 256
      %3740 = vsyncadd [#allocation4], %s3739
      %s3741 = sshll.u32 [#allocation22], 4
      %s3742 = int_to_ptr.vmem [resolvable:$true] %s3741
      %3747 = dma.vmem_to_hbm [thread:$0]  %s3742, 256, %s14, [#allocation4], 128, 128, 8
    $region109: #{cross_attention_layer.1} parent=1 // pred_fallthru
      _
    // Predicated region
    $region110: #{cross_attention_layer.1} parent=1 // pred_check
      _
    $region111: #{cross_attention_layer.1} parent=1 // pred_check_branch
      %3749 = sbr.rel (0) target = $region113
    $region112: #{cross_attention_layer.1} parent=1 // pred_region
      %3750 = dma.done [#allocation4], 256
    $region113: #{cross_attention_layer.1} parent=1 // pred_fallthru
      _
    %3751 = vsyncpa [#allocation3], 1
    %3752 = vsyncpa [#allocation6], 1
    %3753 = vsyncpa [#allocation9], 1
    %3754 = vsyncpa [#allocation12], 1
    %3755 = vsyncpa [#allocation15], 1
    %3756 = vsyncpa [#allocation18], 1
    %3757 = vsyncpa [#allocation21], 1
    %3758 = vsyncpa [#allocation4], 1

</llo_original>
